<compile_context>
chip_gen: v7x
topology: tpu7x:2x2x1
jax: 0.10.0
libtpu: 0.0.40
codegen_flags: <defaults>
</compile_context>

<pallas_src>
import jax
import jax.numpy as jnp
from jax import lax
from jax.experimental import pallas as pl
from jax.experimental.pallas import tpu as pltpu

INPUT_SIZE = 7
HIDDEN = 64
NUM_LAYERS = 2
OUTPUT_SIZE = 1
OUT_PAD = 128          # lane-dense output width (sliced back to OUTPUT_SIZE)


# ---------------------------------------------------------------------------
# Kernel
# ---------------------------------------------------------------------------
def lstm_fc_kernel(x_ref,            # (T, B_tile, F)  time-major input (bf16)
                   wih0_ref,         # (F, 4H)  bf16, gate order [i,f,o,g]
                   b0_ref,           # (1, 4H)  f32   (b_ih + b_hh, reordered)
                   whh0_ref,         # (H, 4H)  bf16
                   wih1_ref,         # (H, 4H)  bf16
                   whh1_ref,         # (H, 4H)  bf16
                   b1_ref,           # (1, 4H)  f32
                   wfc_ref,          # (H, OUT_PAD) bf16 (real col 0, rest zero)
                   bfc_ref,          # (1, OUT_PAD) f32
                   out_ref):         # (B_tile, OUT_PAD) f32
    T, Bt, F = x_ref.shape
    H = whh0_ref.shape[0]
    cdt = wih0_ref.dtype             # MXU compute dtype (bf16)

    # ---- Hoisted, time-independent layer-0 input projection: one big GEMM.
    # Time-major + 16-aligned Bt => (T, Bt, F) -> (T*Bt, F) is a free merge and
    # each per-step proj0[t] is a contiguous leading-dim slab.
    x_all = x_ref[...].reshape(T * Bt, F)
    proj0 = (jnp.dot(x_all, wih0_ref[...], preferred_element_type=jnp.float32)
             + b0_ref[...]).reshape(T, Bt, 4 * H)

    # ---- Weights / biases loaded & broadcast once (outside the recurrence).
    whh0 = whh0_ref[...]
    wih1 = wih1_ref[...]
    whh1 = whh1_ref[...]
    b1 = jnp.broadcast_to(b1_ref[...], (Bt, 4 * H))

    def gates_to_hc(gates, c):
        # gate order [i, f, o | g]: one contiguous "sigmoid" slab + one tanh slab.
        # sigmoid(x) == 0.5*tanh(0.5*x) + 0.5  -> single EUP push per element.
        sig = 0.5 * jnp.tanh(0.5 * gates[:, :3 * H]) + 0.5
        i = sig[:, 0 * H:1 * H]
        f = sig[:, 1 * H:2 * H]
        o = sig[:, 2 * H:3 * H]
        g = jnp.tanh(gates[:, 3 * H:4 * H])
        c_new = f * c + i * g                       # f32 elementwise
        h_new = (o * jnp.tanh(c_new)).astype(cdt)   # h only feeds the MXU -> bf16
        return h_new, c_new

    h0 = jnp.zeros((Bt, H), cdt)
    h1 = jnp.zeros((Bt, H), cdt)
    c0 = jnp.zeros((Bt, H), jnp.float32)
    c1 = jnp.zeros((Bt, H), jnp.float32)

    # Fully-unrolled recurrence (T is static and small).
    for t in range(T):
        # Layer-1 recurrent matmul depends only on t-1 state: issue it first so
        # it overlaps with layer-0's recurrent matmul + gating.
        g1_hh = jnp.dot(h1, whh1, preferred_element_type=jnp.float32)

        # layer 0: input term precomputed above.
        g0 = proj0[t] + jnp.dot(h0, whh0, preferred_element_type=jnp.float32)
        h0, c0 = gates_to_hc(g0, c0)

        # TODO(synk): training-mode dropout between LSTM layers not implemented
        # (module is evaluated in eval mode, where Dropout is identity).

        # layer 1: only the fresh h0(t) @ W_ih1 remains on the critical path.
        g1 = g1_hh + jnp.dot(h0, wih1, preferred_element_type=jnp.float32) + b1
        h1, c1 = gates_to_hc(g1, c1)

    # fc on the last timestep's top-layer hidden state; lane-dense (padded) output.
    out_ref[...] = (jnp.dot(h1, wfc_ref[...],
                            preferred_element_type=jnp.float32) + bfc_ref[...])


# ---------------------------------------------------------------------------
# Host-side parameter preparation (exact permutations / packing; no math change)
# ---------------------------------------------------------------------------
def _reorder_gates(w):
    """Reorder the 4H gate axis from PyTorch [i,f,g,o] to kernel [i,f,o,g]."""
    i_, f_, g_, o_ = jnp.split(w, 4, axis=-1)
    return jnp.concatenate([i_, f_, o_, g_], axis=-1)


def prepare_kernel_params(params, compute_dtype=jnp.bfloat16):
    (wih0, whh0, b0, wih1, whh1, b1, wfc, bfc) = params
    cd = compute_dtype
    wih0_k = _reorder_gates(wih0).astype(cd)
    whh0_k = _reorder_gates(whh0).astype(cd)
    b0_k = _reorder_gates(b0).astype(jnp.float32)
    wih1_k = _reorder_gates(wih1).astype(cd)
    whh1_k = _reorder_gates(whh1).astype(cd)
    b1_k = _reorder_gates(b1).astype(jnp.float32)
    # Pad fc to a lane-dense output width.
    wfc_k = jnp.zeros((HIDDEN, OUT_PAD), cd).at[:, :OUTPUT_SIZE].set(wfc.astype(cd))
    bfc_k = jnp.zeros((1, OUT_PAD), jnp.float32).at[:, :OUTPUT_SIZE].set(
        bfc.astype(jnp.float32))
    return (wih0_k, b0_k, whh0_k, wih1_k, whh1_k, b1_k, wfc_k, bfc_k)


# ---------------------------------------------------------------------------
# Wrapper
# ---------------------------------------------------------------------------
def _round_up(v, m):
    return ((v + m - 1) // m) * m


def _num_tensorcores():
    """Best-effort: dual-TC chips (v7x family) get a >=2-tile parallel grid."""
    try:
        kind = jax.devices()[0].device_kind.lower()
    except Exception:
        return 1
    return 2 if "v7" in kind else 1


def lstm_weather_forward(x, params, compute_dtype=jnp.bfloat16):
    """x: (B, T, INPUT_SIZE) float32, batch-first (PyTorch convention)."""
    B, T, F = x.shape
    (wih0, b0, whh0, wih1, whh1, b1, wfc, bfc) = prepare_kernel_params(
        params, compute_dtype)

    # Batch padded/tiled to a 16-aligned tile (bf16 sublane pack); batch is the
    # parallel grid axis.
    Bp = _round_up(max(B, 16), 16)
    n_tc = _num_tensorcores()
    if n_tc > 1 and Bp >= 32:
        # dual-TC: at least 2 batch tiles so both TensorCores get work.
        b_tile = min(256, _round_up(-(-Bp // n_tc), 16))
    else:
        # single TC (v5e/v6e): one big tile up to 512 rows (well under VMEM).
        b_tile = min(512, Bp)
    Bp = _round_up(Bp, b_tile)
    n_tiles = Bp // b_tile

    # Time-major input for the kernel: (T, Bp, F), bf16.
    xt = jnp.transpose(x, (1, 0, 2)).astype(compute_dtype)
    if Bp != B:
        xt = jnp.pad(xt, ((0, 0), (0, Bp - B), (0, 0)))

    def replicated(arr):
        nd = arr.ndim
        return pl.BlockSpec(arr.shape, lambda i, _nd=nd: (0,) * _nd)

    out = pl.pallas_call(
        lstm_fc_kernel,
        out_shape=jax.ShapeDtypeStruct((Bp, OUT_PAD), jnp.float32),
        grid_spec=pltpu.PrefetchScalarGridSpec(
            num_scalar_prefetch=0,
            grid=(n_tiles,),
            in_specs=[
                pl.BlockSpec((T, b_tile, F), lambda i: (0, i, 0)),  # x, batch-tiled
                replicated(wih0), replicated(b0), replicated(whh0),
                replicated(wih1), replicated(whh1), replicated(b1),
                replicated(wfc), replicated(bfc),
            ],
            out_specs=pl.BlockSpec((b_tile, OUT_PAD), lambda i: (i, 0)),
        ),
        compiler_params=pltpu.CompilerParams(
            dimension_semantics=("parallel",)),
    )(xt, wih0, b0, whh0, wih1, whh1, b1, wfc, bfc)

    return out[:B, :OUTPUT_SIZE]


# ---------------------------------------------------------------------------
# Parameter init (canonical PyTorch gate order, pre-transposed to (in, 4H))
# ---------------------------------------------------------------------------
def init_params(key):
    ks = jax.random.split(key, 10)
    bound = 1.0 / jnp.sqrt(HIDDEN)

    def u(k, shape):
        return jax.random.uniform(k, shape, jnp.float32, -bound, bound)

    # layer 0
    wih0 = u(ks[0], (INPUT_SIZE, 4 * HIDDEN))
    whh0 = u(ks[1], (HIDDEN, 4 * HIDDEN))
    b0 = u(ks[2], (1, 4 * HIDDEN)) + u(ks[3], (1, 4 * HIDDEN))  # b_ih + b_hh
    # layer 1
    wih1 = u(ks[4], (HIDDEN, 4 * HIDDEN))
    whh1 = u(ks[5], (HIDDEN, 4 * HIDDEN))
    b1 = u(ks[6], (1, 4 * HIDDEN)) + u(ks[7], (1, 4 * HIDDEN))
    # fc
    wfc = u(ks[8], (HIDDEN, OUTPUT_SIZE))
    bfc = u(ks[9], (1, OUTPUT_SIZE))
    return (wih0, whh0, b0, wih1, whh1, b1, wfc, bfc)


# ---------------------------------------------------------------------------
# Pure-JAX reference (same quantization: bf16 MXU operands, f32 accum/elementwise)
# ---------------------------------------------------------------------------
def reference_forward(x, params, compute_dtype=jnp.bfloat16):
    (wih0, whh0, b0, wih1, whh1, b1, wfc, bfc) = params
    B, T, _ = x.shape
    H = HIDDEN
    cd = compute_dtype

    xc = x.astype(cd)
    wih0c, whh0c = wih0.astype(cd), whh0.astype(cd)
    wih1c, whh1c = wih1.astype(cd), whh1.astype(cd)
    wfcc = wfc.astype(cd)

    def cell(x_t, h, c, wih, whh, b):
        g = (jnp.dot(x_t, wih, preferred_element_type=jnp.float32)
             + jnp.dot(h.astype(cd), whh, preferred_element_type=jnp.float32)
             + b)
        i = jax.nn.sigmoid(g[:, :H])
        f = jax.nn.sigmoid(g[:, H:2 * H])
        gg = jnp.tanh(g[:, 2 * H:3 * H])
        o = jax.nn.sigmoid(g[:, 3 * H:])
        c = f * c + i * gg
        return o * jnp.tanh(c), c

    def step(carry, x_t):
        h0, c0, h1, c1 = carry
        h0, c0 = cell(x_t, h0, c0, wih0c, whh0c, b0)
        h1, c1 = cell(h0.astype(cd), h1, c1, wih1c, whh1c, b1)
        return (h0, c0, h1, c1), None

    z = jnp.zeros((B, H), jnp.float32)
    (h0, c0, h1, c1), _ = lax.scan(step, (z, z, z, z),
                                   jnp.transpose(xc, (1, 0, 2)))
    return jnp.dot(h1.astype(cd), wfcc, preferred_element_type=jnp.float32) + bfc


if __name__ == "__main__":
    key = jax.random.PRNGKey(0)
    k_x, k_p = jax.random.split(key)

    B, T = 2, 8
    x = jax.random.normal(k_x, (B, T, INPUT_SIZE), jnp.float32)
    params = init_params(k_p)

    out = lstm_weather_forward(x, params)
    out = jax.block_until_ready(out)

    ref = reference_forward(x, params)
    assert out.shape == (B, OUTPUT_SIZE), out.shape
    assert jnp.allclose(out, ref, atol=2e-3, rtol=2e-3), (out, ref)

    print("KERNEL_OK")
</pallas_src>

<mosaic_0001>
module attributes {stable_mosaic.version = 11 : i64} {
  func.func @lstm_fc_kernel(%arg0: i32, %arg1: memref<8x16x7xbf16, #tpu.memory_space<vmem>>, %arg2: memref<7x256xbf16, #tpu.memory_space<vmem>>, %arg3: memref<1x256xf32, #tpu.memory_space<vmem>>, %arg4: memref<64x256xbf16, #tpu.memory_space<vmem>>, %arg5: memref<64x256xbf16, #tpu.memory_space<vmem>>, %arg6: memref<64x256xbf16, #tpu.memory_space<vmem>>, %arg7: memref<1x256xf32, #tpu.memory_space<vmem>>, %arg8: memref<64x128xbf16, #tpu.memory_space<vmem>>, %arg9: memref<1x128xf32, #tpu.memory_space<vmem>>, %arg10: memref<16x128xf32, #tpu.memory_space<vmem>>) attributes {dimension_semantics = [#tpu.dimension_semantics<parallel>], iteration_bounds = array<i64: 1>, scalar_prefetch = 0 : i64, scratch_operands = 0 : i64, tpu.core_type = #tpu.core_type<tc>, window_params = [{transform_indices = @transform_0, window_bounds = array<i64: 8, 16, 7>}, {pipeline_mode = #tpu.pipeline_mode<synchronous>, transform_indices = @transform_1, window_bounds = array<i64: 7, 256>}, {pipeline_mode = #tpu.pipeline_mode<synchronous>, transform_indices = @transform_2, window_bounds = array<i64: 1, 256>}, {pipeline_mode = #tpu.pipeline_mode<synchronous>, transform_indices = @transform_3, window_bounds = array<i64: 64, 256>}, {pipeline_mode = #tpu.pipeline_mode<synchronous>, transform_indices = @transform_4, window_bounds = array<i64: 64, 256>}, {pipeline_mode = #tpu.pipeline_mode<synchronous>, transform_indices = @transform_5, window_bounds = array<i64: 64, 256>}, {pipeline_mode = #tpu.pipeline_mode<synchronous>, transform_indices = @transform_6, window_bounds = array<i64: 1, 256>}, {pipeline_mode = #tpu.pipeline_mode<synchronous>, transform_indices = @transform_7, window_bounds = array<i64: 64, 128>}, {pipeline_mode = #tpu.pipeline_mode<synchronous>, transform_indices = @transform_8, window_bounds = array<i64: 1, 128>}, {transform_indices = @transform_9, window_bounds = array<i64: 16, 128>}]} {
    %c0 = arith.constant 0 : index
    %c0_0 = arith.constant 0 : index
    %c0_1 = arith.constant 0 : index
    %0 = vector.load %arg1[%c0, %c0_0, %c0_1] : memref<8x16x7xbf16, #tpu.memory_space<vmem>>, vector<8x16x7xbf16>
    %1 = vector.shape_cast %0 : vector<8x16x7xbf16> to vector<128x7xbf16>
    %c0_2 = arith.constant 0 : index
    %c0_3 = arith.constant 0 : index
    %2 = vector.load %arg2[%c0_2, %c0_3] : memref<7x256xbf16, #tpu.memory_space<vmem>>, vector<7x256xbf16>
    %cst = arith.constant dense<0.000000e+00> : vector<128x256xf32>
    %3 = tpu.matmul %1, %2, %cst {dimension_numbers = #tpu.dot_dimension_numbers<[1], [0], [0], [1], [0, 0, 1, 1], [], []>} : vector<128x7xbf16>, vector<7x256xbf16>, vector<128x256xf32> -> vector<128x256xf32>
    %c0_4 = arith.constant 0 : index
    %c0_5 = arith.constant 0 : index
    %4 = vector.load %arg3[%c0_4, %c0_5] : memref<1x256xf32, #tpu.memory_space<vmem>>, vector<1x256xf32>
    %5 = vector.broadcast %4 : vector<1x256xf32> to vector<128x256xf32>
    %6 = arith.addf %3, %5 : vector<128x256xf32>
    %7 = vector.shape_cast %6 : vector<128x256xf32> to vector<8x16x256xf32>
    %c0_6 = arith.constant 0 : index
    %c0_7 = arith.constant 0 : index
    %8 = vector.load %arg4[%c0_6, %c0_7] : memref<64x256xbf16, #tpu.memory_space<vmem>>, vector<64x256xbf16>
    %c0_8 = arith.constant 0 : index
    %c0_9 = arith.constant 0 : index
    %9 = vector.load %arg5[%c0_8, %c0_9] : memref<64x256xbf16, #tpu.memory_space<vmem>>, vector<64x256xbf16>
    %c0_10 = arith.constant 0 : index
    %c0_11 = arith.constant 0 : index
    %10 = vector.load %arg6[%c0_10, %c0_11] : memref<64x256xbf16, #tpu.memory_space<vmem>>, vector<64x256xbf16>
    %c0_12 = arith.constant 0 : index
    %c0_13 = arith.constant 0 : index
    %11 = vector.load %arg7[%c0_12, %c0_13] : memref<1x256xf32, #tpu.memory_space<vmem>>, vector<1x256xf32>
    %12 = vector.shape_cast %11 : vector<1x256xf32> to vector<1x256xf32>
    %13 = vector.broadcast %12 : vector<1x256xf32> to vector<16x256xf32>
    %cst_14 = arith.constant 0.000000e+00 : bf16
    %14 = vector.broadcast %cst_14 : bf16 to vector<16x64xbf16>
    %cst_15 = arith.constant 0.000000e+00 : bf16
    %15 = vector.broadcast %cst_15 : bf16 to vector<16x64xbf16>
    %cst_16 = arith.constant 0.000000e+00 : f32
    %16 = vector.broadcast %cst_16 : f32 to vector<16x64xf32>
    %cst_17 = arith.constant 0.000000e+00 : f32
    %17 = vector.broadcast %cst_17 : f32 to vector<16x64xf32>
    %cst_18 = arith.constant dense<0.000000e+00> : vector<16x256xf32>
    %18 = tpu.matmul %15, %10, %cst_18 {dimension_numbers = #tpu.dot_dimension_numbers<[1], [0], [0], [1], [0, 0, 1, 1], [], []>} : vector<16x64xbf16>, vector<64x256xbf16>, vector<16x256xf32> -> vector<16x256xf32>
    %19 = vector.extract_strided_slice %7 {offsets = [0, 0, 0], sizes = [1, 16, 256], strides = [1, 1, 1]} : vector<8x16x256xf32> to vector<1x16x256xf32>
    %20 = vector.shape_cast %19 : vector<1x16x256xf32> to vector<16x256xf32>
    %cst_19 = arith.constant dense<0.000000e+00> : vector<16x256xf32>
    %21 = tpu.matmul %14, %8, %cst_19 {dimension_numbers = #tpu.dot_dimension_numbers<[1], [0], [0], [1], [0, 0, 1, 1], [], []>} : vector<16x64xbf16>, vector<64x256xbf16>, vector<16x256xf32> -> vector<16x256xf32>
    %22 = arith.addf %20, %21 : vector<16x256xf32>
    %23 = vector.extract_strided_slice %22 {offsets = [0, 0], sizes = [16, 192], strides = [1, 1]} : vector<16x256xf32> to vector<16x192xf32>
    %cst_20 = arith.constant 5.000000e-01 : f32
    %24 = vector.broadcast %cst_20 : f32 to vector<16x192xf32>
    %25 = arith.mulf %24, %23 : vector<16x192xf32>
    %26 = math.tanh %25 : vector<16x192xf32>
    %cst_21 = arith.constant 5.000000e-01 : f32
    %27 = vector.broadcast %cst_21 : f32 to vector<16x192xf32>
    %28 = arith.mulf %27, %26 : vector<16x192xf32>
    %cst_22 = arith.constant 5.000000e-01 : f32
    %29 = vector.broadcast %cst_22 : f32 to vector<16x192xf32>
    %30 = arith.addf %28, %29 : vector<16x192xf32>
    %31 = vector.extract_strided_slice %30 {offsets = [0, 0], sizes = [16, 64], strides = [1, 1]} : vector<16x192xf32> to vector<16x64xf32>
    %32 = vector.extract_strided_slice %30 {offsets = [0, 64], sizes = [16, 64], strides = [1, 1]} : vector<16x192xf32> to vector<16x64xf32>
    %33 = vector.extract_strided_slice %30 {offsets = [0, 128], sizes = [16, 64], strides = [1, 1]} : vector<16x192xf32> to vector<16x64xf32>
    %34 = vector.extract_strided_slice %22 {offsets = [0, 192], sizes = [16, 64], strides = [1, 1]} : vector<16x256xf32> to vector<16x64xf32>
    %35 = math.tanh %34 : vector<16x64xf32>
    %36 = arith.mulf %32, %16 : vector<16x64xf32>
    %37 = arith.mulf %31, %35 : vector<16x64xf32>
    %38 = arith.addf %36, %37 : vector<16x64xf32>
    %39 = math.tanh %38 : vector<16x64xf32>
    %40 = arith.mulf %33, %39 : vector<16x64xf32>
    %41 = arith.truncf %40 : vector<16x64xf32> to vector<16x64xbf16>
    %cst_23 = arith.constant dense<0.000000e+00> : vector<16x256xf32>
    %42 = tpu.matmul %41, %9, %cst_23 {dimension_numbers = #tpu.dot_dimension_numbers<[1], [0], [0], [1], [0, 0, 1, 1], [], []>} : vector<16x64xbf16>, vector<64x256xbf16>, vector<16x256xf32> -> vector<16x256xf32>
    %43 = arith.addf %18, %42 : vector<16x256xf32>
    %44 = arith.addf %43, %13 : vector<16x256xf32>
    %45 = vector.extract_strided_slice %44 {offsets = [0, 0], sizes = [16, 192], strides = [1, 1]} : vector<16x256xf32> to vector<16x192xf32>
    %cst_24 = arith.constant 5.000000e-01 : f32
    %46 = vector.broadcast %cst_24 : f32 to vector<16x192xf32>
    %47 = arith.mulf %46, %45 : vector<16x192xf32>
    %48 = math.tanh %47 : vector<16x192xf32>
    %cst_25 = arith.constant 5.000000e-01 : f32
    %49 = vector.broadcast %cst_25 : f32 to vector<16x192xf32>
    %50 = arith.mulf %49, %48 : vector<16x192xf32>
    %cst_26 = arith.constant 5.000000e-01 : f32
    %51 = vector.broadcast %cst_26 : f32 to vector<16x192xf32>
    %52 = arith.addf %50, %51 : vector<16x192xf32>
    %53 = vector.extract_strided_slice %52 {offsets = [0, 0], sizes = [16, 64], strides = [1, 1]} : vector<16x192xf32> to vector<16x64xf32>
    %54 = vector.extract_strided_slice %52 {offsets = [0, 64], sizes = [16, 64], strides = [1, 1]} : vector<16x192xf32> to vector<16x64xf32>
    %55 = vector.extract_strided_slice %52 {offsets = [0, 128], sizes = [16, 64], strides = [1, 1]} : vector<16x192xf32> to vector<16x64xf32>
    %56 = vector.extract_strided_slice %44 {offsets = [0, 192], sizes = [16, 64], strides = [1, 1]} : vector<16x256xf32> to vector<16x64xf32>
    %57 = math.tanh %56 : vector<16x64xf32>
    %58 = arith.mulf %54, %17 : vector<16x64xf32>
    %59 = arith.mulf %53, %57 : vector<16x64xf32>
    %60 = arith.addf %58, %59 : vector<16x64xf32>
    %61 = math.tanh %60 : vector<16x64xf32>
    %62 = arith.mulf %55, %61 : vector<16x64xf32>
    %63 = arith.truncf %62 : vector<16x64xf32> to vector<16x64xbf16>
    %cst_27 = arith.constant dense<0.000000e+00> : vector<16x256xf32>
    %64 = tpu.matmul %63, %10, %cst_27 {dimension_numbers = #tpu.dot_dimension_numbers<[1], [0], [0], [1], [0, 0, 1, 1], [], []>} : vector<16x64xbf16>, vector<64x256xbf16>, vector<16x256xf32> -> vector<16x256xf32>
    %65 = vector.extract_strided_slice %7 {offsets = [1, 0, 0], sizes = [1, 16, 256], strides = [1, 1, 1]} : vector<8x16x256xf32> to vector<1x16x256xf32>
    %66 = vector.shape_cast %65 : vector<1x16x256xf32> to vector<16x256xf32>
    %cst_28 = arith.constant dense<0.000000e+00> : vector<16x256xf32>
    %67 = tpu.matmul %41, %8, %cst_28 {dimension_numbers = #tpu.dot_dimension_numbers<[1], [0], [0], [1], [0, 0, 1, 1], [], []>} : vector<16x64xbf16>, vector<64x256xbf16>, vector<16x256xf32> -> vector<16x256xf32>
    %68 = arith.addf %66, %67 : vector<16x256xf32>
    %69 = vector.extract_strided_slice %68 {offsets = [0, 0], sizes = [16, 192], strides = [1, 1]} : vector<16x256xf32> to vector<16x192xf32>
    %cst_29 = arith.constant 5.000000e-01 : f32
    %70 = vector.broadcast %cst_29 : f32 to vector<16x192xf32>
    %71 = arith.mulf %70, %69 : vector<16x192xf32>
    %72 = math.tanh %71 : vector<16x192xf32>
    %cst_30 = arith.constant 5.000000e-01 : f32
    %73 = vector.broadcast %cst_30 : f32 to vector<16x192xf32>
    %74 = arith.mulf %73, %72 : vector<16x192xf32>
    %cst_31 = arith.constant 5.000000e-01 : f32
    %75 = vector.broadcast %cst_31 : f32 to vector<16x192xf32>
    %76 = arith.addf %74, %75 : vector<16x192xf32>
    %77 = vector.extract_strided_slice %76 {offsets = [0, 0], sizes = [16, 64], strides = [1, 1]} : vector<16x192xf32> to vector<16x64xf32>
    %78 = vector.extract_strided_slice %76 {offsets = [0, 64], sizes = [16, 64], strides = [1, 1]} : vector<16x192xf32> to vector<16x64xf32>
    %79 = vector.extract_strided_slice %76 {offsets = [0, 128], sizes = [16, 64], strides = [1, 1]} : vector<16x192xf32> to vector<16x64xf32>
    %80 = vector.extract_strided_slice %68 {offsets = [0, 192], sizes = [16, 64], strides = [1, 1]} : vector<16x256xf32> to vector<16x64xf32>
    %81 = math.tanh %80 : vector<16x64xf32>
    %82 = arith.mulf %78, %38 : vector<16x64xf32>
    %83 = arith.mulf %77, %81 : vector<16x64xf32>
    %84 = arith.addf %82, %83 : vector<16x64xf32>
    %85 = math.tanh %84 : vector<16x64xf32>
    %86 = arith.mulf %79, %85 : vector<16x64xf32>
    %87 = arith.truncf %86 : vector<16x64xf32> to vector<16x64xbf16>
    %cst_32 = arith.constant dense<0.000000e+00> : vector<16x256xf32>
    %88 = tpu.matmul %87, %9, %cst_32 {dimension_numbers = #tpu.dot_dimension_numbers<[1], [0], [0], [1], [0, 0, 1, 1], [], []>} : vector<16x64xbf16>, vector<64x256xbf16>, vector<16x256xf32> -> vector<16x256xf32>
    %89 = arith.addf %64, %88 : vector<16x256xf32>
    %90 = arith.addf %89, %13 : vector<16x256xf32>
    %91 = vector.extract_strided_slice %90 {offsets = [0, 0], sizes = [16, 192], strides = [1, 1]} : vector<16x256xf32> to vector<16x192xf32>
    %cst_33 = arith.constant 5.000000e-01 : f32
    %92 = vector.broadcast %cst_33 : f32 to vector<16x192xf32>
    %93 = arith.mulf %92, %91 : vector<16x192xf32>
    %94 = math.tanh %93 : vector<16x192xf32>
    %cst_34 = arith.constant 5.000000e-01 : f32
    %95 = vector.broadcast %cst_34 : f32 to vector<16x192xf32>
    %96 = arith.mulf %95, %94 : vector<16x192xf32>
    %cst_35 = arith.constant 5.000000e-01 : f32
    %97 = vector.broadcast %cst_35 : f32 to vector<16x192xf32>
    %98 = arith.addf %96, %97 : vector<16x192xf32>
    %99 = vector.extract_strided_slice %98 {offsets = [0, 0], sizes = [16, 64], strides = [1, 1]} : vector<16x192xf32> to vector<16x64xf32>
    %100 = vector.extract_strided_slice %98 {offsets = [0, 64], sizes = [16, 64], strides = [1, 1]} : vector<16x192xf32> to vector<16x64xf32>
    %101 = vector.extract_strided_slice %98 {offsets = [0, 128], sizes = [16, 64], strides = [1, 1]} : vector<16x192xf32> to vector<16x64xf32>
    %102 = vector.extract_strided_slice %90 {offsets = [0, 192], sizes = [16, 64], strides = [1, 1]} : vector<16x256xf32> to vector<16x64xf32>
    %103 = math.tanh %102 : vector<16x64xf32>
    %104 = arith.mulf %100, %60 : vector<16x64xf32>
    %105 = arith.mulf %99, %103 : vector<16x64xf32>
    %106 = arith.addf %104, %105 : vector<16x64xf32>
    %107 = math.tanh %106 : vector<16x64xf32>
    %108 = arith.mulf %101, %107 : vector<16x64xf32>
    %109 = arith.truncf %108 : vector<16x64xf32> to vector<16x64xbf16>
    %cst_36 = arith.constant dense<0.000000e+00> : vector<16x256xf32>
    %110 = tpu.matmul %109, %10, %cst_36 {dimension_numbers = #tpu.dot_dimension_numbers<[1], [0], [0], [1], [0, 0, 1, 1], [], []>} : vector<16x64xbf16>, vector<64x256xbf16>, vector<16x256xf32> -> vector<16x256xf32>
    %111 = vector.extract_strided_slice %7 {offsets = [2, 0, 0], sizes = [1, 16, 256], strides = [1, 1, 1]} : vector<8x16x256xf32> to vector<1x16x256xf32>
    %112 = vector.shape_cast %111 : vector<1x16x256xf32> to vector<16x256xf32>
    %cst_37 = arith.constant dense<0.000000e+00> : vector<16x256xf32>
    %113 = tpu.matmul %87, %8, %cst_37 {dimension_numbers = #tpu.dot_dimension_numbers<[1], [0], [0], [1], [0, 0, 1, 1], [], []>} : vector<16x64xbf16>, vector<64x256xbf16>, vector<16x256xf32> -> vector<16x256xf32>
    %114 = arith.addf %112, %113 : vector<16x256xf32>
    %115 = vector.extract_strided_slice %114 {offsets = [0, 0], sizes = [16, 192], strides = [1, 1]} : vector<16x256xf32> to vector<16x192xf32>
    %cst_38 = arith.constant 5.000000e-01 : f32
    %116 = vector.broadcast %cst_38 : f32 to vector<16x192xf32>
    %117 = arith.mulf %116, %115 : vector<16x192xf32>
    %118 = math.tanh %117 : vector<16x192xf32>
    %cst_39 = arith.constant 5.000000e-01 : f32
    %119 = vector.broadcast %cst_39 : f32 to vector<16x192xf32>
    %120 = arith.mulf %119, %118 : vector<16x192xf32>
    %cst_40 = arith.constant 5.000000e-01 : f32
    %121 = vector.broadcast %cst_40 : f32 to vector<16x192xf32>
    %122 = arith.addf %120, %121 : vector<16x192xf32>
    %123 = vector.extract_strided_slice %122 {offsets = [0, 0], sizes = [16, 64], strides = [1, 1]} : vector<16x192xf32> to vector<16x64xf32>
    %124 = vector.extract_strided_slice %122 {offsets = [0, 64], sizes = [16, 64], strides = [1, 1]} : vector<16x192xf32> to vector<16x64xf32>
    %125 = vector.extract_strided_slice %122 {offsets = [0, 128], sizes = [16, 64], strides = [1, 1]} : vector<16x192xf32> to vector<16x64xf32>
    %126 = vector.extract_strided_slice %114 {offsets = [0, 192], sizes = [16, 64], strides = [1, 1]} : vector<16x256xf32> to vector<16x64xf32>
    %127 = math.tanh %126 : vector<16x64xf32>
    %128 = arith.mulf %124, %84 : vector<16x64xf32>
    %129 = arith.mulf %123, %127 : vector<16x64xf32>
    %130 = arith.addf %128, %129 : vector<16x64xf32>
    %131 = math.tanh %130 : vector<16x64xf32>
    %132 = arith.mulf %125, %131 : vector<16x64xf32>
    %133 = arith.truncf %132 : vector<16x64xf32> to vector<16x64xbf16>
    %cst_41 = arith.constant dense<0.000000e+00> : vector<16x256xf32>
    %134 = tpu.matmul %133, %9, %cst_41 {dimension_numbers = #tpu.dot_dimension_numbers<[1], [0], [0], [1], [0, 0, 1, 1], [], []>} : vector<16x64xbf16>, vector<64x256xbf16>, vector<16x256xf32> -> vector<16x256xf32>
    %135 = arith.addf %110, %134 : vector<16x256xf32>
    %136 = arith.addf %135, %13 : vector<16x256xf32>
    %137 = vector.extract_strided_slice %136 {offsets = [0, 0], sizes = [16, 192], strides = [1, 1]} : vector<16x256xf32> to vector<16x192xf32>
    %cst_42 = arith.constant 5.000000e-01 : f32
    %138 = vector.broadcast %cst_42 : f32 to vector<16x192xf32>
    %139 = arith.mulf %138, %137 : vector<16x192xf32>
    %140 = math.tanh %139 : vector<16x192xf32>
    %cst_43 = arith.constant 5.000000e-01 : f32
    %141 = vector.broadcast %cst_43 : f32 to vector<16x192xf32>
    %142 = arith.mulf %141, %140 : vector<16x192xf32>
    %cst_44 = arith.constant 5.000000e-01 : f32
    %143 = vector.broadcast %cst_44 : f32 to vector<16x192xf32>
    %144 = arith.addf %142, %143 : vector<16x192xf32>
    %145 = vector.extract_strided_slice %144 {offsets = [0, 0], sizes = [16, 64], strides = [1, 1]} : vector<16x192xf32> to vector<16x64xf32>
    %146 = vector.extract_strided_slice %144 {offsets = [0, 64], sizes = [16, 64], strides = [1, 1]} : vector<16x192xf32> to vector<16x64xf32>
    %147 = vector.extract_strided_slice %144 {offsets = [0, 128], sizes = [16, 64], strides = [1, 1]} : vector<16x192xf32> to vector<16x64xf32>
    %148 = vector.extract_strided_slice %136 {offsets = [0, 192], sizes = [16, 64], strides = [1, 1]} : vector<16x256xf32> to vector<16x64xf32>
    %149 = math.tanh %148 : vector<16x64xf32>
    %150 = arith.mulf %146, %106 : vector<16x64xf32>
    %151 = arith.mulf %145, %149 : vector<16x64xf32>
    %152 = arith.addf %150, %151 : vector<16x64xf32>
    %153 = math.tanh %152 : vector<16x64xf32>
    %154 = arith.mulf %147, %153 : vector<16x64xf32>
    %155 = arith.truncf %154 : vector<16x64xf32> to vector<16x64xbf16>
    %cst_45 = arith.constant dense<0.000000e+00> : vector<16x256xf32>
    %156 = tpu.matmul %155, %10, %cst_45 {dimension_numbers = #tpu.dot_dimension_numbers<[1], [0], [0], [1], [0, 0, 1, 1], [], []>} : vector<16x64xbf16>, vector<64x256xbf16>, vector<16x256xf32> -> vector<16x256xf32>
    %157 = vector.extract_strided_slice %7 {offsets = [3, 0, 0], sizes = [1, 16, 256], strides = [1, 1, 1]} : vector<8x16x256xf32> to vector<1x16x256xf32>
    %158 = vector.shape_cast %157 : vector<1x16x256xf32> to vector<16x256xf32>
    %cst_46 = arith.constant dense<0.000000e+00> : vector<16x256xf32>
    %159 = tpu.matmul %133, %8, %cst_46 {dimension_numbers = #tpu.dot_dimension_numbers<[1], [0], [0], [1], [0, 0, 1, 1], [], []>} : vector<16x64xbf16>, vector<64x256xbf16>, vector<16x256xf32> -> vector<16x256xf32>
    %160 = arith.addf %158, %159 : vector<16x256xf32>
    %161 = vector.extract_strided_slice %160 {offsets = [0, 0], sizes = [16, 192], strides = [1, 1]} : vector<16x256xf32> to vector<16x192xf32>
    %cst_47 = arith.constant 5.000000e-01 : f32
    %162 = vector.broadcast %cst_47 : f32 to vector<16x192xf32>
    %163 = arith.mulf %162, %161 : vector<16x192xf32>
    %164 = math.tanh %163 : vector<16x192xf32>
    %cst_48 = arith.constant 5.000000e-01 : f32
    %165 = vector.broadcast %cst_48 : f32 to vector<16x192xf32>
    %166 = arith.mulf %165, %164 : vector<16x192xf32>
    %cst_49 = arith.constant 5.000000e-01 : f32
    %167 = vector.broadcast %cst_49 : f32 to vector<16x192xf32>
    %168 = arith.addf %166, %167 : vector<16x192xf32>
    %169 = vector.extract_strided_slice %168 {offsets = [0, 0], sizes = [16, 64], strides = [1, 1]} : vector<16x192xf32> to vector<16x64xf32>
    %170 = vector.extract_strided_slice %168 {offsets = [0, 64], sizes = [16, 64], strides = [1, 1]} : vector<16x192xf32> to vector<16x64xf32>
    %171 = vector.extract_strided_slice %168 {offsets = [0, 128], sizes = [16, 64], strides = [1, 1]} : vector<16x192xf32> to vector<16x64xf32>
    %172 = vector.extract_strided_slice %160 {offsets = [0, 192], sizes = [16, 64], strides = [1, 1]} : vector<16x256xf32> to vector<16x64xf32>
    %173 = math.tanh %172 : vector<16x64xf32>
    %174 = arith.mulf %170, %130 : vector<16x64xf32>
    %175 = arith.mulf %169, %173 : vector<16x64xf32>
    %176 = arith.addf %174, %175 : vector<16x64xf32>
    %177 = math.tanh %176 : vector<16x64xf32>
    %178 = arith.mulf %171, %177 : vector<16x64xf32>
    %179 = arith.truncf %178 : vector<16x64xf32> to vector<16x64xbf16>
    %cst_50 = arith.constant dense<0.000000e+00> : vector<16x256xf32>
    %180 = tpu.matmul %179, %9, %cst_50 {dimension_numbers = #tpu.dot_dimension_numbers<[1], [0], [0], [1], [0, 0, 1, 1], [], []>} : vector<16x64xbf16>, vector<64x256xbf16>, vector<16x256xf32> -> vector<16x256xf32>
    %181 = arith.addf %156, %180 : vector<16x256xf32>
    %182 = arith.addf %181, %13 : vector<16x256xf32>
    %183 = vector.extract_strided_slice %182 {offsets = [0, 0], sizes = [16, 192], strides = [1, 1]} : vector<16x256xf32> to vector<16x192xf32>
    %cst_51 = arith.constant 5.000000e-01 : f32
    %184 = vector.broadcast %cst_51 : f32 to vector<16x192xf32>
    %185 = arith.mulf %184, %183 : vector<16x192xf32>
    %186 = math.tanh %185 : vector<16x192xf32>
    %cst_52 = arith.constant 5.000000e-01 : f32
    %187 = vector.broadcast %cst_52 : f32 to vector<16x192xf32>
    %188 = arith.mulf %187, %186 : vector<16x192xf32>
    %cst_53 = arith.constant 5.000000e-01 : f32
    %189 = vector.broadcast %cst_53 : f32 to vector<16x192xf32>
    %190 = arith.addf %188, %189 : vector<16x192xf32>
    %191 = vector.extract_strided_slice %190 {offsets = [0, 0], sizes = [16, 64], strides = [1, 1]} : vector<16x192xf32> to vector<16x64xf32>
    %192 = vector.extract_strided_slice %190 {offsets = [0, 64], sizes = [16, 64], strides = [1, 1]} : vector<16x192xf32> to vector<16x64xf32>
    %193 = vector.extract_strided_slice %190 {offsets = [0, 128], sizes = [16, 64], strides = [1, 1]} : vector<16x192xf32> to vector<16x64xf32>
    %194 = vector.extract_strided_slice %182 {offsets = [0, 192], sizes = [16, 64], strides = [1, 1]} : vector<16x256xf32> to vector<16x64xf32>
    %195 = math.tanh %194 : vector<16x64xf32>
    %196 = arith.mulf %192, %152 : vector<16x64xf32>
    %197 = arith.mulf %191, %195 : vector<16x64xf32>
    %198 = arith.addf %196, %197 : vector<16x64xf32>
    %199 = math.tanh %198 : vector<16x64xf32>
    %200 = arith.mulf %193, %199 : vector<16x64xf32>
    %201 = arith.truncf %200 : vector<16x64xf32> to vector<16x64xbf16>
    %cst_54 = arith.constant dense<0.000000e+00> : vector<16x256xf32>
    %202 = tpu.matmul %201, %10, %cst_54 {dimension_numbers = #tpu.dot_dimension_numbers<[1], [0], [0], [1], [0, 0, 1, 1], [], []>} : vector<16x64xbf16>, vector<64x256xbf16>, vector<16x256xf32> -> vector<16x256xf32>
    %203 = vector.extract_strided_slice %7 {offsets = [4, 0, 0], sizes = [1, 16, 256], strides = [1, 1, 1]} : vector<8x16x256xf32> to vector<1x16x256xf32>
    %204 = vector.shape_cast %203 : vector<1x16x256xf32> to vector<16x256xf32>
    %cst_55 = arith.constant dense<0.000000e+00> : vector<16x256xf32>
    %205 = tpu.matmul %179, %8, %cst_55 {dimension_numbers = #tpu.dot_dimension_numbers<[1], [0], [0], [1], [0, 0, 1, 1], [], []>} : vector<16x64xbf16>, vector<64x256xbf16>, vector<16x256xf32> -> vector<16x256xf32>
    %206 = arith.addf %204, %205 : vector<16x256xf32>
    %207 = vector.extract_strided_slice %206 {offsets = [0, 0], sizes = [16, 192], strides = [1, 1]} : vector<16x256xf32> to vector<16x192xf32>
    %cst_56 = arith.constant 5.000000e-01 : f32
    %208 = vector.broadcast %cst_56 : f32 to vector<16x192xf32>
    %209 = arith.mulf %208, %207 : vector<16x192xf32>
    %210 = math.tanh %209 : vector<16x192xf32>
    %cst_57 = arith.constant 5.000000e-01 : f32
    %211 = vector.broadcast %cst_57 : f32 to vector<16x192xf32>
    %212 = arith.mulf %211, %210 : vector<16x192xf32>
    %cst_58 = arith.constant 5.000000e-01 : f32
    %213 = vector.broadcast %cst_58 : f32 to vector<16x192xf32>
    %214 = arith.addf %212, %213 : vector<16x192xf32>
    %215 = vector.extract_strided_slice %214 {offsets = [0, 0], sizes = [16, 64], strides = [1, 1]} : vector<16x192xf32> to vector<16x64xf32>
    %216 = vector.extract_strided_slice %214 {offsets = [0, 64], sizes = [16, 64], strides = [1, 1]} : vector<16x192xf32> to vector<16x64xf32>
    %217 = vector.extract_strided_slice %214 {offsets = [0, 128], sizes = [16, 64], strides = [1, 1]} : vector<16x192xf32> to vector<16x64xf32>
    %218 = vector.extract_strided_slice %206 {offsets = [0, 192], sizes = [16, 64], strides = [1, 1]} : vector<16x256xf32> to vector<16x64xf32>
    %219 = math.tanh %218 : vector<16x64xf32>
    %220 = arith.mulf %216, %176 : vector<16x64xf32>
    %221 = arith.mulf %215, %219 : vector<16x64xf32>
    %222 = arith.addf %220, %221 : vector<16x64xf32>
    %223 = math.tanh %222 : vector<16x64xf32>
    %224 = arith.mulf %217, %223 : vector<16x64xf32>
    %225 = arith.truncf %224 : vector<16x64xf32> to vector<16x64xbf16>
    %cst_59 = arith.constant dense<0.000000e+00> : vector<16x256xf32>
    %226 = tpu.matmul %225, %9, %cst_59 {dimension_numbers = #tpu.dot_dimension_numbers<[1], [0], [0], [1], [0, 0, 1, 1], [], []>} : vector<16x64xbf16>, vector<64x256xbf16>, vector<16x256xf32> -> vector<16x256xf32>
    %227 = arith.addf %202, %226 : vector<16x256xf32>
    %228 = arith.addf %227, %13 : vector<16x256xf32>
    %229 = vector.extract_strided_slice %228 {offsets = [0, 0], sizes = [16, 192], strides = [1, 1]} : vector<16x256xf32> to vector<16x192xf32>
    %cst_60 = arith.constant 5.000000e-01 : f32
    %230 = vector.broadcast %cst_60 : f32 to vector<16x192xf32>
    %231 = arith.mulf %230, %229 : vector<16x192xf32>
    %232 = math.tanh %231 : vector<16x192xf32>
    %cst_61 = arith.constant 5.000000e-01 : f32
    %233 = vector.broadcast %cst_61 : f32 to vector<16x192xf32>
    %234 = arith.mulf %233, %232 : vector<16x192xf32>
    %cst_62 = arith.constant 5.000000e-01 : f32
    %235 = vector.broadcast %cst_62 : f32 to vector<16x192xf32>
    %236 = arith.addf %234, %235 : vector<16x192xf32>
    %237 = vector.extract_strided_slice %236 {offsets = [0, 0], sizes = [16, 64], strides = [1, 1]} : vector<16x192xf32> to vector<16x64xf32>
    %238 = vector.extract_strided_slice %236 {offsets = [0, 64], sizes = [16, 64], strides = [1, 1]} : vector<16x192xf32> to vector<16x64xf32>
    %239 = vector.extract_strided_slice %236 {offsets = [0, 128], sizes = [16, 64], strides = [1, 1]} : vector<16x192xf32> to vector<16x64xf32>
    %240 = vector.extract_strided_slice %228 {offsets = [0, 192], sizes = [16, 64], strides = [1, 1]} : vector<16x256xf32> to vector<16x64xf32>
    %241 = math.tanh %240 : vector<16x64xf32>
    %242 = arith.mulf %238, %198 : vector<16x64xf32>
    %243 = arith.mulf %237, %241 : vector<16x64xf32>
    %244 = arith.addf %242, %243 : vector<16x64xf32>
    %245 = math.tanh %244 : vector<16x64xf32>
    %246 = arith.mulf %239, %245 : vector<16x64xf32>
    %247 = arith.truncf %246 : vector<16x64xf32> to vector<16x64xbf16>
    %cst_63 = arith.constant dense<0.000000e+00> : vector<16x256xf32>
    %248 = tpu.matmul %247, %10, %cst_63 {dimension_numbers = #tpu.dot_dimension_numbers<[1], [0], [0], [1], [0, 0, 1, 1], [], []>} : vector<16x64xbf16>, vector<64x256xbf16>, vector<16x256xf32> -> vector<16x256xf32>
    %249 = vector.extract_strided_slice %7 {offsets = [5, 0, 0], sizes = [1, 16, 256], strides = [1, 1, 1]} : vector<8x16x256xf32> to vector<1x16x256xf32>
    %250 = vector.shape_cast %249 : vector<1x16x256xf32> to vector<16x256xf32>
    %cst_64 = arith.constant dense<0.000000e+00> : vector<16x256xf32>
    %251 = tpu.matmul %225, %8, %cst_64 {dimension_numbers = #tpu.dot_dimension_numbers<[1], [0], [0], [1], [0, 0, 1, 1], [], []>} : vector<16x64xbf16>, vector<64x256xbf16>, vector<16x256xf32> -> vector<16x256xf32>
    %252 = arith.addf %250, %251 : vector<16x256xf32>
    %253 = vector.extract_strided_slice %252 {offsets = [0, 0], sizes = [16, 192], strides = [1, 1]} : vector<16x256xf32> to vector<16x192xf32>
    %cst_65 = arith.constant 5.000000e-01 : f32
    %254 = vector.broadcast %cst_65 : f32 to vector<16x192xf32>
    %255 = arith.mulf %254, %253 : vector<16x192xf32>
    %256 = math.tanh %255 : vector<16x192xf32>
    %cst_66 = arith.constant 5.000000e-01 : f32
    %257 = vector.broadcast %cst_66 : f32 to vector<16x192xf32>
    %258 = arith.mulf %257, %256 : vector<16x192xf32>
    %cst_67 = arith.constant 5.000000e-01 : f32
    %259 = vector.broadcast %cst_67 : f32 to vector<16x192xf32>
    %260 = arith.addf %258, %259 : vector<16x192xf32>
    %261 = vector.extract_strided_slice %260 {offsets = [0, 0], sizes = [16, 64], strides = [1, 1]} : vector<16x192xf32> to vector<16x64xf32>
    %262 = vector.extract_strided_slice %260 {offsets = [0, 64], sizes = [16, 64], strides = [1, 1]} : vector<16x192xf32> to vector<16x64xf32>
    %263 = vector.extract_strided_slice %260 {offsets = [0, 128], sizes = [16, 64], strides = [1, 1]} : vector<16x192xf32> to vector<16x64xf32>
    %264 = vector.extract_strided_slice %252 {offsets = [0, 192], sizes = [16, 64], strides = [1, 1]} : vector<16x256xf32> to vector<16x64xf32>
    %265 = math.tanh %264 : vector<16x64xf32>
    %266 = arith.mulf %262, %222 : vector<16x64xf32>
    %267 = arith.mulf %261, %265 : vector<16x64xf32>
    %268 = arith.addf %266, %267 : vector<16x64xf32>
    %269 = math.tanh %268 : vector<16x64xf32>
    %270 = arith.mulf %263, %269 : vector<16x64xf32>
    %271 = arith.truncf %270 : vector<16x64xf32> to vector<16x64xbf16>
    %cst_68 = arith.constant dense<0.000000e+00> : vector<16x256xf32>
    %272 = tpu.matmul %271, %9, %cst_68 {dimension_numbers = #tpu.dot_dimension_numbers<[1], [0], [0], [1], [0, 0, 1, 1], [], []>} : vector<16x64xbf16>, vector<64x256xbf16>, vector<16x256xf32> -> vector<16x256xf32>
    %273 = arith.addf %248, %272 : vector<16x256xf32>
    %274 = arith.addf %273, %13 : vector<16x256xf32>
    %275 = vector.extract_strided_slice %274 {offsets = [0, 0], sizes = [16, 192], strides = [1, 1]} : vector<16x256xf32> to vector<16x192xf32>
    %cst_69 = arith.constant 5.000000e-01 : f32
    %276 = vector.broadcast %cst_69 : f32 to vector<16x192xf32>
    %277 = arith.mulf %276, %275 : vector<16x192xf32>
    %278 = math.tanh %277 : vector<16x192xf32>
    %cst_70 = arith.constant 5.000000e-01 : f32
    %279 = vector.broadcast %cst_70 : f32 to vector<16x192xf32>
    %280 = arith.mulf %279, %278 : vector<16x192xf32>
    %cst_71 = arith.constant 5.000000e-01 : f32
    %281 = vector.broadcast %cst_71 : f32 to vector<16x192xf32>
    %282 = arith.addf %280, %281 : vector<16x192xf32>
    %283 = vector.extract_strided_slice %282 {offsets = [0, 0], sizes = [16, 64], strides = [1, 1]} : vector<16x192xf32> to vector<16x64xf32>
    %284 = vector.extract_strided_slice %282 {offsets = [0, 64], sizes = [16, 64], strides = [1, 1]} : vector<16x192xf32> to vector<16x64xf32>
    %285 = vector.extract_strided_slice %282 {offsets = [0, 128], sizes = [16, 64], strides = [1, 1]} : vector<16x192xf32> to vector<16x64xf32>
    %286 = vector.extract_strided_slice %274 {offsets = [0, 192], sizes = [16, 64], strides = [1, 1]} : vector<16x256xf32> to vector<16x64xf32>
    %287 = math.tanh %286 : vector<16x64xf32>
    %288 = arith.mulf %284, %244 : vector<16x64xf32>
    %289 = arith.mulf %283, %287 : vector<16x64xf32>
    %290 = arith.addf %288, %289 : vector<16x64xf32>
    %291 = math.tanh %290 : vector<16x64xf32>
    %292 = arith.mulf %285, %291 : vector<16x64xf32>
    %293 = arith.truncf %292 : vector<16x64xf32> to vector<16x64xbf16>
    %cst_72 = arith.constant dense<0.000000e+00> : vector<16x256xf32>
    %294 = tpu.matmul %293, %10, %cst_72 {dimension_numbers = #tpu.dot_dimension_numbers<[1], [0], [0], [1], [0, 0, 1, 1], [], []>} : vector<16x64xbf16>, vector<64x256xbf16>, vector<16x256xf32> -> vector<16x256xf32>
    %295 = vector.extract_strided_slice %7 {offsets = [6, 0, 0], sizes = [1, 16, 256], strides = [1, 1, 1]} : vector<8x16x256xf32> to vector<1x16x256xf32>
    %296 = vector.shape_cast %295 : vector<1x16x256xf32> to vector<16x256xf32>
    %cst_73 = arith.constant dense<0.000000e+00> : vector<16x256xf32>
    %297 = tpu.matmul %271, %8, %cst_73 {dimension_numbers = #tpu.dot_dimension_numbers<[1], [0], [0], [1], [0, 0, 1, 1], [], []>} : vector<16x64xbf16>, vector<64x256xbf16>, vector<16x256xf32> -> vector<16x256xf32>
    %298 = arith.addf %296, %297 : vector<16x256xf32>
    %299 = vector.extract_strided_slice %298 {offsets = [0, 0], sizes = [16, 192], strides = [1, 1]} : vector<16x256xf32> to vector<16x192xf32>
    %cst_74 = arith.constant 5.000000e-01 : f32
    %300 = vector.broadcast %cst_74 : f32 to vector<16x192xf32>
    %301 = arith.mulf %300, %299 : vector<16x192xf32>
    %302 = math.tanh %301 : vector<16x192xf32>
    %cst_75 = arith.constant 5.000000e-01 : f32
    %303 = vector.broadcast %cst_75 : f32 to vector<16x192xf32>
    %304 = arith.mulf %303, %302 : vector<16x192xf32>
    %cst_76 = arith.constant 5.000000e-01 : f32
    %305 = vector.broadcast %cst_76 : f32 to vector<16x192xf32>
    %306 = arith.addf %304, %305 : vector<16x192xf32>
    %307 = vector.extract_strided_slice %306 {offsets = [0, 0], sizes = [16, 64], strides = [1, 1]} : vector<16x192xf32> to vector<16x64xf32>
    %308 = vector.extract_strided_slice %306 {offsets = [0, 64], sizes = [16, 64], strides = [1, 1]} : vector<16x192xf32> to vector<16x64xf32>
    %309 = vector.extract_strided_slice %306 {offsets = [0, 128], sizes = [16, 64], strides = [1, 1]} : vector<16x192xf32> to vector<16x64xf32>
    %310 = vector.extract_strided_slice %298 {offsets = [0, 192], sizes = [16, 64], strides = [1, 1]} : vector<16x256xf32> to vector<16x64xf32>
    %311 = math.tanh %310 : vector<16x64xf32>
    %312 = arith.mulf %308, %268 : vector<16x64xf32>
    %313 = arith.mulf %307, %311 : vector<16x64xf32>
    %314 = arith.addf %312, %313 : vector<16x64xf32>
    %315 = math.tanh %314 : vector<16x64xf32>
    %316 = arith.mulf %309, %315 : vector<16x64xf32>
    %317 = arith.truncf %316 : vector<16x64xf32> to vector<16x64xbf16>
    %cst_77 = arith.constant dense<0.000000e+00> : vector<16x256xf32>
    %318 = tpu.matmul %317, %9, %cst_77 {dimension_numbers = #tpu.dot_dimension_numbers<[1], [0], [0], [1], [0, 0, 1, 1], [], []>} : vector<16x64xbf16>, vector<64x256xbf16>, vector<16x256xf32> -> vector<16x256xf32>
    %319 = arith.addf %294, %318 : vector<16x256xf32>
    %320 = arith.addf %319, %13 : vector<16x256xf32>
    %321 = vector.extract_strided_slice %320 {offsets = [0, 0], sizes = [16, 192], strides = [1, 1]} : vector<16x256xf32> to vector<16x192xf32>
    %cst_78 = arith.constant 5.000000e-01 : f32
    %322 = vector.broadcast %cst_78 : f32 to vector<16x192xf32>
    %323 = arith.mulf %322, %321 : vector<16x192xf32>
    %324 = math.tanh %323 : vector<16x192xf32>
    %cst_79 = arith.constant 5.000000e-01 : f32
    %325 = vector.broadcast %cst_79 : f32 to vector<16x192xf32>
    %326 = arith.mulf %325, %324 : vector<16x192xf32>
    %cst_80 = arith.constant 5.000000e-01 : f32
    %327 = vector.broadcast %cst_80 : f32 to vector<16x192xf32>
    %328 = arith.addf %326, %327 : vector<16x192xf32>
    %329 = vector.extract_strided_slice %328 {offsets = [0, 0], sizes = [16, 64], strides = [1, 1]} : vector<16x192xf32> to vector<16x64xf32>
    %330 = vector.extract_strided_slice %328 {offsets = [0, 64], sizes = [16, 64], strides = [1, 1]} : vector<16x192xf32> to vector<16x64xf32>
    %331 = vector.extract_strided_slice %328 {offsets = [0, 128], sizes = [16, 64], strides = [1, 1]} : vector<16x192xf32> to vector<16x64xf32>
    %332 = vector.extract_strided_slice %320 {offsets = [0, 192], sizes = [16, 64], strides = [1, 1]} : vector<16x256xf32> to vector<16x64xf32>
    %333 = math.tanh %332 : vector<16x64xf32>
    %334 = arith.mulf %330, %290 : vector<16x64xf32>
    %335 = arith.mulf %329, %333 : vector<16x64xf32>
    %336 = arith.addf %334, %335 : vector<16x64xf32>
    %337 = math.tanh %336 : vector<16x64xf32>
    %338 = arith.mulf %331, %337 : vector<16x64xf32>
    %339 = arith.truncf %338 : vector<16x64xf32> to vector<16x64xbf16>
    %cst_81 = arith.constant dense<0.000000e+00> : vector<16x256xf32>
    %340 = tpu.matmul %339, %10, %cst_81 {dimension_numbers = #tpu.dot_dimension_numbers<[1], [0], [0], [1], [0, 0, 1, 1], [], []>} : vector<16x64xbf16>, vector<64x256xbf16>, vector<16x256xf32> -> vector<16x256xf32>
    %341 = vector.extract_strided_slice %7 {offsets = [7, 0, 0], sizes = [1, 16, 256], strides = [1, 1, 1]} : vector<8x16x256xf32> to vector<1x16x256xf32>
    %342 = vector.shape_cast %341 : vector<1x16x256xf32> to vector<16x256xf32>
    %cst_82 = arith.constant dense<0.000000e+00> : vector<16x256xf32>
    %343 = tpu.matmul %317, %8, %cst_82 {dimension_numbers = #tpu.dot_dimension_numbers<[1], [0], [0], [1], [0, 0, 1, 1], [], []>} : vector<16x64xbf16>, vector<64x256xbf16>, vector<16x256xf32> -> vector<16x256xf32>
    %344 = arith.addf %342, %343 : vector<16x256xf32>
    %345 = vector.extract_strided_slice %344 {offsets = [0, 0], sizes = [16, 192], strides = [1, 1]} : vector<16x256xf32> to vector<16x192xf32>
    %cst_83 = arith.constant 5.000000e-01 : f32
    %346 = vector.broadcast %cst_83 : f32 to vector<16x192xf32>
    %347 = arith.mulf %346, %345 : vector<16x192xf32>
    %348 = math.tanh %347 : vector<16x192xf32>
    %cst_84 = arith.constant 5.000000e-01 : f32
    %349 = vector.broadcast %cst_84 : f32 to vector<16x192xf32>
    %350 = arith.mulf %349, %348 : vector<16x192xf32>
    %cst_85 = arith.constant 5.000000e-01 : f32
    %351 = vector.broadcast %cst_85 : f32 to vector<16x192xf32>
    %352 = arith.addf %350, %351 : vector<16x192xf32>
    %353 = vector.extract_strided_slice %352 {offsets = [0, 0], sizes = [16, 64], strides = [1, 1]} : vector<16x192xf32> to vector<16x64xf32>
    %354 = vector.extract_strided_slice %352 {offsets = [0, 64], sizes = [16, 64], strides = [1, 1]} : vector<16x192xf32> to vector<16x64xf32>
    %355 = vector.extract_strided_slice %352 {offsets = [0, 128], sizes = [16, 64], strides = [1, 1]} : vector<16x192xf32> to vector<16x64xf32>
    %356 = vector.extract_strided_slice %344 {offsets = [0, 192], sizes = [16, 64], strides = [1, 1]} : vector<16x256xf32> to vector<16x64xf32>
    %357 = math.tanh %356 : vector<16x64xf32>
    %358 = arith.mulf %354, %314 : vector<16x64xf32>
    %359 = arith.mulf %353, %357 : vector<16x64xf32>
    %360 = arith.addf %358, %359 : vector<16x64xf32>
    %361 = math.tanh %360 : vector<16x64xf32>
    %362 = arith.mulf %355, %361 : vector<16x64xf32>
    %363 = arith.truncf %362 : vector<16x64xf32> to vector<16x64xbf16>
    %cst_86 = arith.constant dense<0.000000e+00> : vector<16x256xf32>
    %364 = tpu.matmul %363, %9, %cst_86 {dimension_numbers = #tpu.dot_dimension_numbers<[1], [0], [0], [1], [0, 0, 1, 1], [], []>} : vector<16x64xbf16>, vector<64x256xbf16>, vector<16x256xf32> -> vector<16x256xf32>
    %365 = arith.addf %340, %364 : vector<16x256xf32>
    %366 = arith.addf %365, %13 : vector<16x256xf32>
    %367 = vector.extract_strided_slice %366 {offsets = [0, 0], sizes = [16, 192], strides = [1, 1]} : vector<16x256xf32> to vector<16x192xf32>
    %cst_87 = arith.constant 5.000000e-01 : f32
    %368 = vector.broadcast %cst_87 : f32 to vector<16x192xf32>
    %369 = arith.mulf %368, %367 : vector<16x192xf32>
    %370 = math.tanh %369 : vector<16x192xf32>
    %cst_88 = arith.constant 5.000000e-01 : f32
    %371 = vector.broadcast %cst_88 : f32 to vector<16x192xf32>
    %372 = arith.mulf %371, %370 : vector<16x192xf32>
    %cst_89 = arith.constant 5.000000e-01 : f32
    %373 = vector.broadcast %cst_89 : f32 to vector<16x192xf32>
    %374 = arith.addf %372, %373 : vector<16x192xf32>
    %375 = vector.extract_strided_slice %374 {offsets = [0, 0], sizes = [16, 64], strides = [1, 1]} : vector<16x192xf32> to vector<16x64xf32>
    %376 = vector.extract_strided_slice %374 {offsets = [0, 64], sizes = [16, 64], strides = [1, 1]} : vector<16x192xf32> to vector<16x64xf32>
    %377 = vector.extract_strided_slice %374 {offsets = [0, 128], sizes = [16, 64], strides = [1, 1]} : vector<16x192xf32> to vector<16x64xf32>
    %378 = vector.extract_strided_slice %366 {offsets = [0, 192], sizes = [16, 64], strides = [1, 1]} : vector<16x256xf32> to vector<16x64xf32>
    %379 = math.tanh %378 : vector<16x64xf32>
    %380 = arith.mulf %376, %336 : vector<16x64xf32>
    %381 = arith.mulf %375, %379 : vector<16x64xf32>
    %382 = arith.addf %380, %381 : vector<16x64xf32>
    %383 = math.tanh %382 : vector<16x64xf32>
    %384 = arith.mulf %377, %383 : vector<16x64xf32>
    %385 = arith.truncf %384 : vector<16x64xf32> to vector<16x64xbf16>
    %c0_90 = arith.constant 0 : index
    %c0_91 = arith.constant 0 : index
    %386 = vector.load %arg8[%c0_90, %c0_91] : memref<64x128xbf16, #tpu.memory_space<vmem>>, vector<64x128xbf16>
    %cst_92 = arith.constant dense<0.000000e+00> : vector<16x128xf32>
    %387 = tpu.matmul %385, %386, %cst_92 {dimension_numbers = #tpu.dot_dimension_numbers<[1], [0], [0], [1], [0, 0, 1, 1], [], []>} : vector<16x64xbf16>, vector<64x128xbf16>, vector<16x128xf32> -> vector<16x128xf32>
    %c0_93 = arith.constant 0 : index
    %c0_94 = arith.constant 0 : index
    %388 = vector.load %arg9[%c0_93, %c0_94] : memref<1x128xf32, #tpu.memory_space<vmem>>, vector<1x128xf32>
    %389 = vector.broadcast %388 : vector<1x128xf32> to vector<16x128xf32>
    %390 = arith.addf %387, %389 : vector<16x128xf32>
    %c0_95 = arith.constant 0 : index
    %c0_96 = arith.constant 0 : index
    %391 = vector.load %arg10[%c0_95, %c0_96] : memref<16x128xf32, #tpu.memory_space<vmem>>, vector<16x128xf32>
    tpu.vector_store %arg10[%c0_95, %c0_96], %390 {strides = array<i32>} : memref<16x128xf32, #tpu.memory_space<vmem>>, vector<16x128xf32>,
    return
  }
  func.func @transform_0(%arg0: i32) -> (i32, i32, i32) {
    %c0_i32 = arith.constant 0 : i32
    %c0_i32_0 = arith.constant 0 : i32
    %c0_i32_1 = arith.constant 0 : i32
    return %c0_i32, %arg0, %c0_i32_0 : i32, i32, i32
  }
  func.func @transform_1(%arg0: i32) -> (i32, i32) {
    %c0_i32 = arith.constant 0 : i32
    %c0_i32_0 = arith.constant 0 : i32
    %c0_i32_1 = arith.constant 0 : i32
    return %c0_i32, %c0_i32_0 : i32, i32
  }
  func.func @transform_2(%arg0: i32) -> (i32, i32) {
    %c0_i32 = arith.constant 0 : i32
    %c0_i32_0 = arith.constant 0 : i32
    %c0_i32_1 = arith.constant 0 : i32
    return %c0_i32, %c0_i32_0 : i32, i32
  }
  func.func @transform_3(%arg0: i32) -> (i32, i32) {
    %c0_i32 = arith.constant 0 : i32
    %c0_i32_0 = arith.constant 0 : i32
    %c0_i32_1 = arith.constant 0 : i32
    return %c0_i32, %c0_i32_0 : i32, i32
  }
  func.func @transform_4(%arg0: i32) -> (i32, i32) {
    %c0_i32 = arith.constant 0 : i32
    %c0_i32_0 = arith.constant 0 : i32
    %c0_i32_1 = arith.constant 0 : i32
    return %c0_i32, %c0_i32_0 : i32, i32
  }
  func.func @transform_5(%arg0: i32) -> (i32, i32) {
    %c0_i32 = arith.constant 0 : i32
    %c0_i32_0 = arith.constant 0 : i32
    %c0_i32_1 = arith.constant 0 : i32
    return %c0_i32, %c0_i32_0 : i32, i32
  }
  func.func @transform_6(%arg0: i32) -> (i32, i32) {
    %c0_i32 = arith.constant 0 : i32
    %c0_i32_0 = arith.constant 0 : i32
    %c0_i32_1 = arith.constant 0 : i32
    return %c0_i32, %c0_i32_0 : i32, i32
  }
  func.func @transform_7(%arg0: i32) -> (i32, i32) {
    %c0_i32 = arith.constant 0 : i32
    %c0_i32_0 = arith.constant 0 : i32
    %c0_i32_1 = arith.constant 0 : i32
    return %c0_i32, %c0_i32_0 : i32, i32
  }
  func.func @transform_8(%arg0: i32) -> (i32, i32) {
    %c0_i32 = arith.constant 0 : i32
    %c0_i32_0 = arith.constant 0 : i32
    %c0_i32_1 = arith.constant 0 : i32
    return %c0_i32, %c0_i32_0 : i32, i32
  }
  func.func @transform_9(%arg0: i32) -> (i32, i32) {
    %c0_i32 = arith.constant 0 : i32
    %c0_i32_0 = arith.constant 0 : i32
    return %arg0, %c0_i32 : i32, i32
  }
}

</mosaic_0001>

<llo_original>
// kernel: tpu_custom_call.1
$region0: #{tpu_custom_call.1}
  #allocation0 [shape = 'u32[]', space=smem, size = 0x4, offset = 0x4, fixed_abs, tag = 'smem constant byte address 0x4 - core index']
  #allocation1 [shape = 'u32[144,128]{1,0:T(1,128)}', space=vmem, size = 0x12000, scoped, tag = 'internal scratch']
  %s0 = inlined_call_operand.vmem [shape: bf16[8,16,7], index: 0, kind: input, shape index: {}]
  %s1 = inlined_call_operand.hbm [shape: bf16[7,256], index: 1, kind: input, shape index: {}]
  %s2 = inlined_call_operand.vmem [shape: f32[1,256], index: 2, kind: input, shape index: {}]
  %s3 = inlined_call_operand.vmem [shape: bf16[64,256], index: 3, kind: input, shape index: {}]
  %s4 = inlined_call_operand.hbm [shape: bf16[64,256], index: 4, kind: input, shape index: {}]
  %s5 = inlined_call_operand.hbm [shape: bf16[64,256], index: 5, kind: input, shape index: {}]
  %s6 = inlined_call_operand.vmem [shape: f32[1,256], index: 6, kind: input, shape index: {}]
  %s7 = inlined_call_operand.vmem [shape: bf16[64,128], index: 7, kind: input, shape index: {}]
  %s8 = inlined_call_operand.vmem [shape: f32[1,128], index: 8, kind: input, shape index: {}]
  %s9 = inlined_call_operand.hbm [shape: f32[16,128], index: 9, kind: output, shape index: {}]
  %s10 = sld [smem:[#allocation0]]
  $region58: #{tpu_custom_call.1} parent=0
    _
  %s12 = ssub.s32 1, %s10
  %s13 = scalar_select 0, %s12, %s10
  $region1: #{tpu_custom_call.1} parent=0
    #allocation2 [shape = 'u8[4096]{0}', space=vmem, size = 0x1000, scoped, tag = 'input window, operand 1, single buffered']
    #allocation3 [shape = 's32[1]{0}', space=sflag, size = 0x4, scoped, tag = 'scoped memory for tpu_custom_call.1']
    #allocation4 [shape = 's32[1]{0}', space=sflag, size = 0x4, scoped, tag = 'scoped memory for tpu_custom_call.1']
    #allocation5 [shape = 'u8[32768]{0}', space=vmem, size = 0x8000, scoped, tag = 'input window, operand 4, single buffered']
    #allocation6 [shape = 's32[1]{0}', space=sflag, size = 0x4, scoped, tag = 'scoped memory for tpu_custom_call.1']
    #allocation7 [shape = 'u8[32768]{0}', space=vmem, size = 0x8000, scoped, tag = 'input window, operand 5, single buffered']
    #allocation8 [shape = 'u8[8192]{0}', space=vmem, size = 0x2000, scoped, tag = 'output window, operand 0, single buffered']
    %14 = vsyncpa [#allocation3], 0
    %15 = vsyncpa [#allocation6], 0
    %16 = vsyncpa [#allocation4], 0
    // Predicated region
    $region2: #{tpu_custom_call.1} parent=1 // pred_check
      _
    $region3: #{tpu_custom_call.1} parent=1 // pred_check_branch
      %18 = sbr.rel (0) target = $region5
    $region4: #{tpu_custom_call.1} parent=1 // pred_region
      _
    $region5: #{tpu_custom_call.1} parent=1 // pred_fallthru
      _
    // Predicated region
    $region6: #{tpu_custom_call.1} parent=1 // pred_check
      _
    $region7: #{tpu_custom_call.1} parent=1 // pred_check_branch
      %20 = sbr.rel (0) target = $region9
    $region8: #{tpu_custom_call.1} parent=1 // pred_region
      %s22 = ssub.s32 128, 128
      %23 = vsyncadd [#allocation3], %s22
      %s25 = sshll.u32 [#allocation2], 4
      %s26 = int_to_ptr.vmem [resolvable:$true] %s25
      %28 = dma.hbm_to_vmem [thread:$0]  %s1, 128, %s26, [#allocation3]
    $region9: #{tpu_custom_call.1} parent=1 // pred_fallthru
      _
    // Predicated region
    $region10: #{tpu_custom_call.1} parent=1 // pred_check
      _
    $region11: #{tpu_custom_call.1} parent=1 // pred_check_branch
      %30 = sbr.rel (0) target = $region13
    $region12: #{tpu_custom_call.1} parent=1 // pred_region
      _
    $region13: #{tpu_custom_call.1} parent=1 // pred_fallthru
      _
    // Predicated region
    $region14: #{tpu_custom_call.1} parent=1 // pred_check
      _
    $region15: #{tpu_custom_call.1} parent=1 // pred_check_branch
      %32 = sbr.rel (0) target = $region17
    $region16: #{tpu_custom_call.1} parent=1 // pred_region
      _
    $region17: #{tpu_custom_call.1} parent=1 // pred_fallthru
      _
    // Predicated region
    $region18: #{tpu_custom_call.1} parent=1 // pred_check
      _
    $region19: #{tpu_custom_call.1} parent=1 // pred_check_branch
      %34 = sbr.rel (0) target = $region21
    $region20: #{tpu_custom_call.1} parent=1 // pred_region
      %s36 = ssub.s32 1024, 1024
      %37 = vsyncadd [#allocation6], %s36
      %s38 = sshll.u32 [#allocation5], 4
      %s39 = int_to_ptr.vmem [resolvable:$true] %s38
      %44 = dma.hbm_to_vmem [thread:$0]  %s4, 1024, %s39, [#allocation6], 128, 128, 8
    $region21: #{tpu_custom_call.1} parent=1 // pred_fallthru
      _
    // Predicated region
    $region22: #{tpu_custom_call.1} parent=1 // pred_check
      _
    $region23: #{tpu_custom_call.1} parent=1 // pred_check_branch
      %46 = sbr.rel (0) target = $region25
    $region24: #{tpu_custom_call.1} parent=1 // pred_region
      %s48 = ssub.s32 1024, 1024
      %49 = vsyncadd [#allocation6], %s48
      %s50 = sshll.u32 [#allocation7], 4
      %s51 = int_to_ptr.vmem [resolvable:$true] %s50
      %56 = dma.hbm_to_vmem [thread:$0]  %s5, 1024, %s51, [#allocation6], 128, 128, 8
    $region25: #{tpu_custom_call.1} parent=1 // pred_fallthru
      _
    // Predicated region
    $region26: #{tpu_custom_call.1} parent=1 // pred_check
      _
    $region27: #{tpu_custom_call.1} parent=1 // pred_check_branch
      %58 = sbr.rel (0) target = $region29
    $region28: #{tpu_custom_call.1} parent=1 // pred_region
      _
    $region29: #{tpu_custom_call.1} parent=1 // pred_fallthru
      _
    // Predicated region
    $region30: #{tpu_custom_call.1} parent=1 // pred_check
      _
    $region31: #{tpu_custom_call.1} parent=1 // pred_check_branch
      %60 = sbr.rel (0) target = $region33
    $region32: #{tpu_custom_call.1} parent=1 // pred_region
      _
    $region33: #{tpu_custom_call.1} parent=1 // pred_fallthru
      _
    // Predicated region
    $region34: #{tpu_custom_call.1} parent=1 // pred_check
      _
    $region35: #{tpu_custom_call.1} parent=1 // pred_check_branch
      %62 = sbr.rel (0) target = $region37
    $region36: #{tpu_custom_call.1} parent=1 // pred_region
      _
    $region37: #{tpu_custom_call.1} parent=1 // pred_fallthru
      _
    // Predicated region
    $region38: #{tpu_custom_call.1} parent=1 // pred_check
      _
    $region39: #{tpu_custom_call.1} parent=1 // pred_check_branch
      %64 = sbr.rel (0) target = $region41
    $region40: #{tpu_custom_call.1} parent=1 // pred_region
      %65 = dma.done [#allocation3], 128
    $region41: #{tpu_custom_call.1} parent=1 // pred_fallthru
      _
    // Predicated region
    $region42: #{tpu_custom_call.1} parent=1 // pred_check
      _
    $region43: #{tpu_custom_call.1} parent=1 // pred_check_branch
      %67 = sbr.rel (0) target = $region45
    $region44: #{tpu_custom_call.1} parent=1 // pred_region
      %68 = dma.done [#allocation6], 1024
    $region45: #{tpu_custom_call.1} parent=1 // pred_fallthru
      _
    // Predicated region
    $region46: #{tpu_custom_call.1} parent=1 // pred_check
      _
    $region47: #{tpu_custom_call.1} parent=1 // pred_check_branch
      %70 = sbr.rel (0) target = $region49
    $region48: #{tpu_custom_call.1} parent=1 // pred_region
      %71 = dma.done [#allocation6], 1024
    $region49: #{tpu_custom_call.1} parent=1 // pred_fallthru
      _
    %v73 = vld [vmem:[%s0] sm:$0xf]
    %v74 = vld [vmem:[%s0 + $0x4] sm:$0xf]
    %v75 = vld [vmem:[%s0 + $0x8] sm:$0xf]
    %v76 = vld [vmem:[%s0 + $0xc] sm:$0xf]
    %v77 = vld [vmem:[%s0 + $0x10] sm:$0xf]
    %v78 = vld [vmem:[%s0 + $0x14] sm:$0xf]
    %v79 = vld [vmem:[%s0 + $0x18] sm:$0xf]
    %v80 = vld [vmem:[%s0 + $0x1c] sm:$0xf]
    %v81 = vld [vmem:[%s0 + $0x20] sm:$0xf]
    %v82 = vld [vmem:[%s0 + $0x24] sm:$0xf]
    %v83 = vld [vmem:[%s0 + $0x28] sm:$0xf]
    %v84 = vld [vmem:[%s0 + $0x2c] sm:$0xf]
    %v85 = vld [vmem:[%s0 + $0x30] sm:$0xf]
    %v86 = vld [vmem:[%s0 + $0x34] sm:$0xf]
    %v87 = vld [vmem:[%s0 + $0x38] sm:$0xf]
    %v88 = vld [vmem:[%s0 + $0x3c] sm:$0xf]
    %v89 = vld [vmem:[#allocation2] sm:$0xff]
    %v90 = vld [vmem:[%s2] sm:$0x3]
    %v92 = vlaneseq
    %v93 = vshrl.u32 %v92, 7
    %v94 = vsub.s32 0, %v93
    %v95 = vrot.slane %v90, %v94
    %v96 = vlaneseq
    %v97 = vshrl.u32 %v96, 7
    %v98 = vsub.s32 1, %v97
    %v99 = vrot.slane %v90, %v98
    %v118 = vunpack.c.l.b16 %v73
    %v119 = vunpack.c.l.b16 %v74
    %v120 = vunpack.c.l.b16 %v75
    %v121 = vunpack.c.l.b16 %v76
    %v122 = vunpack.c.l.b16 %v77
    %v123 = vunpack.c.l.b16 %v78
    %v124 = vunpack.c.l.b16 %v79
    %v125 = vunpack.c.l.b16 %v80
    %v126 = vunpack.c.l.b16 %v81
    %v127 = vunpack.c.l.b16 %v82
    %v128 = vunpack.c.l.b16 %v83
    %v129 = vunpack.c.l.b16 %v84
    %v130 = vunpack.c.l.b16 %v85
    %v131 = vunpack.c.l.b16 %v86
    %v132 = vunpack.c.l.b16 %v87
    %v133 = vunpack.c.l.b16 %v88
    %v134 = vpack.c.b16 %v119, %v118
    %v135 = vpack.c.b16 %v121, %v120
    %v136 = vpack.c.b16 %v123, %v122
    %v137 = vpack.c.b16 %v125, %v124
    %v138 = vpack.c.b16 %v127, %v126
    %v139 = vpack.c.b16 %v129, %v128
    %v140 = vpack.c.b16 %v131, %v130
    %v141 = vpack.c.b16 %v133, %v132
    %v143 = vunpack.c.l.b16 %v89
    %v144 = vunpack.c.h.b16 %v89
    %v145 = vpack.c.b16 %v143, %v143
    %v146 = vpack.c.b16 %v144, %v144
    %vm147 = vcmask 56320
    %v149 = vsel %vm147, %v134, 0
    %v152 = vsel %vm147, %v135, 0
    %v155 = vsel %vm147, %v136, 0
    %v158 = vsel %vm147, %v137, 0
    %v161 = vsel %vm147, %v138, 0
    %v164 = vsel %vm147, %v139, 0
    %v167 = vsel %vm147, %v140, 0
    %v170 = vsel %vm147, %v141, 0
    %vm172 = vcmask 1042432
    %vm173 = vcmask 1043456
    %v174 = vsel %vm172, 4294967295, 65535
    %v175 = vsel %vm173, %v174, 0
    %v177 = vand.u32 %v145, %v175
    %v180 = vand.u32 %v146, %v175
    %182 = vmatprep.subr.bf16.mxu0 %v180
    %183 = vmatpush1.bf16.msra.mxu0 %v177
    %184 = vmatprep.subr.bf16.mxu0 0
    %185 = vmatpush1.bf16.msra.mxu0 0
    %186 = vmatprep.subr.bf16.mxu0 0
    %187 = vmatpush1.bf16.msra.mxu0 0
    %188 = vmatprep.subr.bf16.mxu0 0
    %189 = vmatpush1.bf16.msra.mxu0 0
    %190 = vmatprep.subr.bf16.mxu0 0
    %191 = vmatpush1.bf16.msra.mxu0 0
    %192 = vmatprep.subr.bf16.mxu0 0
    %193 = vmatpush1.bf16.msra.mxu0 0
    %194 = vmatprep.subr.bf16.mxu0 0
    %195 = vmatpush1.bf16.msra.mxu0 0
    %196 = vmatprep.subr.bf16.mxu0 0
    %197 = vmatpush1.bf16.msra.mxu0 0
    %198 = vmatprep.subr.bf16.mxu0 0
    %199 = vmatpush1.bf16.msra.mxu0 0
    %200 = vmatprep.subr.bf16.mxu0 0
    %201 = vmatpush1.bf16.msra.mxu0 0
    %202 = vmatprep.subr.bf16.mxu0 0
    %203 = vmatpush1.bf16.msra.mxu0 0
    %204 = vmatprep.subr.bf16.mxu0 0
    %205 = vmatpush1.bf16.msra.mxu0 0
    %206 = vmatprep.subr.bf16.mxu0 0
    %207 = vmatpush1.bf16.msra.mxu0 0
    %208 = vmatprep.subr.bf16.mxu0 0
    %209 = vmatpush1.bf16.msra.mxu0 0
    %210 = vmatprep.subr.bf16.mxu0 0
    %211 = vmatpush1.bf16.msra.mxu0 0
    %212 = vmatprep.subr.bf16.mxu0 0
    %213 = vmatpush1.bf16.msra.mxu0 0
    %214 = vmatprep.mubr.bf16.mxu0 0
    %215 = vmatmul.mubr.bf16.gmra.mrb[0].mxu0 %v149
    %v216 = vpop.f32.mrb[0].mxu0
    %v217 = vadd.f32 %v95, %v216
    %v218 = vpop.f32.mrb[0].mxu0
    %v219 = vadd.f32 %v99, %v218
    %v220 = vpop.f32.mrb[0].mxu0
    %v221 = vadd.f32 %v95, %v220
    %v222 = vpop.f32.mrb[0].mxu0
    %v223 = vadd.f32 %v99, %v222
    %224 = vmatprep.mubr.bf16.mxu0 0
    %225 = vmatmul.mubr.bf16.gmra.mrb[0].mxu0 %v152
    %v226 = vpop.f32.mrb[0].mxu0
    %v227 = vadd.f32 %v95, %v226
    %v228 = vpop.f32.mrb[0].mxu0
    %v229 = vadd.f32 %v99, %v228
    %v230 = vpop.f32.mrb[0].mxu0
    %v231 = vadd.f32 %v95, %v230
    %v232 = vpop.f32.mrb[0].mxu0
    %v233 = vadd.f32 %v99, %v232
    %234 = vmatprep.mubr.bf16.mxu0 0
    %235 = vmatmul.mubr.bf16.gmra.mrb[0].mxu0 %v155
    %v236 = vpop.f32.mrb[0].mxu0
    %v237 = vadd.f32 %v95, %v236
    %v238 = vpop.f32.mrb[0].mxu0
    %v239 = vadd.f32 %v99, %v238
    %v240 = vpop.f32.mrb[0].mxu0
    %v241 = vadd.f32 %v95, %v240
    %v242 = vpop.f32.mrb[0].mxu0
    %v243 = vadd.f32 %v99, %v242
    %244 = vmatprep.mubr.bf16.mxu0 0
    %245 = vmatmul.mubr.bf16.gmra.mrb[0].mxu0 %v158
    %v246 = vpop.f32.mrb[0].mxu0
    %v247 = vadd.f32 %v95, %v246
    %v248 = vpop.f32.mrb[0].mxu0
    %v249 = vadd.f32 %v99, %v248
    %v250 = vpop.f32.mrb[0].mxu0
    %v251 = vadd.f32 %v95, %v250
    %v252 = vpop.f32.mrb[0].mxu0
    %v253 = vadd.f32 %v99, %v252
    %254 = vmatprep.mubr.bf16.mxu0 0
    %255 = vmatmul.mubr.bf16.gmra.mrb[0].mxu0 %v161
    %v256 = vpop.f32.mrb[0].mxu0
    %v257 = vadd.f32 %v95, %v256
    %v258 = vpop.f32.mrb[0].mxu0
    %v259 = vadd.f32 %v99, %v258
    %v260 = vpop.f32.mrb[0].mxu0
    %v261 = vadd.f32 %v95, %v260
    %v262 = vpop.f32.mrb[0].mxu0
    %v263 = vadd.f32 %v99, %v262
    %264 = vmatprep.mubr.bf16.mxu0 0
    %265 = vmatmul.mubr.bf16.gmra.mrb[0].mxu0 %v164
    %v266 = vpop.f32.mrb[0].mxu0
    %v267 = vadd.f32 %v95, %v266
    %v268 = vpop.f32.mrb[0].mxu0
    %v269 = vadd.f32 %v99, %v268
    %v270 = vpop.f32.mrb[0].mxu0
    %v271 = vadd.f32 %v95, %v270
    %v272 = vpop.f32.mrb[0].mxu0
    %v273 = vadd.f32 %v99, %v272
    %274 = vmatprep.mubr.bf16.mxu0 0
    %275 = vmatmul.mubr.bf16.gmra.mrb[0].mxu0 %v167
    %v276 = vpop.f32.mrb[0].mxu0
    %v277 = vadd.f32 %v95, %v276
    %v278 = vpop.f32.mrb[0].mxu0
    %v279 = vadd.f32 %v99, %v278
    %v280 = vpop.f32.mrb[0].mxu0
    %v281 = vadd.f32 %v95, %v280
    %v282 = vpop.f32.mrb[0].mxu0
    %v283 = vadd.f32 %v99, %v282
    %284 = vmatprep.mubr.bf16.mxu0 0
    %285 = vmatmul.mubr.bf16.gmra.mrb[0].mxu0 %v170
    %v286 = vpop.f32.mrb[0].mxu0
    %v287 = vadd.f32 %v95, %v286
    %v288 = vpop.f32.mrb[0].mxu0
    %v289 = vadd.f32 %v99, %v288
    %v290 = vpop.f32.mrb[0].mxu0
    %v291 = vadd.f32 %v95, %v290
    %v292 = vpop.f32.mrb[0].mxu0
    %v293 = vadd.f32 %v99, %v292
    %294 = vdwg.mxu0
    %v295 = vld [vmem:[%s3] sm:$0xff]
    %v296 = vld [vmem:[%s3 + $0x8] sm:$0xff]
    %v297 = vld [vmem:[%s3 + $0x10] sm:$0xff]
    %v298 = vld [vmem:[%s3 + $0x18] sm:$0xff]
    %v299 = vld [vmem:[%s3 + $0x20] sm:$0xff]
    %v300 = vld [vmem:[%s3 + $0x28] sm:$0xff]
    %v301 = vld [vmem:[%s3 + $0x30] sm:$0xff]
    %v302 = vld [vmem:[%s3 + $0x38] sm:$0xff]
    %v303 = vld [vmem:[#allocation5] sm:$0xff]
    %v304 = vld [vmem:[#allocation5 + $0x8] sm:$0xff]
    %v305 = vld [vmem:[#allocation5 + $0x10] sm:$0xff]
    %v306 = vld [vmem:[#allocation5 + $0x18] sm:$0xff]
    %v307 = vld [vmem:[#allocation5 + $0x20] sm:$0xff]
    %v308 = vld [vmem:[#allocation5 + $0x28] sm:$0xff]
    %v309 = vld [vmem:[#allocation5 + $0x30] sm:$0xff]
    %v310 = vld [vmem:[#allocation5 + $0x38] sm:$0xff]
    %v311 = vld [vmem:[#allocation7] sm:$0xff]
    %v312 = vld [vmem:[#allocation7 + $0x8] sm:$0xff]
    %v313 = vld [vmem:[#allocation7 + $0x10] sm:$0xff]
    %v314 = vld [vmem:[#allocation7 + $0x18] sm:$0xff]
    %v315 = vld [vmem:[#allocation7 + $0x20] sm:$0xff]
    %v316 = vld [vmem:[#allocation7 + $0x28] sm:$0xff]
    %v317 = vld [vmem:[#allocation7 + $0x30] sm:$0xff]
    %v318 = vld [vmem:[#allocation7 + $0x38] sm:$0xff]
    %v319 = vld [vmem:[%s6] sm:$0x3]
    %v321 = vlaneseq
    %v322 = vshrl.u32 %v321, 7
    %v323 = vsub.s32 0, %v322
    %v324 = vrot.slane %v319, %v323
    %v325 = vlaneseq
    %v326 = vshrl.u32 %v325, 7
    %v327 = vsub.s32 1, %v326
    %v328 = vrot.slane %v319, %v327
    %v339 = vunpack.c.l.b16 %v295
    %v340 = vunpack.c.h.b16 %v295
    %v341 = vunpack.c.l.b16 %v296
    %v342 = vunpack.c.h.b16 %v296
    %v343 = vunpack.c.l.b16 %v297
    %v344 = vunpack.c.h.b16 %v297
    %v345 = vunpack.c.l.b16 %v298
    %v346 = vunpack.c.h.b16 %v298
    %v347 = vunpack.c.l.b16 %v299
    %v348 = vunpack.c.h.b16 %v299
    %v349 = vunpack.c.l.b16 %v300
    %v350 = vunpack.c.h.b16 %v300
    %v351 = vunpack.c.l.b16 %v301
    %v352 = vunpack.c.h.b16 %v301
    %v353 = vunpack.c.l.b16 %v302
    %v354 = vunpack.c.h.b16 %v302
    %v355 = vpack.c.b16 %v341, %v339
    %v356 = vpack.c.b16 %v342, %v340
    %v357 = vpack.c.b16 %v345, %v343
    %v358 = vpack.c.b16 %v346, %v344
    %v359 = vpack.c.b16 %v349, %v347
    %v360 = vpack.c.b16 %v350, %v348
    %v361 = vpack.c.b16 %v353, %v351
    %v362 = vpack.c.b16 %v354, %v352
    %vm371 = vcmask 523264
    %v373 = vsel %vm371, 0, 0
    %375 = vmatprep.subr.bf16.mxu0 %v356
    %376 = vmatpush1.bf16.msra.mxu0 %v355
    %377 = vmatprep.subr.bf16.mxu0 %v358
    %378 = vmatpush1.bf16.msra.mxu0 %v357
    %379 = vmatprep.subr.bf16.mxu0 %v360
    %380 = vmatpush1.bf16.msra.mxu0 %v359
    %381 = vmatprep.subr.bf16.mxu0 %v362
    %382 = vmatpush1.bf16.msra.mxu0 %v361
    %383 = vmatprep.subr.bf16.mxu0 0
    %384 = vmatpush1.bf16.msra.mxu0 0
    %385 = vmatprep.subr.bf16.mxu0 0
    %386 = vmatpush1.bf16.msra.mxu0 0
    %387 = vmatprep.subr.bf16.mxu0 0
    %388 = vmatpush1.bf16.msra.mxu0 0
    %389 = vmatprep.subr.bf16.mxu0 0
    %390 = vmatpush1.bf16.msra.mxu0 0
    %391 = vmatprep.subr.bf16.mxu0 0
    %392 = vmatpush1.bf16.msra.mxu0 0
    %393 = vmatprep.subr.bf16.mxu0 0
    %394 = vmatpush1.bf16.msra.mxu0 0
    %395 = vmatprep.subr.bf16.mxu0 0
    %396 = vmatpush1.bf16.msra.mxu0 0
    %397 = vmatprep.subr.bf16.mxu0 0
    %398 = vmatpush1.bf16.msra.mxu0 0
    %399 = vmatprep.subr.bf16.mxu0 0
    %400 = vmatpush1.bf16.msra.mxu0 0
    %401 = vmatprep.subr.bf16.mxu0 0
    %402 = vmatpush1.bf16.msra.mxu0 0
    %403 = vmatprep.subr.bf16.mxu0 0
    %404 = vmatpush1.bf16.msra.mxu0 0
    %405 = vmatprep.subr.bf16.mxu0 0
    %406 = vmatpush1.bf16.msra.mxu0 0
    %407 = vmatprep.mubr.bf16.mxu0 0
    %408 = vmatmul.mubr.bf16.gmra.mrb[0].mxu0 %v373
    %v409 = vpop.f32.mrb[0].mxu0
    %v410 = vadd.f32 0.0, %v409
    %v411 = vpop.f32.mrb[0].mxu0
    %v412 = vadd.f32 0.0, %v411
    %v413 = vpop.f32.mrb[0].mxu0
    %v414 = vadd.f32 0.0, %v413
    %v415 = vpop.f32.mrb[0].mxu0
    %v416 = vadd.f32 0.0, %v415
    %417 = vdwg.mxu0
    %v418 = vadd.f32 %v217, %v410
    %v419 = vadd.f32 %v219, %v412
    %v420 = vadd.f32 %v221, %v414
    %v421 = vadd.f32 %v223, %v416
    %v422 = vmul.f32 %v418, 0.5
    %v423 = vmul.f32 %v419, 0.5
    %v424 = vmul.f32 %v420, 0.5
    %v425 = vmul.f32 %v421, 0.5
    %v426 = vtanh.pop %v422
    %v427 = vtanh.pop %v423
    %v428 = vtanh.pop %v424
    %v429 = vtanh.pop %v425
    %v430 = vmul.f32 %v426, 0.5
    %v431 = vmul.f32 %v427, 0.5
    %v432 = vmul.f32 %v428, 0.5
    %v433 = vmul.f32 %v429, 0.5
    %v434 = vadd.f32 %v430, 0.5
    %v435 = vadd.f32 %v431, 0.5
    %v436 = vadd.f32 %v432, 0.5
    %v437 = vadd.f32 %v433, 0.5
    %v438 = vtanh.pop %v419
    %v439 = vtanh.pop %v421
    %v440 = vmul.f32 %v434, 0.0
    %v441 = vmul.f32 %v436, 0.0
    %444 = vrot.lane.b32.xlu0 %v438, 64
    %v445 = vpop.permute.xlu0 %444
    %446 = vrot.lane.b32.xlu0 %v439, 64
    %v447 = vpop.permute.xlu0 %446
    %v450 = vmul.f32 %v434, %v445
    %v451 = vmul.f32 %v436, %v447
    %454 = vrot.lane.b32.xlu0 %v450, 64
    %v455 = vpop.permute.xlu0 %454
    %456 = vrot.lane.b32.xlu0 %v451, 64
    %v457 = vpop.permute.xlu0 %456
    %v460 = vadd.f32 %v440, %v455
    %v461 = vadd.f32 %v441, %v457
    %v462 = vtanh.pop %v460
    %v463 = vtanh.pop %v461
    %466 = vrot.lane.b32.xlu0 %v462, 64
    %v467 = vpop.permute.xlu0 %466
    %468 = vrot.lane.b32.xlu0 %v463, 64
    %v469 = vpop.permute.xlu0 %468
    %v472 = vmul.f32 %v435, %v467
    %v473 = vmul.f32 %v437, %v469
    %v474 = vpack.c.bf16 %v473, %v472
    %v483 = vunpack.c.l.b16 %v303
    %v484 = vunpack.c.h.b16 %v303
    %v485 = vunpack.c.l.b16 %v304
    %v486 = vunpack.c.h.b16 %v304
    %v487 = vunpack.c.l.b16 %v305
    %v488 = vunpack.c.h.b16 %v305
    %v489 = vunpack.c.l.b16 %v306
    %v490 = vunpack.c.h.b16 %v306
    %v491 = vunpack.c.l.b16 %v307
    %v492 = vunpack.c.h.b16 %v307
    %v493 = vunpack.c.l.b16 %v308
    %v494 = vunpack.c.h.b16 %v308
    %v495 = vunpack.c.l.b16 %v309
    %v496 = vunpack.c.h.b16 %v309
    %v497 = vunpack.c.l.b16 %v310
    %v498 = vunpack.c.h.b16 %v310
    %v499 = vpack.c.b16 %v485, %v483
    %v500 = vpack.c.b16 %v486, %v484
    %v501 = vpack.c.b16 %v489, %v487
    %v502 = vpack.c.b16 %v490, %v488
    %v503 = vpack.c.b16 %v493, %v491
    %v504 = vpack.c.b16 %v494, %v492
    %v505 = vpack.c.b16 %v497, %v495
    %v506 = vpack.c.b16 %v498, %v496
    %v516 = vsel %vm371, %v474, 0
    %518 = vmatprep.subr.bf16.mxu0 %v500
    %519 = vmatpush1.bf16.msra.mxu0 %v499
    %520 = vmatprep.subr.bf16.mxu0 %v502
    %521 = vmatpush1.bf16.msra.mxu0 %v501
    %522 = vmatprep.subr.bf16.mxu0 %v504
    %523 = vmatpush1.bf16.msra.mxu0 %v503
    %524 = vmatprep.subr.bf16.mxu0 %v506
    %525 = vmatpush1.bf16.msra.mxu0 %v505
    %526 = vmatprep.subr.bf16.mxu0 0
    %527 = vmatpush1.bf16.msra.mxu0 0
    %528 = vmatprep.subr.bf16.mxu0 0
    %529 = vmatpush1.bf16.msra.mxu0 0
    %530 = vmatprep.subr.bf16.mxu0 0
    %531 = vmatpush1.bf16.msra.mxu0 0
    %532 = vmatprep.subr.bf16.mxu0 0
    %533 = vmatpush1.bf16.msra.mxu0 0
    %534 = vmatprep.subr.bf16.mxu0 0
    %535 = vmatpush1.bf16.msra.mxu0 0
    %536 = vmatprep.subr.bf16.mxu0 0
    %537 = vmatpush1.bf16.msra.mxu0 0
    %538 = vmatprep.subr.bf16.mxu0 0
    %539 = vmatpush1.bf16.msra.mxu0 0
    %540 = vmatprep.subr.bf16.mxu0 0
    %541 = vmatpush1.bf16.msra.mxu0 0
    %542 = vmatprep.subr.bf16.mxu0 0
    %543 = vmatpush1.bf16.msra.mxu0 0
    %544 = vmatprep.subr.bf16.mxu0 0
    %545 = vmatpush1.bf16.msra.mxu0 0
    %546 = vmatprep.subr.bf16.mxu0 0
    %547 = vmatpush1.bf16.msra.mxu0 0
    %548 = vmatprep.subr.bf16.mxu0 0
    %549 = vmatpush1.bf16.msra.mxu0 0
    %550 = vmatprep.mubr.bf16.mxu0 0
    %551 = vmatmul.mubr.bf16.gmra.mrb[0].mxu0 %v516
    %v552 = vpop.f32.mrb[0].mxu0
    %v553 = vadd.f32 0.0, %v552
    %v554 = vpop.f32.mrb[0].mxu0
    %v555 = vadd.f32 0.0, %v554
    %v556 = vpop.f32.mrb[0].mxu0
    %v557 = vadd.f32 0.0, %v556
    %v558 = vpop.f32.mrb[0].mxu0
    %v559 = vadd.f32 0.0, %v558
    %560 = vdwg.mxu0
    %v569 = vunpack.c.l.b16 %v311
    %v570 = vunpack.c.h.b16 %v311
    %v571 = vunpack.c.l.b16 %v312
    %v572 = vunpack.c.h.b16 %v312
    %v573 = vunpack.c.l.b16 %v313
    %v574 = vunpack.c.h.b16 %v313
    %v575 = vunpack.c.l.b16 %v314
    %v576 = vunpack.c.h.b16 %v314
    %v577 = vunpack.c.l.b16 %v315
    %v578 = vunpack.c.h.b16 %v315
    %v579 = vunpack.c.l.b16 %v316
    %v580 = vunpack.c.h.b16 %v316
    %v581 = vunpack.c.l.b16 %v317
    %v582 = vunpack.c.h.b16 %v317
    %v583 = vunpack.c.l.b16 %v318
    %v584 = vunpack.c.h.b16 %v318
    %v585 = vpack.c.b16 %v571, %v569
    %v586 = vpack.c.b16 %v572, %v570
    %v587 = vpack.c.b16 %v575, %v573
    %v588 = vpack.c.b16 %v576, %v574
    %v589 = vpack.c.b16 %v579, %v577
    %v590 = vpack.c.b16 %v580, %v578
    %v591 = vpack.c.b16 %v583, %v581
    %v592 = vpack.c.b16 %v584, %v582
    %601 = vmatprep.subr.bf16.mxu0 %v586
    %602 = vmatpush1.bf16.msra.mxu0 %v585
    %603 = vmatprep.subr.bf16.mxu0 %v588
    %604 = vmatpush1.bf16.msra.mxu0 %v587
    %605 = vmatprep.subr.bf16.mxu0 %v590
    %606 = vmatpush1.bf16.msra.mxu0 %v589
    %607 = vmatprep.subr.bf16.mxu0 %v592
    %608 = vmatpush1.bf16.msra.mxu0 %v591
    %609 = vmatprep.subr.bf16.mxu0 0
    %610 = vmatpush1.bf16.msra.mxu0 0
    %611 = vmatprep.subr.bf16.mxu0 0
    %612 = vmatpush1.bf16.msra.mxu0 0
    %613 = vmatprep.subr.bf16.mxu0 0
    %614 = vmatpush1.bf16.msra.mxu0 0
    %615 = vmatprep.subr.bf16.mxu0 0
    %616 = vmatpush1.bf16.msra.mxu0 0
    %617 = vmatprep.subr.bf16.mxu0 0
    %618 = vmatpush1.bf16.msra.mxu0 0
    %619 = vmatprep.subr.bf16.mxu0 0
    %620 = vmatpush1.bf16.msra.mxu0 0
    %621 = vmatprep.subr.bf16.mxu0 0
    %622 = vmatpush1.bf16.msra.mxu0 0
    %623 = vmatprep.subr.bf16.mxu0 0
    %624 = vmatpush1.bf16.msra.mxu0 0
    %625 = vmatprep.subr.bf16.mxu0 0
    %626 = vmatpush1.bf16.msra.mxu0 0
    %627 = vmatprep.subr.bf16.mxu0 0
    %628 = vmatpush1.bf16.msra.mxu0 0
    %629 = vmatprep.subr.bf16.mxu0 0
    %630 = vmatpush1.bf16.msra.mxu0 0
    %631 = vmatprep.subr.bf16.mxu0 0
    %632 = vmatpush1.bf16.msra.mxu0 0
    %633 = vmatprep.mubr.bf16.mxu0 0
    %634 = vmatmul.mubr.bf16.gmra.mrb[0].mxu0 %v373
    %v635 = vpop.f32.mrb[0].mxu0
    %v636 = vadd.f32 %v553, %v635
    %v637 = vpop.f32.mrb[0].mxu0
    %v638 = vadd.f32 %v555, %v637
    %v639 = vpop.f32.mrb[0].mxu0
    %v640 = vadd.f32 %v557, %v639
    %v641 = vpop.f32.mrb[0].mxu0
    %v642 = vadd.f32 %v559, %v641
    %643 = vdwg.mxu0
    %v644 = vadd.f32 %v636, %v324
    %v645 = vadd.f32 %v638, %v328
    %v646 = vadd.f32 %v640, %v324
    %v647 = vadd.f32 %v642, %v328
    %v648 = vmul.f32 %v644, 0.5
    %v649 = vmul.f32 %v645, 0.5
    %v650 = vmul.f32 %v646, 0.5
    %v651 = vmul.f32 %v647, 0.5
    %v652 = vtanh.pop %v648
    %v653 = vtanh.pop %v649
    %v654 = vtanh.pop %v650
    %v655 = vtanh.pop %v651
    %v656 = vmul.f32 %v652, 0.5
    %v657 = vmul.f32 %v653, 0.5
    %v658 = vmul.f32 %v654, 0.5
    %v659 = vmul.f32 %v655, 0.5
    %v660 = vadd.f32 %v656, 0.5
    %v661 = vadd.f32 %v657, 0.5
    %v662 = vadd.f32 %v658, 0.5
    %v663 = vadd.f32 %v659, 0.5
    %v664 = vtanh.pop %v645
    %v665 = vtanh.pop %v647
    %v666 = vmul.f32 %v660, 0.0
    %v667 = vmul.f32 %v662, 0.0
    %670 = vrot.lane.b32.xlu0 %v664, 64
    %v671 = vpop.permute.xlu0 %670
    %672 = vrot.lane.b32.xlu0 %v665, 64
    %v673 = vpop.permute.xlu0 %672
    %v676 = vmul.f32 %v660, %v671
    %v677 = vmul.f32 %v662, %v673
    %680 = vrot.lane.b32.xlu0 %v676, 64
    %v681 = vpop.permute.xlu0 %680
    %682 = vrot.lane.b32.xlu0 %v677, 64
    %v683 = vpop.permute.xlu0 %682
    %v686 = vadd.f32 %v666, %v681
    %v687 = vadd.f32 %v667, %v683
    %v688 = vtanh.pop %v686
    %v689 = vtanh.pop %v687
    %692 = vrot.lane.b32.xlu0 %v688, 64
    %v693 = vpop.permute.xlu0 %692
    %694 = vrot.lane.b32.xlu0 %v689, 64
    %v695 = vpop.permute.xlu0 %694
    %v698 = vmul.f32 %v661, %v693
    %v699 = vmul.f32 %v663, %v695
    %v700 = vpack.c.bf16 %v699, %v698
    %701 = vmatprep.subr.bf16.mxu0 %v356
    %702 = vmatpush1.bf16.msra.mxu0 %v355
    %703 = vmatprep.subr.bf16.mxu0 %v358
    %704 = vmatpush1.bf16.msra.mxu0 %v357
    %705 = vmatprep.subr.bf16.mxu0 %v360
    %706 = vmatpush1.bf16.msra.mxu0 %v359
    %707 = vmatprep.subr.bf16.mxu0 %v362
    %708 = vmatpush1.bf16.msra.mxu0 %v361
    %709 = vmatprep.subr.bf16.mxu0 0
    %710 = vmatpush1.bf16.msra.mxu0 0
    %711 = vmatprep.subr.bf16.mxu0 0
    %712 = vmatpush1.bf16.msra.mxu0 0
    %713 = vmatprep.subr.bf16.mxu0 0
    %714 = vmatpush1.bf16.msra.mxu0 0
    %715 = vmatprep.subr.bf16.mxu0 0
    %716 = vmatpush1.bf16.msra.mxu0 0
    %717 = vmatprep.subr.bf16.mxu0 0
    %718 = vmatpush1.bf16.msra.mxu0 0
    %719 = vmatprep.subr.bf16.mxu0 0
    %720 = vmatpush1.bf16.msra.mxu0 0
    %721 = vmatprep.subr.bf16.mxu0 0
    %722 = vmatpush1.bf16.msra.mxu0 0
    %723 = vmatprep.subr.bf16.mxu0 0
    %724 = vmatpush1.bf16.msra.mxu0 0
    %725 = vmatprep.subr.bf16.mxu0 0
    %726 = vmatpush1.bf16.msra.mxu0 0
    %727 = vmatprep.subr.bf16.mxu0 0
    %728 = vmatpush1.bf16.msra.mxu0 0
    %729 = vmatprep.subr.bf16.mxu0 0
    %730 = vmatpush1.bf16.msra.mxu0 0
    %731 = vmatprep.subr.bf16.mxu0 0
    %732 = vmatpush1.bf16.msra.mxu0 0
    %733 = vmatprep.mubr.bf16.mxu0 0
    %734 = vmatmul.mubr.bf16.gmra.mrb[0].mxu0 %v516
    %v735 = vpop.f32.mrb[0].mxu0
    %v736 = vadd.f32 0.0, %v735
    %v737 = vpop.f32.mrb[0].mxu0
    %v738 = vadd.f32 0.0, %v737
    %v739 = vpop.f32.mrb[0].mxu0
    %v740 = vadd.f32 0.0, %v739
    %v741 = vpop.f32.mrb[0].mxu0
    %v742 = vadd.f32 0.0, %v741
    %743 = vdwg.mxu0
    %v744 = vadd.f32 %v227, %v736
    %v745 = vadd.f32 %v229, %v738
    %v746 = vadd.f32 %v231, %v740
    %v747 = vadd.f32 %v233, %v742
    %v748 = vmul.f32 %v744, 0.5
    %v749 = vmul.f32 %v745, 0.5
    %v750 = vmul.f32 %v746, 0.5
    %v751 = vmul.f32 %v747, 0.5
    %v752 = vtanh.pop %v748
    %v753 = vtanh.pop %v749
    %v754 = vtanh.pop %v750
    %v755 = vtanh.pop %v751
    %v756 = vmul.f32 %v752, 0.5
    %v757 = vmul.f32 %v753, 0.5
    %v758 = vmul.f32 %v754, 0.5
    %v759 = vmul.f32 %v755, 0.5
    %v760 = vadd.f32 %v756, 0.5
    %v761 = vadd.f32 %v757, 0.5
    %v762 = vadd.f32 %v758, 0.5
    %v763 = vadd.f32 %v759, 0.5
    %v764 = vtanh.pop %v745
    %v765 = vtanh.pop %v747
    %v766 = vmul.f32 %v760, %v460
    %v767 = vmul.f32 %v762, %v461
    %770 = vrot.lane.b32.xlu0 %v764, 64
    %v771 = vpop.permute.xlu0 %770
    %772 = vrot.lane.b32.xlu0 %v765, 64
    %v773 = vpop.permute.xlu0 %772
    %v776 = vmul.f32 %v760, %v771
    %v777 = vmul.f32 %v762, %v773
    %780 = vrot.lane.b32.xlu0 %v776, 64
    %v781 = vpop.permute.xlu0 %780
    %782 = vrot.lane.b32.xlu0 %v777, 64
    %v783 = vpop.permute.xlu0 %782
    %v786 = vadd.f32 %v766, %v781
    %v787 = vadd.f32 %v767, %v783
    %v788 = vtanh.pop %v786
    %v789 = vtanh.pop %v787
    %792 = vrot.lane.b32.xlu0 %v788, 64
    %v793 = vpop.permute.xlu0 %792
    %794 = vrot.lane.b32.xlu0 %v789, 64
    %v795 = vpop.permute.xlu0 %794
    %v798 = vmul.f32 %v761, %v793
    %v799 = vmul.f32 %v763, %v795
    %v800 = vpack.c.bf16 %v799, %v798
    %v802 = vsel %vm371, %v800, 0
    %804 = vmatprep.subr.bf16.mxu0 %v500
    %805 = vmatpush1.bf16.msra.mxu0 %v499
    %806 = vmatprep.subr.bf16.mxu0 %v502
    %807 = vmatpush1.bf16.msra.mxu0 %v501
    %808 = vmatprep.subr.bf16.mxu0 %v504
    %809 = vmatpush1.bf16.msra.mxu0 %v503
    %810 = vmatprep.subr.bf16.mxu0 %v506
    %811 = vmatpush1.bf16.msra.mxu0 %v505
    %812 = vmatprep.subr.bf16.mxu0 0
    %813 = vmatpush1.bf16.msra.mxu0 0
    %814 = vmatprep.subr.bf16.mxu0 0
    %815 = vmatpush1.bf16.msra.mxu0 0
    %816 = vmatprep.subr.bf16.mxu0 0
    %817 = vmatpush1.bf16.msra.mxu0 0
    %818 = vmatprep.subr.bf16.mxu0 0
    %819 = vmatpush1.bf16.msra.mxu0 0
    %820 = vmatprep.subr.bf16.mxu0 0
    %821 = vmatpush1.bf16.msra.mxu0 0
    %822 = vmatprep.subr.bf16.mxu0 0
    %823 = vmatpush1.bf16.msra.mxu0 0
    %824 = vmatprep.subr.bf16.mxu0 0
    %825 = vmatpush1.bf16.msra.mxu0 0
    %826 = vmatprep.subr.bf16.mxu0 0
    %827 = vmatpush1.bf16.msra.mxu0 0
    %828 = vmatprep.subr.bf16.mxu0 0
    %829 = vmatpush1.bf16.msra.mxu0 0
    %830 = vmatprep.subr.bf16.mxu0 0
    %831 = vmatpush1.bf16.msra.mxu0 0
    %832 = vmatprep.subr.bf16.mxu0 0
    %833 = vmatpush1.bf16.msra.mxu0 0
    %834 = vmatprep.subr.bf16.mxu0 0
    %835 = vmatpush1.bf16.msra.mxu0 0
    %836 = vmatprep.mubr.bf16.mxu0 0
    %837 = vmatmul.mubr.bf16.gmra.mrb[0].mxu0 %v802
    %v838 = vpop.f32.mrb[0].mxu0
    %v839 = vadd.f32 0.0, %v838
    %v840 = vpop.f32.mrb[0].mxu0
    %v841 = vadd.f32 0.0, %v840
    %v842 = vpop.f32.mrb[0].mxu0
    %v843 = vadd.f32 0.0, %v842
    %v844 = vpop.f32.mrb[0].mxu0
    %v845 = vadd.f32 0.0, %v844
    %846 = vdwg.mxu0
    %v848 = vsel %vm371, %v700, 0
    %850 = vmatprep.subr.bf16.mxu0 %v586
    %851 = vmatpush1.bf16.msra.mxu0 %v585
    %852 = vmatprep.subr.bf16.mxu0 %v588
    %853 = vmatpush1.bf16.msra.mxu0 %v587
    %854 = vmatprep.subr.bf16.mxu0 %v590
    %855 = vmatpush1.bf16.msra.mxu0 %v589
    %856 = vmatprep.subr.bf16.mxu0 %v592
    %857 = vmatpush1.bf16.msra.mxu0 %v591
    %858 = vmatprep.subr.bf16.mxu0 0
    %859 = vmatpush1.bf16.msra.mxu0 0
    %860 = vmatprep.subr.bf16.mxu0 0
    %861 = vmatpush1.bf16.msra.mxu0 0
    %862 = vmatprep.subr.bf16.mxu0 0
    %863 = vmatpush1.bf16.msra.mxu0 0
    %864 = vmatprep.subr.bf16.mxu0 0
    %865 = vmatpush1.bf16.msra.mxu0 0
    %866 = vmatprep.subr.bf16.mxu0 0
    %867 = vmatpush1.bf16.msra.mxu0 0
    %868 = vmatprep.subr.bf16.mxu0 0
    %869 = vmatpush1.bf16.msra.mxu0 0
    %870 = vmatprep.subr.bf16.mxu0 0
    %871 = vmatpush1.bf16.msra.mxu0 0
    %872 = vmatprep.subr.bf16.mxu0 0
    %873 = vmatpush1.bf16.msra.mxu0 0
    %874 = vmatprep.subr.bf16.mxu0 0
    %875 = vmatpush1.bf16.msra.mxu0 0
    %876 = vmatprep.subr.bf16.mxu0 0
    %877 = vmatpush1.bf16.msra.mxu0 0
    %878 = vmatprep.subr.bf16.mxu0 0
    %879 = vmatpush1.bf16.msra.mxu0 0
    %880 = vmatprep.subr.bf16.mxu0 0
    %881 = vmatpush1.bf16.msra.mxu0 0
    %882 = vmatprep.mubr.bf16.mxu0 0
    %883 = vmatmul.mubr.bf16.gmra.mrb[0].mxu0 %v848
    %v884 = vpop.f32.mrb[0].mxu0
    %v885 = vadd.f32 %v839, %v884
    %v886 = vpop.f32.mrb[0].mxu0
    %v887 = vadd.f32 %v841, %v886
    %v888 = vpop.f32.mrb[0].mxu0
    %v889 = vadd.f32 %v843, %v888
    %v890 = vpop.f32.mrb[0].mxu0
    %v891 = vadd.f32 %v845, %v890
    %892 = vdwg.mxu0
    %v893 = vadd.f32 %v885, %v324
    %v894 = vadd.f32 %v887, %v328
    %v895 = vadd.f32 %v889, %v324
    %v896 = vadd.f32 %v891, %v328
    %v897 = vmul.f32 %v893, 0.5
    %v898 = vmul.f32 %v894, 0.5
    %v899 = vmul.f32 %v895, 0.5
    %v900 = vmul.f32 %v896, 0.5
    %v901 = vtanh.pop %v897
    %v902 = vtanh.pop %v898
    %v903 = vtanh.pop %v899
    %v904 = vtanh.pop %v900
    %v905 = vmul.f32 %v901, 0.5
    %v906 = vmul.f32 %v902, 0.5
    %v907 = vmul.f32 %v903, 0.5
    %v908 = vmul.f32 %v904, 0.5
    %v909 = vadd.f32 %v905, 0.5
    %v910 = vadd.f32 %v906, 0.5
    %v911 = vadd.f32 %v907, 0.5
    %v912 = vadd.f32 %v908, 0.5
    %v913 = vtanh.pop %v894
    %v914 = vtanh.pop %v896
    %v915 = vmul.f32 %v909, %v686
    %v916 = vmul.f32 %v911, %v687
    %919 = vrot.lane.b32.xlu0 %v913, 64
    %v920 = vpop.permute.xlu0 %919
    %921 = vrot.lane.b32.xlu0 %v914, 64
    %v922 = vpop.permute.xlu0 %921
    %v925 = vmul.f32 %v909, %v920
    %v926 = vmul.f32 %v911, %v922
    %929 = vrot.lane.b32.xlu0 %v925, 64
    %v930 = vpop.permute.xlu0 %929
    %931 = vrot.lane.b32.xlu0 %v926, 64
    %v932 = vpop.permute.xlu0 %931
    %v935 = vadd.f32 %v915, %v930
    %v936 = vadd.f32 %v916, %v932
    %v937 = vtanh.pop %v935
    %v938 = vtanh.pop %v936
    %941 = vrot.lane.b32.xlu0 %v937, 64
    %v942 = vpop.permute.xlu0 %941
    %943 = vrot.lane.b32.xlu0 %v938, 64
    %v944 = vpop.permute.xlu0 %943
    %v947 = vmul.f32 %v910, %v942
    %v948 = vmul.f32 %v912, %v944
    %v949 = vpack.c.bf16 %v948, %v947
    %950 = vmatprep.subr.bf16.mxu0 %v356
    %951 = vmatpush1.bf16.msra.mxu0 %v355
    %952 = vmatprep.subr.bf16.mxu0 %v358
    %953 = vmatpush1.bf16.msra.mxu0 %v357
    %954 = vmatprep.subr.bf16.mxu0 %v360
    %955 = vmatpush1.bf16.msra.mxu0 %v359
    %956 = vmatprep.subr.bf16.mxu0 %v362
    %957 = vmatpush1.bf16.msra.mxu0 %v361
    %958 = vmatprep.subr.bf16.mxu0 0
    %959 = vmatpush1.bf16.msra.mxu0 0
    %960 = vmatprep.subr.bf16.mxu0 0
    %961 = vmatpush1.bf16.msra.mxu0 0
    %962 = vmatprep.subr.bf16.mxu0 0
    %963 = vmatpush1.bf16.msra.mxu0 0
    %964 = vmatprep.subr.bf16.mxu0 0
    %965 = vmatpush1.bf16.msra.mxu0 0
    %966 = vmatprep.subr.bf16.mxu0 0
    %967 = vmatpush1.bf16.msra.mxu0 0
    %968 = vmatprep.subr.bf16.mxu0 0
    %969 = vmatpush1.bf16.msra.mxu0 0
    %970 = vmatprep.subr.bf16.mxu0 0
    %971 = vmatpush1.bf16.msra.mxu0 0
    %972 = vmatprep.subr.bf16.mxu0 0
    %973 = vmatpush1.bf16.msra.mxu0 0
    %974 = vmatprep.subr.bf16.mxu0 0
    %975 = vmatpush1.bf16.msra.mxu0 0
    %976 = vmatprep.subr.bf16.mxu0 0
    %977 = vmatpush1.bf16.msra.mxu0 0
    %978 = vmatprep.subr.bf16.mxu0 0
    %979 = vmatpush1.bf16.msra.mxu0 0
    %980 = vmatprep.subr.bf16.mxu0 0
    %981 = vmatpush1.bf16.msra.mxu0 0
    %982 = vmatprep.mubr.bf16.mxu0 0
    %983 = vmatmul.mubr.bf16.gmra.mrb[0].mxu0 %v802
    %v984 = vpop.f32.mrb[0].mxu0
    %v985 = vadd.f32 0.0, %v984
    %v986 = vpop.f32.mrb[0].mxu0
    %v987 = vadd.f32 0.0, %v986
    %v988 = vpop.f32.mrb[0].mxu0
    %v989 = vadd.f32 0.0, %v988
    %v990 = vpop.f32.mrb[0].mxu0
    %v991 = vadd.f32 0.0, %v990
    %992 = vdwg.mxu0
    %v993 = vadd.f32 %v237, %v985
    %v994 = vadd.f32 %v239, %v987
    %v995 = vadd.f32 %v241, %v989
    %v996 = vadd.f32 %v243, %v991
    %v997 = vmul.f32 %v993, 0.5
    %v998 = vmul.f32 %v994, 0.5
    %v999 = vmul.f32 %v995, 0.5
    %v1000 = vmul.f32 %v996, 0.5
    %v1001 = vtanh.pop %v997
    %v1002 = vtanh.pop %v998
    %v1003 = vtanh.pop %v999
    %v1004 = vtanh.pop %v1000
    %v1005 = vmul.f32 %v1001, 0.5
    %v1006 = vmul.f32 %v1002, 0.5
    %v1007 = vmul.f32 %v1003, 0.5
    %v1008 = vmul.f32 %v1004, 0.5
    %v1009 = vadd.f32 %v1005, 0.5
    %v1010 = vadd.f32 %v1006, 0.5
    %v1011 = vadd.f32 %v1007, 0.5
    %v1012 = vadd.f32 %v1008, 0.5
    %v1013 = vtanh.pop %v994
    %v1014 = vtanh.pop %v996
    %v1015 = vmul.f32 %v1009, %v786
    %v1016 = vmul.f32 %v1011, %v787
    %1019 = vrot.lane.b32.xlu0 %v1013, 64
    %v1020 = vpop.permute.xlu0 %1019
    %1021 = vrot.lane.b32.xlu0 %v1014, 64
    %v1022 = vpop.permute.xlu0 %1021
    %v1025 = vmul.f32 %v1009, %v1020
    %v1026 = vmul.f32 %v1011, %v1022
    %1029 = vrot.lane.b32.xlu0 %v1025, 64
    %v1030 = vpop.permute.xlu0 %1029
    %1031 = vrot.lane.b32.xlu0 %v1026, 64
    %v1032 = vpop.permute.xlu0 %1031
    %v1035 = vadd.f32 %v1015, %v1030
    %v1036 = vadd.f32 %v1016, %v1032
    %v1037 = vtanh.pop %v1035
    %v1038 = vtanh.pop %v1036
    %1041 = vrot.lane.b32.xlu0 %v1037, 64
    %v1042 = vpop.permute.xlu0 %1041
    %1043 = vrot.lane.b32.xlu0 %v1038, 64
    %v1044 = vpop.permute.xlu0 %1043
    %v1047 = vmul.f32 %v1010, %v1042
    %v1048 = vmul.f32 %v1012, %v1044
    %v1049 = vpack.c.bf16 %v1048, %v1047
    %v1051 = vsel %vm371, %v1049, 0
    %1053 = vmatprep.subr.bf16.mxu0 %v500
    %1054 = vmatpush1.bf16.msra.mxu0 %v499
    %1055 = vmatprep.subr.bf16.mxu0 %v502
    %1056 = vmatpush1.bf16.msra.mxu0 %v501
    %1057 = vmatprep.subr.bf16.mxu0 %v504
    %1058 = vmatpush1.bf16.msra.mxu0 %v503
    %1059 = vmatprep.subr.bf16.mxu0 %v506
    %1060 = vmatpush1.bf16.msra.mxu0 %v505
    %1061 = vmatprep.subr.bf16.mxu0 0
    %1062 = vmatpush1.bf16.msra.mxu0 0
    %1063 = vmatprep.subr.bf16.mxu0 0
    %1064 = vmatpush1.bf16.msra.mxu0 0
    %1065 = vmatprep.subr.bf16.mxu0 0
    %1066 = vmatpush1.bf16.msra.mxu0 0
    %1067 = vmatprep.subr.bf16.mxu0 0
    %1068 = vmatpush1.bf16.msra.mxu0 0
    %1069 = vmatprep.subr.bf16.mxu0 0
    %1070 = vmatpush1.bf16.msra.mxu0 0
    %1071 = vmatprep.subr.bf16.mxu0 0
    %1072 = vmatpush1.bf16.msra.mxu0 0
    %1073 = vmatprep.subr.bf16.mxu0 0
    %1074 = vmatpush1.bf16.msra.mxu0 0
    %1075 = vmatprep.subr.bf16.mxu0 0
    %1076 = vmatpush1.bf16.msra.mxu0 0
    %1077 = vmatprep.subr.bf16.mxu0 0
    %1078 = vmatpush1.bf16.msra.mxu0 0
    %1079 = vmatprep.subr.bf16.mxu0 0
    %1080 = vmatpush1.bf16.msra.mxu0 0
    %1081 = vmatprep.subr.bf16.mxu0 0
    %1082 = vmatpush1.bf16.msra.mxu0 0
    %1083 = vmatprep.subr.bf16.mxu0 0
    %1084 = vmatpush1.bf16.msra.mxu0 0
    %1085 = vmatprep.mubr.bf16.mxu0 0
    %1086 = vmatmul.mubr.bf16.gmra.mrb[0].mxu0 %v1051
    %v1087 = vpop.f32.mrb[0].mxu0
    %v1088 = vadd.f32 0.0, %v1087
    %v1089 = vpop.f32.mrb[0].mxu0
    %v1090 = vadd.f32 0.0, %v1089
    %v1091 = vpop.f32.mrb[0].mxu0
    %v1092 = vadd.f32 0.0, %v1091
    %v1093 = vpop.f32.mrb[0].mxu0
    %v1094 = vadd.f32 0.0, %v1093
    %1095 = vdwg.mxu0
    %v1097 = vsel %vm371, %v949, 0
    %1099 = vmatprep.subr.bf16.mxu0 %v586
    %1100 = vmatpush1.bf16.msra.mxu0 %v585
    %1101 = vmatprep.subr.bf16.mxu0 %v588
    %1102 = vmatpush1.bf16.msra.mxu0 %v587
    %1103 = vmatprep.subr.bf16.mxu0 %v590
    %1104 = vmatpush1.bf16.msra.mxu0 %v589
    %1105 = vmatprep.subr.bf16.mxu0 %v592
    %1106 = vmatpush1.bf16.msra.mxu0 %v591
    %1107 = vmatprep.subr.bf16.mxu0 0
    %1108 = vmatpush1.bf16.msra.mxu0 0
    %1109 = vmatprep.subr.bf16.mxu0 0
    %1110 = vmatpush1.bf16.msra.mxu0 0
    %1111 = vmatprep.subr.bf16.mxu0 0
    %1112 = vmatpush1.bf16.msra.mxu0 0
    %1113 = vmatprep.subr.bf16.mxu0 0
    %1114 = vmatpush1.bf16.msra.mxu0 0
    %1115 = vmatprep.subr.bf16.mxu0 0
    %1116 = vmatpush1.bf16.msra.mxu0 0
    %1117 = vmatprep.subr.bf16.mxu0 0
    %1118 = vmatpush1.bf16.msra.mxu0 0
    %1119 = vmatprep.subr.bf16.mxu0 0
    %1120 = vmatpush1.bf16.msra.mxu0 0
    %1121 = vmatprep.subr.bf16.mxu0 0
    %1122 = vmatpush1.bf16.msra.mxu0 0
    %1123 = vmatprep.subr.bf16.mxu0 0
    %1124 = vmatpush1.bf16.msra.mxu0 0
    %1125 = vmatprep.subr.bf16.mxu0 0
    %1126 = vmatpush1.bf16.msra.mxu0 0
    %1127 = vmatprep.subr.bf16.mxu0 0
    %1128 = vmatpush1.bf16.msra.mxu0 0
    %1129 = vmatprep.subr.bf16.mxu0 0
    %1130 = vmatpush1.bf16.msra.mxu0 0
    %1131 = vmatprep.mubr.bf16.mxu0 0
    %1132 = vmatmul.mubr.bf16.gmra.mrb[0].mxu0 %v1097
    %v1133 = vpop.f32.mrb[0].mxu0
    %v1134 = vadd.f32 %v1088, %v1133
    %v1135 = vpop.f32.mrb[0].mxu0
    %v1136 = vadd.f32 %v1090, %v1135
    %v1137 = vpop.f32.mrb[0].mxu0
    %v1138 = vadd.f32 %v1092, %v1137
    %v1139 = vpop.f32.mrb[0].mxu0
    %v1140 = vadd.f32 %v1094, %v1139
    %1141 = vdwg.mxu0
    %v1142 = vadd.f32 %v1134, %v324
    %v1143 = vadd.f32 %v1136, %v328
    %v1144 = vadd.f32 %v1138, %v324
    %v1145 = vadd.f32 %v1140, %v328
    %v1146 = vmul.f32 %v1142, 0.5
    %v1147 = vmul.f32 %v1143, 0.5
    %v1148 = vmul.f32 %v1144, 0.5
    %v1149 = vmul.f32 %v1145, 0.5
    %v1150 = vtanh.pop %v1146
    %v1151 = vtanh.pop %v1147
    %v1152 = vtanh.pop %v1148
    %v1153 = vtanh.pop %v1149
    %v1154 = vmul.f32 %v1150, 0.5
    %v1155 = vmul.f32 %v1151, 0.5
    %v1156 = vmul.f32 %v1152, 0.5
    %v1157 = vmul.f32 %v1153, 0.5
    %v1158 = vadd.f32 %v1154, 0.5
    %v1159 = vadd.f32 %v1155, 0.5
    %v1160 = vadd.f32 %v1156, 0.5
    %v1161 = vadd.f32 %v1157, 0.5
    %v1162 = vtanh.pop %v1143
    %v1163 = vtanh.pop %v1145
    %v1164 = vmul.f32 %v1158, %v935
    %v1165 = vmul.f32 %v1160, %v936
    %1168 = vrot.lane.b32.xlu0 %v1162, 64
    %v1169 = vpop.permute.xlu0 %1168
    %1170 = vrot.lane.b32.xlu0 %v1163, 64
    %v1171 = vpop.permute.xlu0 %1170
    %v1174 = vmul.f32 %v1158, %v1169
    %v1175 = vmul.f32 %v1160, %v1171
    %1178 = vrot.lane.b32.xlu0 %v1174, 64
    %v1179 = vpop.permute.xlu0 %1178
    %1180 = vrot.lane.b32.xlu0 %v1175, 64
    %v1181 = vpop.permute.xlu0 %1180
    %v1184 = vadd.f32 %v1164, %v1179
    %v1185 = vadd.f32 %v1165, %v1181
    %v1186 = vtanh.pop %v1184
    %v1187 = vtanh.pop %v1185
    %1190 = vrot.lane.b32.xlu0 %v1186, 64
    %v1191 = vpop.permute.xlu0 %1190
    %1192 = vrot.lane.b32.xlu0 %v1187, 64
    %v1193 = vpop.permute.xlu0 %1192
    %v1196 = vmul.f32 %v1159, %v1191
    %v1197 = vmul.f32 %v1161, %v1193
    %v1198 = vpack.c.bf16 %v1197, %v1196
    %1199 = vmatprep.subr.bf16.mxu0 %v356
    %1200 = vmatpush1.bf16.msra.mxu0 %v355
    %1201 = vmatprep.subr.bf16.mxu0 %v358
    %1202 = vmatpush1.bf16.msra.mxu0 %v357
    %1203 = vmatprep.subr.bf16.mxu0 %v360
    %1204 = vmatpush1.bf16.msra.mxu0 %v359
    %1205 = vmatprep.subr.bf16.mxu0 %v362
    %1206 = vmatpush1.bf16.msra.mxu0 %v361
    %1207 = vmatprep.subr.bf16.mxu0 0
    %1208 = vmatpush1.bf16.msra.mxu0 0
    %1209 = vmatprep.subr.bf16.mxu0 0
    %1210 = vmatpush1.bf16.msra.mxu0 0
    %1211 = vmatprep.subr.bf16.mxu0 0
    %1212 = vmatpush1.bf16.msra.mxu0 0
    %1213 = vmatprep.subr.bf16.mxu0 0
    %1214 = vmatpush1.bf16.msra.mxu0 0
    %1215 = vmatprep.subr.bf16.mxu0 0
    %1216 = vmatpush1.bf16.msra.mxu0 0
    %1217 = vmatprep.subr.bf16.mxu0 0
    %1218 = vmatpush1.bf16.msra.mxu0 0
    %1219 = vmatprep.subr.bf16.mxu0 0
    %1220 = vmatpush1.bf16.msra.mxu0 0
    %1221 = vmatprep.subr.bf16.mxu0 0
    %1222 = vmatpush1.bf16.msra.mxu0 0
    %1223 = vmatprep.subr.bf16.mxu0 0
    %1224 = vmatpush1.bf16.msra.mxu0 0
    %1225 = vmatprep.subr.bf16.mxu0 0
    %1226 = vmatpush1.bf16.msra.mxu0 0
    %1227 = vmatprep.subr.bf16.mxu0 0
    %1228 = vmatpush1.bf16.msra.mxu0 0
    %1229 = vmatprep.subr.bf16.mxu0 0
    %1230 = vmatpush1.bf16.msra.mxu0 0
    %1231 = vmatprep.mubr.bf16.mxu0 0
    %1232 = vmatmul.mubr.bf16.gmra.mrb[0].mxu0 %v1051
    %v1233 = vpop.f32.mrb[0].mxu0
    %v1234 = vadd.f32 0.0, %v1233
    %v1235 = vpop.f32.mrb[0].mxu0
    %v1236 = vadd.f32 0.0, %v1235
    %v1237 = vpop.f32.mrb[0].mxu0
    %v1238 = vadd.f32 0.0, %v1237
    %v1239 = vpop.f32.mrb[0].mxu0
    %v1240 = vadd.f32 0.0, %v1239
    %1241 = vdwg.mxu0
    %v1242 = vadd.f32 %v247, %v1234
    %v1243 = vadd.f32 %v249, %v1236
    %v1244 = vadd.f32 %v251, %v1238
    %v1245 = vadd.f32 %v253, %v1240
    %v1246 = vmul.f32 %v1242, 0.5
    %v1247 = vmul.f32 %v1243, 0.5
    %v1248 = vmul.f32 %v1244, 0.5
    %v1249 = vmul.f32 %v1245, 0.5
    %v1250 = vtanh.pop %v1246
    %v1251 = vtanh.pop %v1247
    %v1252 = vtanh.pop %v1248
    %v1253 = vtanh.pop %v1249
    %v1254 = vmul.f32 %v1250, 0.5
    %v1255 = vmul.f32 %v1251, 0.5
    %v1256 = vmul.f32 %v1252, 0.5
    %v1257 = vmul.f32 %v1253, 0.5
    %v1258 = vadd.f32 %v1254, 0.5
    %v1259 = vadd.f32 %v1255, 0.5
    %v1260 = vadd.f32 %v1256, 0.5
    %v1261 = vadd.f32 %v1257, 0.5
    %v1262 = vtanh.pop %v1243
    %v1263 = vtanh.pop %v1245
    %v1264 = vmul.f32 %v1258, %v1035
    %v1265 = vmul.f32 %v1260, %v1036
    %1268 = vrot.lane.b32.xlu0 %v1262, 64
    %v1269 = vpop.permute.xlu0 %1268
    %1270 = vrot.lane.b32.xlu0 %v1263, 64
    %v1271 = vpop.permute.xlu0 %1270
    %v1274 = vmul.f32 %v1258, %v1269
    %v1275 = vmul.f32 %v1260, %v1271
    %1278 = vrot.lane.b32.xlu0 %v1274, 64
    %v1279 = vpop.permute.xlu0 %1278
    %1280 = vrot.lane.b32.xlu0 %v1275, 64
    %v1281 = vpop.permute.xlu0 %1280
    %v1284 = vadd.f32 %v1264, %v1279
    %v1285 = vadd.f32 %v1265, %v1281
    %v1286 = vtanh.pop %v1284
    %v1287 = vtanh.pop %v1285
    %1290 = vrot.lane.b32.xlu0 %v1286, 64
    %v1291 = vpop.permute.xlu0 %1290
    %1292 = vrot.lane.b32.xlu0 %v1287, 64
    %v1293 = vpop.permute.xlu0 %1292
    %v1296 = vmul.f32 %v1259, %v1291
    %v1297 = vmul.f32 %v1261, %v1293
    %v1298 = vpack.c.bf16 %v1297, %v1296
    %v1300 = vsel %vm371, %v1298, 0
    %1302 = vmatprep.subr.bf16.mxu0 %v500
    %1303 = vmatpush1.bf16.msra.mxu0 %v499
    %1304 = vmatprep.subr.bf16.mxu0 %v502
    %1305 = vmatpush1.bf16.msra.mxu0 %v501
    %1306 = vmatprep.subr.bf16.mxu0 %v504
    %1307 = vmatpush1.bf16.msra.mxu0 %v503
    %1308 = vmatprep.subr.bf16.mxu0 %v506
    %1309 = vmatpush1.bf16.msra.mxu0 %v505
    %1310 = vmatprep.subr.bf16.mxu0 0
    %1311 = vmatpush1.bf16.msra.mxu0 0
    %1312 = vmatprep.subr.bf16.mxu0 0
    %1313 = vmatpush1.bf16.msra.mxu0 0
    %1314 = vmatprep.subr.bf16.mxu0 0
    %1315 = vmatpush1.bf16.msra.mxu0 0
    %1316 = vmatprep.subr.bf16.mxu0 0
    %1317 = vmatpush1.bf16.msra.mxu0 0
    %1318 = vmatprep.subr.bf16.mxu0 0
    %1319 = vmatpush1.bf16.msra.mxu0 0
    %1320 = vmatprep.subr.bf16.mxu0 0
    %1321 = vmatpush1.bf16.msra.mxu0 0
    %1322 = vmatprep.subr.bf16.mxu0 0
    %1323 = vmatpush1.bf16.msra.mxu0 0
    %1324 = vmatprep.subr.bf16.mxu0 0
    %1325 = vmatpush1.bf16.msra.mxu0 0
    %1326 = vmatprep.subr.bf16.mxu0 0
    %1327 = vmatpush1.bf16.msra.mxu0 0
    %1328 = vmatprep.subr.bf16.mxu0 0
    %1329 = vmatpush1.bf16.msra.mxu0 0
    %1330 = vmatprep.subr.bf16.mxu0 0
    %1331 = vmatpush1.bf16.msra.mxu0 0
    %1332 = vmatprep.subr.bf16.mxu0 0
    %1333 = vmatpush1.bf16.msra.mxu0 0
    %1334 = vmatprep.mubr.bf16.mxu0 0
    %1335 = vmatmul.mubr.bf16.gmra.mrb[0].mxu0 %v1300
    %v1336 = vpop.f32.mrb[0].mxu0
    %v1337 = vadd.f32 0.0, %v1336
    %v1338 = vpop.f32.mrb[0].mxu0
    %v1339 = vadd.f32 0.0, %v1338
    %v1340 = vpop.f32.mrb[0].mxu0
    %v1341 = vadd.f32 0.0, %v1340
    %v1342 = vpop.f32.mrb[0].mxu0
    %v1343 = vadd.f32 0.0, %v1342
    %1344 = vdwg.mxu0
    %v1346 = vsel %vm371, %v1198, 0
    %1348 = vmatprep.subr.bf16.mxu0 %v586
    %1349 = vmatpush1.bf16.msra.mxu0 %v585
    %1350 = vmatprep.subr.bf16.mxu0 %v588
    %1351 = vmatpush1.bf16.msra.mxu0 %v587
    %1352 = vmatprep.subr.bf16.mxu0 %v590
    %1353 = vmatpush1.bf16.msra.mxu0 %v589
    %1354 = vmatprep.subr.bf16.mxu0 %v592
    %1355 = vmatpush1.bf16.msra.mxu0 %v591
    %1356 = vmatprep.subr.bf16.mxu0 0
    %1357 = vmatpush1.bf16.msra.mxu0 0
    %1358 = vmatprep.subr.bf16.mxu0 0
    %1359 = vmatpush1.bf16.msra.mxu0 0
    %1360 = vmatprep.subr.bf16.mxu0 0
    %1361 = vmatpush1.bf16.msra.mxu0 0
    %1362 = vmatprep.subr.bf16.mxu0 0
    %1363 = vmatpush1.bf16.msra.mxu0 0
    %1364 = vmatprep.subr.bf16.mxu0 0
    %1365 = vmatpush1.bf16.msra.mxu0 0
    %1366 = vmatprep.subr.bf16.mxu0 0
    %1367 = vmatpush1.bf16.msra.mxu0 0
    %1368 = vmatprep.subr.bf16.mxu0 0
    %1369 = vmatpush1.bf16.msra.mxu0 0
    %1370 = vmatprep.subr.bf16.mxu0 0
    %1371 = vmatpush1.bf16.msra.mxu0 0
    %1372 = vmatprep.subr.bf16.mxu0 0
    %1373 = vmatpush1.bf16.msra.mxu0 0
    %1374 = vmatprep.subr.bf16.mxu0 0
    %1375 = vmatpush1.bf16.msra.mxu0 0
    %1376 = vmatprep.subr.bf16.mxu0 0
    %1377 = vmatpush1.bf16.msra.mxu0 0
    %1378 = vmatprep.subr.bf16.mxu0 0
    %1379 = vmatpush1.bf16.msra.mxu0 0
    %1380 = vmatprep.mubr.bf16.mxu0 0
    %1381 = vmatmul.mubr.bf16.gmra.mrb[0].mxu0 %v1346
    %v1382 = vpop.f32.mrb[0].mxu0
    %v1383 = vadd.f32 %v1337, %v1382
    %v1384 = vpop.f32.mrb[0].mxu0
    %v1385 = vadd.f32 %v1339, %v1384
    %v1386 = vpop.f32.mrb[0].mxu0
    %v1387 = vadd.f32 %v1341, %v1386
    %v1388 = vpop.f32.mrb[0].mxu0
    %v1389 = vadd.f32 %v1343, %v1388
    %1390 = vdwg.mxu0
    %v1391 = vadd.f32 %v1383, %v324
    %v1392 = vadd.f32 %v1385, %v328
    %v1393 = vadd.f32 %v1387, %v324
    %v1394 = vadd.f32 %v1389, %v328
    %v1395 = vmul.f32 %v1391, 0.5
    %v1396 = vmul.f32 %v1392, 0.5
    %v1397 = vmul.f32 %v1393, 0.5
    %v1398 = vmul.f32 %v1394, 0.5
    %v1399 = vtanh.pop %v1395
    %v1400 = vtanh.pop %v1396
    %v1401 = vtanh.pop %v1397
    %v1402 = vtanh.pop %v1398
    %v1403 = vmul.f32 %v1399, 0.5
    %v1404 = vmul.f32 %v1400, 0.5
    %v1405 = vmul.f32 %v1401, 0.5
    %v1406 = vmul.f32 %v1402, 0.5
    %v1407 = vadd.f32 %v1403, 0.5
    %v1408 = vadd.f32 %v1404, 0.5
    %v1409 = vadd.f32 %v1405, 0.5
    %v1410 = vadd.f32 %v1406, 0.5
    %v1411 = vtanh.pop %v1392
    %v1412 = vtanh.pop %v1394
    %v1413 = vmul.f32 %v1407, %v1184
    %v1414 = vmul.f32 %v1409, %v1185
    %1417 = vrot.lane.b32.xlu0 %v1411, 64
    %v1418 = vpop.permute.xlu0 %1417
    %1419 = vrot.lane.b32.xlu0 %v1412, 64
    %v1420 = vpop.permute.xlu0 %1419
    %v1423 = vmul.f32 %v1407, %v1418
    %v1424 = vmul.f32 %v1409, %v1420
    %1427 = vrot.lane.b32.xlu0 %v1423, 64
    %v1428 = vpop.permute.xlu0 %1427
    %1429 = vrot.lane.b32.xlu0 %v1424, 64
    %v1430 = vpop.permute.xlu0 %1429
    %v1433 = vadd.f32 %v1413, %v1428
    %v1434 = vadd.f32 %v1414, %v1430
    %v1435 = vtanh.pop %v1433
    %v1436 = vtanh.pop %v1434
    %1439 = vrot.lane.b32.xlu0 %v1435, 64
    %v1440 = vpop.permute.xlu0 %1439
    %1441 = vrot.lane.b32.xlu0 %v1436, 64
    %v1442 = vpop.permute.xlu0 %1441
    %v1445 = vmul.f32 %v1408, %v1440
    %v1446 = vmul.f32 %v1410, %v1442
    %v1447 = vpack.c.bf16 %v1446, %v1445
    %1448 = vmatprep.subr.bf16.mxu0 %v356
    %1449 = vmatpush1.bf16.msra.mxu0 %v355
    %1450 = vmatprep.subr.bf16.mxu0 %v358
    %1451 = vmatpush1.bf16.msra.mxu0 %v357
    %1452 = vmatprep.subr.bf16.mxu0 %v360
    %1453 = vmatpush1.bf16.msra.mxu0 %v359
    %1454 = vmatprep.subr.bf16.mxu0 %v362
    %1455 = vmatpush1.bf16.msra.mxu0 %v361
    %1456 = vmatprep.subr.bf16.mxu0 0
    %1457 = vmatpush1.bf16.msra.mxu0 0
    %1458 = vmatprep.subr.bf16.mxu0 0
    %1459 = vmatpush1.bf16.msra.mxu0 0
    %1460 = vmatprep.subr.bf16.mxu0 0
    %1461 = vmatpush1.bf16.msra.mxu0 0
    %1462 = vmatprep.subr.bf16.mxu0 0
    %1463 = vmatpush1.bf16.msra.mxu0 0
    %1464 = vmatprep.subr.bf16.mxu0 0
    %1465 = vmatpush1.bf16.msra.mxu0 0
    %1466 = vmatprep.subr.bf16.mxu0 0
    %1467 = vmatpush1.bf16.msra.mxu0 0
    %1468 = vmatprep.subr.bf16.mxu0 0
    %1469 = vmatpush1.bf16.msra.mxu0 0
    %1470 = vmatprep.subr.bf16.mxu0 0
    %1471 = vmatpush1.bf16.msra.mxu0 0
    %1472 = vmatprep.subr.bf16.mxu0 0
    %1473 = vmatpush1.bf16.msra.mxu0 0
    %1474 = vmatprep.subr.bf16.mxu0 0
    %1475 = vmatpush1.bf16.msra.mxu0 0
    %1476 = vmatprep.subr.bf16.mxu0 0
    %1477 = vmatpush1.bf16.msra.mxu0 0
    %1478 = vmatprep.subr.bf16.mxu0 0
    %1479 = vmatpush1.bf16.msra.mxu0 0
    %1480 = vmatprep.mubr.bf16.mxu0 0
    %1481 = vmatmul.mubr.bf16.gmra.mrb[0].mxu0 %v1300
    %v1482 = vpop.f32.mrb[0].mxu0
    %v1483 = vadd.f32 0.0, %v1482
    %v1484 = vpop.f32.mrb[0].mxu0
    %v1485 = vadd.f32 0.0, %v1484
    %v1486 = vpop.f32.mrb[0].mxu0
    %v1487 = vadd.f32 0.0, %v1486
    %v1488 = vpop.f32.mrb[0].mxu0
    %v1489 = vadd.f32 0.0, %v1488
    %1490 = vdwg.mxu0
    %v1491 = vadd.f32 %v257, %v1483
    %v1492 = vadd.f32 %v259, %v1485
    %v1493 = vadd.f32 %v261, %v1487
    %v1494 = vadd.f32 %v263, %v1489
    %v1495 = vmul.f32 %v1491, 0.5
    %v1496 = vmul.f32 %v1492, 0.5
    %v1497 = vmul.f32 %v1493, 0.5
    %v1498 = vmul.f32 %v1494, 0.5
    %v1499 = vtanh.pop %v1495
    %v1500 = vtanh.pop %v1496
    %v1501 = vtanh.pop %v1497
    %v1502 = vtanh.pop %v1498
    %v1503 = vmul.f32 %v1499, 0.5
    %v1504 = vmul.f32 %v1500, 0.5
    %v1505 = vmul.f32 %v1501, 0.5
    %v1506 = vmul.f32 %v1502, 0.5
    %v1507 = vadd.f32 %v1503, 0.5
    %v1508 = vadd.f32 %v1504, 0.5
    %v1509 = vadd.f32 %v1505, 0.5
    %v1510 = vadd.f32 %v1506, 0.5
    %v1511 = vtanh.pop %v1492
    %v1512 = vtanh.pop %v1494
    %v1513 = vmul.f32 %v1507, %v1284
    %v1514 = vmul.f32 %v1509, %v1285
    %1517 = vrot.lane.b32.xlu0 %v1511, 64
    %v1518 = vpop.permute.xlu0 %1517
    %1519 = vrot.lane.b32.xlu0 %v1512, 64
    %v1520 = vpop.permute.xlu0 %1519
    %v1523 = vmul.f32 %v1507, %v1518
    %v1524 = vmul.f32 %v1509, %v1520
    %1527 = vrot.lane.b32.xlu0 %v1523, 64
    %v1528 = vpop.permute.xlu0 %1527
    %1529 = vrot.lane.b32.xlu0 %v1524, 64
    %v1530 = vpop.permute.xlu0 %1529
    %v1533 = vadd.f32 %v1513, %v1528
    %v1534 = vadd.f32 %v1514, %v1530
    %v1535 = vtanh.pop %v1533
    %v1536 = vtanh.pop %v1534
    %1539 = vrot.lane.b32.xlu0 %v1535, 64
    %v1540 = vpop.permute.xlu0 %1539
    %1541 = vrot.lane.b32.xlu0 %v1536, 64
    %v1542 = vpop.permute.xlu0 %1541
    %v1545 = vmul.f32 %v1508, %v1540
    %v1546 = vmul.f32 %v1510, %v1542
    %v1547 = vpack.c.bf16 %v1546, %v1545
    %v1549 = vsel %vm371, %v1547, 0
    %1551 = vmatprep.subr.bf16.mxu0 %v500
    %1552 = vmatpush1.bf16.msra.mxu0 %v499
    %1553 = vmatprep.subr.bf16.mxu0 %v502
    %1554 = vmatpush1.bf16.msra.mxu0 %v501
    %1555 = vmatprep.subr.bf16.mxu0 %v504
    %1556 = vmatpush1.bf16.msra.mxu0 %v503
    %1557 = vmatprep.subr.bf16.mxu0 %v506
    %1558 = vmatpush1.bf16.msra.mxu0 %v505
    %1559 = vmatprep.subr.bf16.mxu0 0
    %1560 = vmatpush1.bf16.msra.mxu0 0
    %1561 = vmatprep.subr.bf16.mxu0 0
    %1562 = vmatpush1.bf16.msra.mxu0 0
    %1563 = vmatprep.subr.bf16.mxu0 0
    %1564 = vmatpush1.bf16.msra.mxu0 0
    %1565 = vmatprep.subr.bf16.mxu0 0
    %1566 = vmatpush1.bf16.msra.mxu0 0
    %1567 = vmatprep.subr.bf16.mxu0 0
    %1568 = vmatpush1.bf16.msra.mxu0 0
    %1569 = vmatprep.subr.bf16.mxu0 0
    %1570 = vmatpush1.bf16.msra.mxu0 0
    %1571 = vmatprep.subr.bf16.mxu0 0
    %1572 = vmatpush1.bf16.msra.mxu0 0
    %1573 = vmatprep.subr.bf16.mxu0 0
    %1574 = vmatpush1.bf16.msra.mxu0 0
    %1575 = vmatprep.subr.bf16.mxu0 0
    %1576 = vmatpush1.bf16.msra.mxu0 0
    %1577 = vmatprep.subr.bf16.mxu0 0
    %1578 = vmatpush1.bf16.msra.mxu0 0
    %1579 = vmatprep.subr.bf16.mxu0 0
    %1580 = vmatpush1.bf16.msra.mxu0 0
    %1581 = vmatprep.subr.bf16.mxu0 0
    %1582 = vmatpush1.bf16.msra.mxu0 0
    %1583 = vmatprep.mubr.bf16.mxu0 0
    %1584 = vmatmul.mubr.bf16.gmra.mrb[0].mxu0 %v1549
    %v1585 = vpop.f32.mrb[0].mxu0
    %v1586 = vadd.f32 0.0, %v1585
    %v1587 = vpop.f32.mrb[0].mxu0
    %v1588 = vadd.f32 0.0, %v1587
    %v1589 = vpop.f32.mrb[0].mxu0
    %v1590 = vadd.f32 0.0, %v1589
    %v1591 = vpop.f32.mrb[0].mxu0
    %v1592 = vadd.f32 0.0, %v1591
    %1593 = vdwg.mxu0
    %v1595 = vsel %vm371, %v1447, 0
    %1597 = vmatprep.subr.bf16.mxu0 %v586
    %1598 = vmatpush1.bf16.msra.mxu0 %v585
    %1599 = vmatprep.subr.bf16.mxu0 %v588
    %1600 = vmatpush1.bf16.msra.mxu0 %v587
    %1601 = vmatprep.subr.bf16.mxu0 %v590
    %1602 = vmatpush1.bf16.msra.mxu0 %v589
    %1603 = vmatprep.subr.bf16.mxu0 %v592
    %1604 = vmatpush1.bf16.msra.mxu0 %v591
    %1605 = vmatprep.subr.bf16.mxu0 0
    %1606 = vmatpush1.bf16.msra.mxu0 0
    %1607 = vmatprep.subr.bf16.mxu0 0
    %1608 = vmatpush1.bf16.msra.mxu0 0
    %1609 = vmatprep.subr.bf16.mxu0 0
    %1610 = vmatpush1.bf16.msra.mxu0 0
    %1611 = vmatprep.subr.bf16.mxu0 0
    %1612 = vmatpush1.bf16.msra.mxu0 0
    %1613 = vmatprep.subr.bf16.mxu0 0
    %1614 = vmatpush1.bf16.msra.mxu0 0
    %1615 = vmatprep.subr.bf16.mxu0 0
    %1616 = vmatpush1.bf16.msra.mxu0 0
    %1617 = vmatprep.subr.bf16.mxu0 0
    %1618 = vmatpush1.bf16.msra.mxu0 0
    %1619 = vmatprep.subr.bf16.mxu0 0
    %1620 = vmatpush1.bf16.msra.mxu0 0
    %1621 = vmatprep.subr.bf16.mxu0 0
    %1622 = vmatpush1.bf16.msra.mxu0 0
    %1623 = vmatprep.subr.bf16.mxu0 0
    %1624 = vmatpush1.bf16.msra.mxu0 0
    %1625 = vmatprep.subr.bf16.mxu0 0
    %1626 = vmatpush1.bf16.msra.mxu0 0
    %1627 = vmatprep.subr.bf16.mxu0 0
    %1628 = vmatpush1.bf16.msra.mxu0 0
    %1629 = vmatprep.mubr.bf16.mxu0 0
    %1630 = vmatmul.mubr.bf16.gmra.mrb[0].mxu0 %v1595
    %v1631 = vpop.f32.mrb[0].mxu0
    %v1632 = vadd.f32 %v1586, %v1631
    %v1633 = vpop.f32.mrb[0].mxu0
    %v1634 = vadd.f32 %v1588, %v1633
    %v1635 = vpop.f32.mrb[0].mxu0
    %v1636 = vadd.f32 %v1590, %v1635
    %v1637 = vpop.f32.mrb[0].mxu0
    %v1638 = vadd.f32 %v1592, %v1637
    %1639 = vdwg.mxu0
    %v1640 = vadd.f32 %v1632, %v324
    %v1641 = vadd.f32 %v1634, %v328
    %v1642 = vadd.f32 %v1636, %v324
    %v1643 = vadd.f32 %v1638, %v328
    %v1644 = vmul.f32 %v1640, 0.5
    %v1645 = vmul.f32 %v1641, 0.5
    %v1646 = vmul.f32 %v1642, 0.5
    %v1647 = vmul.f32 %v1643, 0.5
    %v1648 = vtanh.pop %v1644
    %v1649 = vtanh.pop %v1645
    %v1650 = vtanh.pop %v1646
    %v1651 = vtanh.pop %v1647
    %v1652 = vmul.f32 %v1648, 0.5
    %v1653 = vmul.f32 %v1649, 0.5
    %v1654 = vmul.f32 %v1650, 0.5
    %v1655 = vmul.f32 %v1651, 0.5
    %v1656 = vadd.f32 %v1652, 0.5
    %v1657 = vadd.f32 %v1653, 0.5
    %v1658 = vadd.f32 %v1654, 0.5
    %v1659 = vadd.f32 %v1655, 0.5
    %v1660 = vtanh.pop %v1641
    %v1661 = vtanh.pop %v1643
    %v1662 = vmul.f32 %v1656, %v1433
    %v1663 = vmul.f32 %v1658, %v1434
    %1666 = vrot.lane.b32.xlu0 %v1660, 64
    %v1667 = vpop.permute.xlu0 %1666
    %1668 = vrot.lane.b32.xlu0 %v1661, 64
    %v1669 = vpop.permute.xlu0 %1668
    %v1672 = vmul.f32 %v1656, %v1667
    %v1673 = vmul.f32 %v1658, %v1669
    %1676 = vrot.lane.b32.xlu0 %v1672, 64
    %v1677 = vpop.permute.xlu0 %1676
    %1678 = vrot.lane.b32.xlu0 %v1673, 64
    %v1679 = vpop.permute.xlu0 %1678
    %v1682 = vadd.f32 %v1662, %v1677
    %v1683 = vadd.f32 %v1663, %v1679
    %v1684 = vtanh.pop %v1682
    %v1685 = vtanh.pop %v1683
    %1688 = vrot.lane.b32.xlu0 %v1684, 64
    %v1689 = vpop.permute.xlu0 %1688
    %1690 = vrot.lane.b32.xlu0 %v1685, 64
    %v1691 = vpop.permute.xlu0 %1690
    %v1694 = vmul.f32 %v1657, %v1689
    %v1695 = vmul.f32 %v1659, %v1691
    %v1696 = vpack.c.bf16 %v1695, %v1694
    %1697 = vmatprep.subr.bf16.mxu0 %v356
    %1698 = vmatpush1.bf16.msra.mxu0 %v355
    %1699 = vmatprep.subr.bf16.mxu0 %v358
    %1700 = vmatpush1.bf16.msra.mxu0 %v357
    %1701 = vmatprep.subr.bf16.mxu0 %v360
    %1702 = vmatpush1.bf16.msra.mxu0 %v359
    %1703 = vmatprep.subr.bf16.mxu0 %v362
    %1704 = vmatpush1.bf16.msra.mxu0 %v361
    %1705 = vmatprep.subr.bf16.mxu0 0
    %1706 = vmatpush1.bf16.msra.mxu0 0
    %1707 = vmatprep.subr.bf16.mxu0 0
    %1708 = vmatpush1.bf16.msra.mxu0 0
    %1709 = vmatprep.subr.bf16.mxu0 0
    %1710 = vmatpush1.bf16.msra.mxu0 0
    %1711 = vmatprep.subr.bf16.mxu0 0
    %1712 = vmatpush1.bf16.msra.mxu0 0
    %1713 = vmatprep.subr.bf16.mxu0 0
    %1714 = vmatpush1.bf16.msra.mxu0 0
    %1715 = vmatprep.subr.bf16.mxu0 0
    %1716 = vmatpush1.bf16.msra.mxu0 0
    %1717 = vmatprep.subr.bf16.mxu0 0
    %1718 = vmatpush1.bf16.msra.mxu0 0
    %1719 = vmatprep.subr.bf16.mxu0 0
    %1720 = vmatpush1.bf16.msra.mxu0 0
    %1721 = vmatprep.subr.bf16.mxu0 0
    %1722 = vmatpush1.bf16.msra.mxu0 0
    %1723 = vmatprep.subr.bf16.mxu0 0
    %1724 = vmatpush1.bf16.msra.mxu0 0
    %1725 = vmatprep.subr.bf16.mxu0 0
    %1726 = vmatpush1.bf16.msra.mxu0 0
    %1727 = vmatprep.subr.bf16.mxu0 0
    %1728 = vmatpush1.bf16.msra.mxu0 0
    %1729 = vmatprep.mubr.bf16.mxu0 0
    %1730 = vmatmul.mubr.bf16.gmra.mrb[0].mxu0 %v1549
    %v1731 = vpop.f32.mrb[0].mxu0
    %v1732 = vadd.f32 0.0, %v1731
    %v1733 = vpop.f32.mrb[0].mxu0
    %v1734 = vadd.f32 0.0, %v1733
    %v1735 = vpop.f32.mrb[0].mxu0
    %v1736 = vadd.f32 0.0, %v1735
    %v1737 = vpop.f32.mrb[0].mxu0
    %v1738 = vadd.f32 0.0, %v1737
    %1739 = vdwg.mxu0
    %v1740 = vadd.f32 %v267, %v1732
    %v1741 = vadd.f32 %v269, %v1734
    %v1742 = vadd.f32 %v271, %v1736
    %v1743 = vadd.f32 %v273, %v1738
    %v1744 = vmul.f32 %v1740, 0.5
    %v1745 = vmul.f32 %v1741, 0.5
    %v1746 = vmul.f32 %v1742, 0.5
    %v1747 = vmul.f32 %v1743, 0.5
    %v1748 = vtanh.pop %v1744
    %v1749 = vtanh.pop %v1745
    %v1750 = vtanh.pop %v1746
    %v1751 = vtanh.pop %v1747
    %v1752 = vmul.f32 %v1748, 0.5
    %v1753 = vmul.f32 %v1749, 0.5
    %v1754 = vmul.f32 %v1750, 0.5
    %v1755 = vmul.f32 %v1751, 0.5
    %v1756 = vadd.f32 %v1752, 0.5
    %v1757 = vadd.f32 %v1753, 0.5
    %v1758 = vadd.f32 %v1754, 0.5
    %v1759 = vadd.f32 %v1755, 0.5
    %v1760 = vtanh.pop %v1741
    %v1761 = vtanh.pop %v1743
    %v1762 = vmul.f32 %v1756, %v1533
    %v1763 = vmul.f32 %v1758, %v1534
    %1766 = vrot.lane.b32.xlu0 %v1760, 64
    %v1767 = vpop.permute.xlu0 %1766
    %1768 = vrot.lane.b32.xlu0 %v1761, 64
    %v1769 = vpop.permute.xlu0 %1768
    %v1772 = vmul.f32 %v1756, %v1767
    %v1773 = vmul.f32 %v1758, %v1769
    %1776 = vrot.lane.b32.xlu0 %v1772, 64
    %v1777 = vpop.permute.xlu0 %1776
    %1778 = vrot.lane.b32.xlu0 %v1773, 64
    %v1779 = vpop.permute.xlu0 %1778
    %v1782 = vadd.f32 %v1762, %v1777
    %v1783 = vadd.f32 %v1763, %v1779
    %v1784 = vtanh.pop %v1782
    %v1785 = vtanh.pop %v1783
    %1788 = vrot.lane.b32.xlu0 %v1784, 64
    %v1789 = vpop.permute.xlu0 %1788
    %1790 = vrot.lane.b32.xlu0 %v1785, 64
    %v1791 = vpop.permute.xlu0 %1790
    %v1794 = vmul.f32 %v1757, %v1789
    %v1795 = vmul.f32 %v1759, %v1791
    %v1796 = vpack.c.bf16 %v1795, %v1794
    %v1798 = vsel %vm371, %v1796, 0
    %1800 = vmatprep.subr.bf16.mxu0 %v500
    %1801 = vmatpush1.bf16.msra.mxu0 %v499
    %1802 = vmatprep.subr.bf16.mxu0 %v502
    %1803 = vmatpush1.bf16.msra.mxu0 %v501
    %1804 = vmatprep.subr.bf16.mxu0 %v504
    %1805 = vmatpush1.bf16.msra.mxu0 %v503
    %1806 = vmatprep.subr.bf16.mxu0 %v506
    %1807 = vmatpush1.bf16.msra.mxu0 %v505
    %1808 = vmatprep.subr.bf16.mxu0 0
    %1809 = vmatpush1.bf16.msra.mxu0 0
    %1810 = vmatprep.subr.bf16.mxu0 0
    %1811 = vmatpush1.bf16.msra.mxu0 0
    %1812 = vmatprep.subr.bf16.mxu0 0
    %1813 = vmatpush1.bf16.msra.mxu0 0
    %1814 = vmatprep.subr.bf16.mxu0 0
    %1815 = vmatpush1.bf16.msra.mxu0 0
    %1816 = vmatprep.subr.bf16.mxu0 0
    %1817 = vmatpush1.bf16.msra.mxu0 0
    %1818 = vmatprep.subr.bf16.mxu0 0
    %1819 = vmatpush1.bf16.msra.mxu0 0
    %1820 = vmatprep.subr.bf16.mxu0 0
    %1821 = vmatpush1.bf16.msra.mxu0 0
    %1822 = vmatprep.subr.bf16.mxu0 0
    %1823 = vmatpush1.bf16.msra.mxu0 0
    %1824 = vmatprep.subr.bf16.mxu0 0
    %1825 = vmatpush1.bf16.msra.mxu0 0
    %1826 = vmatprep.subr.bf16.mxu0 0
    %1827 = vmatpush1.bf16.msra.mxu0 0
    %1828 = vmatprep.subr.bf16.mxu0 0
    %1829 = vmatpush1.bf16.msra.mxu0 0
    %1830 = vmatprep.subr.bf16.mxu0 0
    %1831 = vmatpush1.bf16.msra.mxu0 0
    %1832 = vmatprep.mubr.bf16.mxu0 0
    %1833 = vmatmul.mubr.bf16.gmra.mrb[0].mxu0 %v1798
    %v1834 = vpop.f32.mrb[0].mxu0
    %v1835 = vadd.f32 0.0, %v1834
    %v1836 = vpop.f32.mrb[0].mxu0
    %v1837 = vadd.f32 0.0, %v1836
    %v1838 = vpop.f32.mrb[0].mxu0
    %v1839 = vadd.f32 0.0, %v1838
    %v1840 = vpop.f32.mrb[0].mxu0
    %v1841 = vadd.f32 0.0, %v1840
    %1842 = vdwg.mxu0
    %v1844 = vsel %vm371, %v1696, 0
    %1846 = vmatprep.subr.bf16.mxu0 %v586
    %1847 = vmatpush1.bf16.msra.mxu0 %v585
    %1848 = vmatprep.subr.bf16.mxu0 %v588
    %1849 = vmatpush1.bf16.msra.mxu0 %v587
    %1850 = vmatprep.subr.bf16.mxu0 %v590
    %1851 = vmatpush1.bf16.msra.mxu0 %v589
    %1852 = vmatprep.subr.bf16.mxu0 %v592
    %1853 = vmatpush1.bf16.msra.mxu0 %v591
    %1854 = vmatprep.subr.bf16.mxu0 0
    %1855 = vmatpush1.bf16.msra.mxu0 0
    %1856 = vmatprep.subr.bf16.mxu0 0
    %1857 = vmatpush1.bf16.msra.mxu0 0
    %1858 = vmatprep.subr.bf16.mxu0 0
    %1859 = vmatpush1.bf16.msra.mxu0 0
    %1860 = vmatprep.subr.bf16.mxu0 0
    %1861 = vmatpush1.bf16.msra.mxu0 0
    %1862 = vmatprep.subr.bf16.mxu0 0
    %1863 = vmatpush1.bf16.msra.mxu0 0
    %1864 = vmatprep.subr.bf16.mxu0 0
    %1865 = vmatpush1.bf16.msra.mxu0 0
    %1866 = vmatprep.subr.bf16.mxu0 0
    %1867 = vmatpush1.bf16.msra.mxu0 0
    %1868 = vmatprep.subr.bf16.mxu0 0
    %1869 = vmatpush1.bf16.msra.mxu0 0
    %1870 = vmatprep.subr.bf16.mxu0 0
    %1871 = vmatpush1.bf16.msra.mxu0 0
    %1872 = vmatprep.subr.bf16.mxu0 0
    %1873 = vmatpush1.bf16.msra.mxu0 0
    %1874 = vmatprep.subr.bf16.mxu0 0
    %1875 = vmatpush1.bf16.msra.mxu0 0
    %1876 = vmatprep.subr.bf16.mxu0 0
    %1877 = vmatpush1.bf16.msra.mxu0 0
    %1878 = vmatprep.mubr.bf16.mxu0 0
    %1879 = vmatmul.mubr.bf16.gmra.mrb[0].mxu0 %v1844
    %v1880 = vpop.f32.mrb[0].mxu0
    %v1881 = vadd.f32 %v1835, %v1880
    %v1882 = vpop.f32.mrb[0].mxu0
    %v1883 = vadd.f32 %v1837, %v1882
    %v1884 = vpop.f32.mrb[0].mxu0
    %v1885 = vadd.f32 %v1839, %v1884
    %v1886 = vpop.f32.mrb[0].mxu0
    %v1887 = vadd.f32 %v1841, %v1886
    %1888 = vdwg.mxu0
    %v1889 = vadd.f32 %v1881, %v324
    %v1890 = vadd.f32 %v1883, %v328
    %v1891 = vadd.f32 %v1885, %v324
    %v1892 = vadd.f32 %v1887, %v328
    %v1893 = vmul.f32 %v1889, 0.5
    %v1894 = vmul.f32 %v1890, 0.5
    %v1895 = vmul.f32 %v1891, 0.5
    %v1896 = vmul.f32 %v1892, 0.5
    %v1897 = vtanh.pop %v1893
    %v1898 = vtanh.pop %v1894
    %v1899 = vtanh.pop %v1895
    %v1900 = vtanh.pop %v1896
    %v1901 = vmul.f32 %v1897, 0.5
    %v1902 = vmul.f32 %v1898, 0.5
    %v1903 = vmul.f32 %v1899, 0.5
    %v1904 = vmul.f32 %v1900, 0.5
    %v1905 = vadd.f32 %v1901, 0.5
    %v1906 = vadd.f32 %v1902, 0.5
    %v1907 = vadd.f32 %v1903, 0.5
    %v1908 = vadd.f32 %v1904, 0.5
    %v1909 = vtanh.pop %v1890
    %v1910 = vtanh.pop %v1892
    %v1911 = vmul.f32 %v1905, %v1682
    %v1912 = vmul.f32 %v1907, %v1683
    %1915 = vrot.lane.b32.xlu0 %v1909, 64
    %v1916 = vpop.permute.xlu0 %1915
    %1917 = vrot.lane.b32.xlu0 %v1910, 64
    %v1918 = vpop.permute.xlu0 %1917
    %v1921 = vmul.f32 %v1905, %v1916
    %v1922 = vmul.f32 %v1907, %v1918
    %1925 = vrot.lane.b32.xlu0 %v1921, 64
    %v1926 = vpop.permute.xlu0 %1925
    %1927 = vrot.lane.b32.xlu0 %v1922, 64
    %v1928 = vpop.permute.xlu0 %1927
    %v1931 = vadd.f32 %v1911, %v1926
    %v1932 = vadd.f32 %v1912, %v1928
    %v1933 = vtanh.pop %v1931
    %v1934 = vtanh.pop %v1932
    %1937 = vrot.lane.b32.xlu0 %v1933, 64
    %v1938 = vpop.permute.xlu0 %1937
    %1939 = vrot.lane.b32.xlu0 %v1934, 64
    %v1940 = vpop.permute.xlu0 %1939
    %v1943 = vmul.f32 %v1906, %v1938
    %v1944 = vmul.f32 %v1908, %v1940
    %v1945 = vpack.c.bf16 %v1944, %v1943
    %1946 = vmatprep.subr.bf16.mxu0 %v356
    %1947 = vmatpush1.bf16.msra.mxu0 %v355
    %1948 = vmatprep.subr.bf16.mxu0 %v358
    %1949 = vmatpush1.bf16.msra.mxu0 %v357
    %1950 = vmatprep.subr.bf16.mxu0 %v360
    %1951 = vmatpush1.bf16.msra.mxu0 %v359
    %1952 = vmatprep.subr.bf16.mxu0 %v362
    %1953 = vmatpush1.bf16.msra.mxu0 %v361
    %1954 = vmatprep.subr.bf16.mxu0 0
    %1955 = vmatpush1.bf16.msra.mxu0 0
    %1956 = vmatprep.subr.bf16.mxu0 0
    %1957 = vmatpush1.bf16.msra.mxu0 0
    %1958 = vmatprep.subr.bf16.mxu0 0
    %1959 = vmatpush1.bf16.msra.mxu0 0
    %1960 = vmatprep.subr.bf16.mxu0 0
    %1961 = vmatpush1.bf16.msra.mxu0 0
    %1962 = vmatprep.subr.bf16.mxu0 0
    %1963 = vmatpush1.bf16.msra.mxu0 0
    %1964 = vmatprep.subr.bf16.mxu0 0
    %1965 = vmatpush1.bf16.msra.mxu0 0
    %1966 = vmatprep.subr.bf16.mxu0 0
    %1967 = vmatpush1.bf16.msra.mxu0 0
    %1968 = vmatprep.subr.bf16.mxu0 0
    %1969 = vmatpush1.bf16.msra.mxu0 0
    %1970 = vmatprep.subr.bf16.mxu0 0
    %1971 = vmatpush1.bf16.msra.mxu0 0
    %1972 = vmatprep.subr.bf16.mxu0 0
    %1973 = vmatpush1.bf16.msra.mxu0 0
    %1974 = vmatprep.subr.bf16.mxu0 0
    %1975 = vmatpush1.bf16.msra.mxu0 0
    %1976 = vmatprep.subr.bf16.mxu0 0
    %1977 = vmatpush1.bf16.msra.mxu0 0
    %1978 = vmatprep.mubr.bf16.mxu0 0
    %1979 = vmatmul.mubr.bf16.gmra.mrb[0].mxu0 %v1798
    %v1980 = vpop.f32.mrb[0].mxu0
    %v1981 = vadd.f32 0.0, %v1980
    %v1982 = vpop.f32.mrb[0].mxu0
    %v1983 = vadd.f32 0.0, %v1982
    %v1984 = vpop.f32.mrb[0].mxu0
    %v1985 = vadd.f32 0.0, %v1984
    %v1986 = vpop.f32.mrb[0].mxu0
    %v1987 = vadd.f32 0.0, %v1986
    %1988 = vdwg.mxu0
    %v1989 = vadd.f32 %v277, %v1981
    %v1990 = vadd.f32 %v279, %v1983
    %v1991 = vadd.f32 %v281, %v1985
    %v1992 = vadd.f32 %v283, %v1987
    %v1993 = vmul.f32 %v1989, 0.5
    %v1994 = vmul.f32 %v1990, 0.5
    %v1995 = vmul.f32 %v1991, 0.5
    %v1996 = vmul.f32 %v1992, 0.5
    %v1997 = vtanh.pop %v1993
    %v1998 = vtanh.pop %v1994
    %v1999 = vtanh.pop %v1995
    %v2000 = vtanh.pop %v1996
    %v2001 = vmul.f32 %v1997, 0.5
    %v2002 = vmul.f32 %v1998, 0.5
    %v2003 = vmul.f32 %v1999, 0.5
    %v2004 = vmul.f32 %v2000, 0.5
    %v2005 = vadd.f32 %v2001, 0.5
    %v2006 = vadd.f32 %v2002, 0.5
    %v2007 = vadd.f32 %v2003, 0.5
    %v2008 = vadd.f32 %v2004, 0.5
    %v2009 = vtanh.pop %v1990
    %v2010 = vtanh.pop %v1992
    %v2011 = vmul.f32 %v2005, %v1782
    %v2012 = vmul.f32 %v2007, %v1783
    %2015 = vrot.lane.b32.xlu0 %v2009, 64
    %v2016 = vpop.permute.xlu0 %2015
    %2017 = vrot.lane.b32.xlu0 %v2010, 64
    %v2018 = vpop.permute.xlu0 %2017
    %v2021 = vmul.f32 %v2005, %v2016
    %v2022 = vmul.f32 %v2007, %v2018
    %2025 = vrot.lane.b32.xlu0 %v2021, 64
    %v2026 = vpop.permute.xlu0 %2025
    %2027 = vrot.lane.b32.xlu0 %v2022, 64
    %v2028 = vpop.permute.xlu0 %2027
    %v2031 = vadd.f32 %v2011, %v2026
    %v2032 = vadd.f32 %v2012, %v2028
    %v2033 = vtanh.pop %v2031
    %v2034 = vtanh.pop %v2032
    %2037 = vrot.lane.b32.xlu0 %v2033, 64
    %v2038 = vpop.permute.xlu0 %2037
    %2039 = vrot.lane.b32.xlu0 %v2034, 64
    %v2040 = vpop.permute.xlu0 %2039
    %v2043 = vmul.f32 %v2006, %v2038
    %v2044 = vmul.f32 %v2008, %v2040
    %v2045 = vpack.c.bf16 %v2044, %v2043
    %v2047 = vsel %vm371, %v2045, 0
    %2049 = vmatprep.subr.bf16.mxu0 %v500
    %2050 = vmatpush1.bf16.msra.mxu0 %v499
    %2051 = vmatprep.subr.bf16.mxu0 %v502
    %2052 = vmatpush1.bf16.msra.mxu0 %v501
    %2053 = vmatprep.subr.bf16.mxu0 %v504
    %2054 = vmatpush1.bf16.msra.mxu0 %v503
    %2055 = vmatprep.subr.bf16.mxu0 %v506
    %2056 = vmatpush1.bf16.msra.mxu0 %v505
    %2057 = vmatprep.subr.bf16.mxu0 0
    %2058 = vmatpush1.bf16.msra.mxu0 0
    %2059 = vmatprep.subr.bf16.mxu0 0
    %2060 = vmatpush1.bf16.msra.mxu0 0
    %2061 = vmatprep.subr.bf16.mxu0 0
    %2062 = vmatpush1.bf16.msra.mxu0 0
    %2063 = vmatprep.subr.bf16.mxu0 0
    %2064 = vmatpush1.bf16.msra.mxu0 0
    %2065 = vmatprep.subr.bf16.mxu0 0
    %2066 = vmatpush1.bf16.msra.mxu0 0
    %2067 = vmatprep.subr.bf16.mxu0 0
    %2068 = vmatpush1.bf16.msra.mxu0 0
    %2069 = vmatprep.subr.bf16.mxu0 0
    %2070 = vmatpush1.bf16.msra.mxu0 0
    %2071 = vmatprep.subr.bf16.mxu0 0
    %2072 = vmatpush1.bf16.msra.mxu0 0
    %2073 = vmatprep.subr.bf16.mxu0 0
    %2074 = vmatpush1.bf16.msra.mxu0 0
    %2075 = vmatprep.subr.bf16.mxu0 0
    %2076 = vmatpush1.bf16.msra.mxu0 0
    %2077 = vmatprep.subr.bf16.mxu0 0
    %2078 = vmatpush1.bf16.msra.mxu0 0
    %2079 = vmatprep.subr.bf16.mxu0 0
    %2080 = vmatpush1.bf16.msra.mxu0 0
    %2081 = vmatprep.mubr.bf16.mxu0 0
    %2082 = vmatmul.mubr.bf16.gmra.mrb[0].mxu0 %v2047
    %v2083 = vpop.f32.mrb[0].mxu0
    %v2084 = vadd.f32 0.0, %v2083
    %v2085 = vpop.f32.mrb[0].mxu0
    %v2086 = vadd.f32 0.0, %v2085
    %v2087 = vpop.f32.mrb[0].mxu0
    %v2088 = vadd.f32 0.0, %v2087
    %v2089 = vpop.f32.mrb[0].mxu0
    %v2090 = vadd.f32 0.0, %v2089
    %2091 = vdwg.mxu0
    %v2093 = vsel %vm371, %v1945, 0
    %2095 = vmatprep.subr.bf16.mxu0 %v586
    %2096 = vmatpush1.bf16.msra.mxu0 %v585
    %2097 = vmatprep.subr.bf16.mxu0 %v588
    %2098 = vmatpush1.bf16.msra.mxu0 %v587
    %2099 = vmatprep.subr.bf16.mxu0 %v590
    %2100 = vmatpush1.bf16.msra.mxu0 %v589
    %2101 = vmatprep.subr.bf16.mxu0 %v592
    %2102 = vmatpush1.bf16.msra.mxu0 %v591
    %2103 = vmatprep.subr.bf16.mxu0 0
    %2104 = vmatpush1.bf16.msra.mxu0 0
    %2105 = vmatprep.subr.bf16.mxu0 0
    %2106 = vmatpush1.bf16.msra.mxu0 0
    %2107 = vmatprep.subr.bf16.mxu0 0
    %2108 = vmatpush1.bf16.msra.mxu0 0
    %2109 = vmatprep.subr.bf16.mxu0 0
    %2110 = vmatpush1.bf16.msra.mxu0 0
    %2111 = vmatprep.subr.bf16.mxu0 0
    %2112 = vmatpush1.bf16.msra.mxu0 0
    %2113 = vmatprep.subr.bf16.mxu0 0
    %2114 = vmatpush1.bf16.msra.mxu0 0
    %2115 = vmatprep.subr.bf16.mxu0 0
    %2116 = vmatpush1.bf16.msra.mxu0 0
    %2117 = vmatprep.subr.bf16.mxu0 0
    %2118 = vmatpush1.bf16.msra.mxu0 0
    %2119 = vmatprep.subr.bf16.mxu0 0
    %2120 = vmatpush1.bf16.msra.mxu0 0
    %2121 = vmatprep.subr.bf16.mxu0 0
    %2122 = vmatpush1.bf16.msra.mxu0 0
    %2123 = vmatprep.subr.bf16.mxu0 0
    %2124 = vmatpush1.bf16.msra.mxu0 0
    %2125 = vmatprep.subr.bf16.mxu0 0
    %2126 = vmatpush1.bf16.msra.mxu0 0
    %2127 = vmatprep.mubr.bf16.mxu0 0
    %2128 = vmatmul.mubr.bf16.gmra.mrb[0].mxu0 %v2093
    %v2129 = vpop.f32.mrb[0].mxu0
    %v2130 = vadd.f32 %v2084, %v2129
    %v2131 = vpop.f32.mrb[0].mxu0
    %v2132 = vadd.f32 %v2086, %v2131
    %v2133 = vpop.f32.mrb[0].mxu0
    %v2134 = vadd.f32 %v2088, %v2133
    %v2135 = vpop.f32.mrb[0].mxu0
    %v2136 = vadd.f32 %v2090, %v2135
    %2137 = vdwg.mxu0
    %v2138 = vadd.f32 %v2130, %v324
    %v2139 = vadd.f32 %v2132, %v328
    %v2140 = vadd.f32 %v2134, %v324
    %v2141 = vadd.f32 %v2136, %v328
    %v2142 = vmul.f32 %v2138, 0.5
    %v2143 = vmul.f32 %v2139, 0.5
    %v2144 = vmul.f32 %v2140, 0.5
    %v2145 = vmul.f32 %v2141, 0.5
    %v2146 = vtanh.pop %v2142
    %v2147 = vtanh.pop %v2143
    %v2148 = vtanh.pop %v2144
    %v2149 = vtanh.pop %v2145
    %v2150 = vmul.f32 %v2146, 0.5
    %v2151 = vmul.f32 %v2147, 0.5
    %v2152 = vmul.f32 %v2148, 0.5
    %v2153 = vmul.f32 %v2149, 0.5
    %v2154 = vadd.f32 %v2150, 0.5
    %v2155 = vadd.f32 %v2151, 0.5
    %v2156 = vadd.f32 %v2152, 0.5
    %v2157 = vadd.f32 %v2153, 0.5
    %v2158 = vtanh.pop %v2139
    %v2159 = vtanh.pop %v2141
    %v2160 = vmul.f32 %v2154, %v1931
    %v2161 = vmul.f32 %v2156, %v1932
    %2164 = vrot.lane.b32.xlu0 %v2158, 64
    %v2165 = vpop.permute.xlu0 %2164
    %2166 = vrot.lane.b32.xlu0 %v2159, 64
    %v2167 = vpop.permute.xlu0 %2166
    %v2170 = vmul.f32 %v2154, %v2165
    %v2171 = vmul.f32 %v2156, %v2167
    %2174 = vrot.lane.b32.xlu0 %v2170, 64
    %v2175 = vpop.permute.xlu0 %2174
    %2176 = vrot.lane.b32.xlu0 %v2171, 64
    %v2177 = vpop.permute.xlu0 %2176
    %v2180 = vadd.f32 %v2160, %v2175
    %v2181 = vadd.f32 %v2161, %v2177
    %v2182 = vtanh.pop %v2180
    %v2183 = vtanh.pop %v2181
    %2186 = vrot.lane.b32.xlu0 %v2182, 64
    %v2187 = vpop.permute.xlu0 %2186
    %2188 = vrot.lane.b32.xlu0 %v2183, 64
    %v2189 = vpop.permute.xlu0 %2188
    %v2192 = vmul.f32 %v2155, %v2187
    %v2193 = vmul.f32 %v2157, %v2189
    %v2194 = vpack.c.bf16 %v2193, %v2192
    %2195 = vmatprep.subr.bf16.mxu0 %v356
    %2196 = vmatpush1.bf16.msra.mxu0 %v355
    %2197 = vmatprep.subr.bf16.mxu0 %v358
    %2198 = vmatpush1.bf16.msra.mxu0 %v357
    %2199 = vmatprep.subr.bf16.mxu0 %v360
    %2200 = vmatpush1.bf16.msra.mxu0 %v359
    %2201 = vmatprep.subr.bf16.mxu0 %v362
    %2202 = vmatpush1.bf16.msra.mxu0 %v361
    %2203 = vmatprep.subr.bf16.mxu0 0
    %2204 = vmatpush1.bf16.msra.mxu0 0
    %2205 = vmatprep.subr.bf16.mxu0 0
    %2206 = vmatpush1.bf16.msra.mxu0 0
    %2207 = vmatprep.subr.bf16.mxu0 0
    %2208 = vmatpush1.bf16.msra.mxu0 0
    %2209 = vmatprep.subr.bf16.mxu0 0
    %2210 = vmatpush1.bf16.msra.mxu0 0
    %2211 = vmatprep.subr.bf16.mxu0 0
    %2212 = vmatpush1.bf16.msra.mxu0 0
    %2213 = vmatprep.subr.bf16.mxu0 0
    %2214 = vmatpush1.bf16.msra.mxu0 0
    %2215 = vmatprep.subr.bf16.mxu0 0
    %2216 = vmatpush1.bf16.msra.mxu0 0
    %2217 = vmatprep.subr.bf16.mxu0 0
    %2218 = vmatpush1.bf16.msra.mxu0 0
    %2219 = vmatprep.subr.bf16.mxu0 0
    %2220 = vmatpush1.bf16.msra.mxu0 0
    %2221 = vmatprep.subr.bf16.mxu0 0
    %2222 = vmatpush1.bf16.msra.mxu0 0
    %2223 = vmatprep.subr.bf16.mxu0 0
    %2224 = vmatpush1.bf16.msra.mxu0 0
    %2225 = vmatprep.subr.bf16.mxu0 0
    %2226 = vmatpush1.bf16.msra.mxu0 0
    %2227 = vmatprep.mubr.bf16.mxu0 0
    %2228 = vmatmul.mubr.bf16.gmra.mrb[0].mxu0 %v2047
    %v2229 = vpop.f32.mrb[0].mxu0
    %v2230 = vadd.f32 0.0, %v2229
    %v2231 = vpop.f32.mrb[0].mxu0
    %v2232 = vadd.f32 0.0, %v2231
    %v2233 = vpop.f32.mrb[0].mxu0
    %v2234 = vadd.f32 0.0, %v2233
    %v2235 = vpop.f32.mrb[0].mxu0
    %v2236 = vadd.f32 0.0, %v2235
    %2237 = vdwg.mxu0
    %v2238 = vadd.f32 %v287, %v2230
    %v2239 = vadd.f32 %v289, %v2232
    %v2240 = vadd.f32 %v291, %v2234
    %v2241 = vadd.f32 %v293, %v2236
    %v2242 = vmul.f32 %v2238, 0.5
    %v2243 = vmul.f32 %v2239, 0.5
    %v2244 = vmul.f32 %v2240, 0.5
    %v2245 = vmul.f32 %v2241, 0.5
    %v2246 = vtanh.pop %v2242
    %v2247 = vtanh.pop %v2243
    %v2248 = vtanh.pop %v2244
    %v2249 = vtanh.pop %v2245
    %v2250 = vmul.f32 %v2246, 0.5
    %v2251 = vmul.f32 %v2247, 0.5
    %v2252 = vmul.f32 %v2248, 0.5
    %v2253 = vmul.f32 %v2249, 0.5
    %v2254 = vadd.f32 %v2250, 0.5
    %v2255 = vadd.f32 %v2251, 0.5
    %v2256 = vadd.f32 %v2252, 0.5
    %v2257 = vadd.f32 %v2253, 0.5
    %v2258 = vtanh.pop %v2239
    %v2259 = vtanh.pop %v2241
    %v2260 = vmul.f32 %v2254, %v2031
    %v2261 = vmul.f32 %v2256, %v2032
    %2264 = vrot.lane.b32.xlu0 %v2258, 64
    %v2265 = vpop.permute.xlu0 %2264
    %2266 = vrot.lane.b32.xlu0 %v2259, 64
    %v2267 = vpop.permute.xlu0 %2266
    %v2270 = vmul.f32 %v2254, %v2265
    %v2271 = vmul.f32 %v2256, %v2267
    %2274 = vrot.lane.b32.xlu0 %v2270, 64
    %v2275 = vpop.permute.xlu0 %2274
    %2276 = vrot.lane.b32.xlu0 %v2271, 64
    %v2277 = vpop.permute.xlu0 %2276
    %v2280 = vadd.f32 %v2260, %v2275
    %v2281 = vadd.f32 %v2261, %v2277
    %v2282 = vtanh.pop %v2280
    %v2283 = vtanh.pop %v2281
    %2286 = vrot.lane.b32.xlu0 %v2282, 64
    %v2287 = vpop.permute.xlu0 %2286
    %2288 = vrot.lane.b32.xlu0 %v2283, 64
    %v2289 = vpop.permute.xlu0 %2288
    %v2292 = vmul.f32 %v2255, %v2287
    %v2293 = vmul.f32 %v2257, %v2289
    %v2294 = vpack.c.bf16 %v2293, %v2292
    %v2296 = vsel %vm371, %v2294, 0
    %2298 = vmatprep.subr.bf16.mxu0 %v500
    %2299 = vmatpush1.bf16.msra.mxu0 %v499
    %2300 = vmatprep.subr.bf16.mxu0 %v502
    %2301 = vmatpush1.bf16.msra.mxu0 %v501
    %2302 = vmatprep.subr.bf16.mxu0 %v504
    %2303 = vmatpush1.bf16.msra.mxu0 %v503
    %2304 = vmatprep.subr.bf16.mxu0 %v506
    %2305 = vmatpush1.bf16.msra.mxu0 %v505
    %2306 = vmatprep.subr.bf16.mxu0 0
    %2307 = vmatpush1.bf16.msra.mxu0 0
    %2308 = vmatprep.subr.bf16.mxu0 0
    %2309 = vmatpush1.bf16.msra.mxu0 0
    %2310 = vmatprep.subr.bf16.mxu0 0
    %2311 = vmatpush1.bf16.msra.mxu0 0
    %2312 = vmatprep.subr.bf16.mxu0 0
    %2313 = vmatpush1.bf16.msra.mxu0 0
    %2314 = vmatprep.subr.bf16.mxu0 0
    %2315 = vmatpush1.bf16.msra.mxu0 0
    %2316 = vmatprep.subr.bf16.mxu0 0
    %2317 = vmatpush1.bf16.msra.mxu0 0
    %2318 = vmatprep.subr.bf16.mxu0 0
    %2319 = vmatpush1.bf16.msra.mxu0 0
    %2320 = vmatprep.subr.bf16.mxu0 0
    %2321 = vmatpush1.bf16.msra.mxu0 0
    %2322 = vmatprep.subr.bf16.mxu0 0
    %2323 = vmatpush1.bf16.msra.mxu0 0
    %2324 = vmatprep.subr.bf16.mxu0 0
    %2325 = vmatpush1.bf16.msra.mxu0 0
    %2326 = vmatprep.subr.bf16.mxu0 0
    %2327 = vmatpush1.bf16.msra.mxu0 0
    %2328 = vmatprep.subr.bf16.mxu0 0
    %2329 = vmatpush1.bf16.msra.mxu0 0
    %2330 = vmatprep.mubr.bf16.mxu0 0
    %2331 = vmatmul.mubr.bf16.gmra.mrb[0].mxu0 %v2296
    %v2332 = vpop.f32.mrb[0].mxu0
    %v2333 = vadd.f32 0.0, %v2332
    %v2334 = vpop.f32.mrb[0].mxu0
    %v2335 = vadd.f32 0.0, %v2334
    %v2336 = vpop.f32.mrb[0].mxu0
    %v2337 = vadd.f32 0.0, %v2336
    %v2338 = vpop.f32.mrb[0].mxu0
    %v2339 = vadd.f32 0.0, %v2338
    %2340 = vdwg.mxu0
    %v2342 = vsel %vm371, %v2194, 0
    %2344 = vmatprep.subr.bf16.mxu0 %v586
    %2345 = vmatpush1.bf16.msra.mxu0 %v585
    %2346 = vmatprep.subr.bf16.mxu0 %v588
    %2347 = vmatpush1.bf16.msra.mxu0 %v587
    %2348 = vmatprep.subr.bf16.mxu0 %v590
    %2349 = vmatpush1.bf16.msra.mxu0 %v589
    %2350 = vmatprep.subr.bf16.mxu0 %v592
    %2351 = vmatpush1.bf16.msra.mxu0 %v591
    %2352 = vmatprep.subr.bf16.mxu0 0
    %2353 = vmatpush1.bf16.msra.mxu0 0
    %2354 = vmatprep.subr.bf16.mxu0 0
    %2355 = vmatpush1.bf16.msra.mxu0 0
    %2356 = vmatprep.subr.bf16.mxu0 0
    %2357 = vmatpush1.bf16.msra.mxu0 0
    %2358 = vmatprep.subr.bf16.mxu0 0
    %2359 = vmatpush1.bf16.msra.mxu0 0
    %2360 = vmatprep.subr.bf16.mxu0 0
    %2361 = vmatpush1.bf16.msra.mxu0 0
    %2362 = vmatprep.subr.bf16.mxu0 0
    %2363 = vmatpush1.bf16.msra.mxu0 0
    %2364 = vmatprep.subr.bf16.mxu0 0
    %2365 = vmatpush1.bf16.msra.mxu0 0
    %2366 = vmatprep.subr.bf16.mxu0 0
    %2367 = vmatpush1.bf16.msra.mxu0 0
    %2368 = vmatprep.subr.bf16.mxu0 0
    %2369 = vmatpush1.bf16.msra.mxu0 0
    %2370 = vmatprep.subr.bf16.mxu0 0
    %2371 = vmatpush1.bf16.msra.mxu0 0
    %2372 = vmatprep.subr.bf16.mxu0 0
    %2373 = vmatpush1.bf16.msra.mxu0 0
    %2374 = vmatprep.subr.bf16.mxu0 0
    %2375 = vmatpush1.bf16.msra.mxu0 0
    %2376 = vmatprep.mubr.bf16.mxu0 0
    %2377 = vmatmul.mubr.bf16.gmra.mrb[0].mxu0 %v2342
    %v2378 = vpop.f32.mrb[0].mxu0
    %v2379 = vadd.f32 %v2333, %v2378
    %v2380 = vpop.f32.mrb[0].mxu0
    %v2381 = vadd.f32 %v2335, %v2380
    %v2382 = vpop.f32.mrb[0].mxu0
    %v2383 = vadd.f32 %v2337, %v2382
    %v2384 = vpop.f32.mrb[0].mxu0
    %v2385 = vadd.f32 %v2339, %v2384
    %2386 = vdwg.mxu0
    %v2387 = vadd.f32 %v2379, %v324
    %v2388 = vadd.f32 %v2381, %v328
    %v2389 = vadd.f32 %v2383, %v324
    %v2390 = vadd.f32 %v2385, %v328
    %v2391 = vmul.f32 %v2387, 0.5
    %v2392 = vmul.f32 %v2388, 0.5
    %v2393 = vmul.f32 %v2389, 0.5
    %v2394 = vmul.f32 %v2390, 0.5
    %v2395 = vtanh.pop %v2391
    %v2396 = vtanh.pop %v2392
    %v2397 = vtanh.pop %v2393
    %v2398 = vtanh.pop %v2394
    %v2399 = vmul.f32 %v2395, 0.5
    %v2400 = vmul.f32 %v2396, 0.5
    %v2401 = vmul.f32 %v2397, 0.5
    %v2402 = vmul.f32 %v2398, 0.5
    %v2403 = vadd.f32 %v2399, 0.5
    %v2404 = vadd.f32 %v2400, 0.5
    %v2405 = vadd.f32 %v2401, 0.5
    %v2406 = vadd.f32 %v2402, 0.5
    %v2407 = vtanh.pop %v2388
    %v2408 = vtanh.pop %v2390
    %v2409 = vmul.f32 %v2403, %v2180
    %v2410 = vmul.f32 %v2405, %v2181
    %2413 = vrot.lane.b32.xlu0 %v2407, 64
    %v2414 = vpop.permute.xlu0 %2413
    %2415 = vrot.lane.b32.xlu0 %v2408, 64
    %v2416 = vpop.permute.xlu0 %2415
    %v2419 = vmul.f32 %v2403, %v2414
    %v2420 = vmul.f32 %v2405, %v2416
    %2423 = vrot.lane.b32.xlu0 %v2419, 64
    %v2424 = vpop.permute.xlu0 %2423
    %2425 = vrot.lane.b32.xlu0 %v2420, 64
    %v2426 = vpop.permute.xlu0 %2425
    %v2429 = vadd.f32 %v2409, %v2424
    %v2430 = vadd.f32 %v2410, %v2426
    %v2431 = vtanh.pop %v2429
    %v2432 = vtanh.pop %v2430
    %2435 = vrot.lane.b32.xlu0 %v2431, 64
    %v2436 = vpop.permute.xlu0 %2435
    %2437 = vrot.lane.b32.xlu0 %v2432, 64
    %v2438 = vpop.permute.xlu0 %2437
    %v2441 = vmul.f32 %v2404, %v2436
    %v2442 = vmul.f32 %v2406, %v2438
    %v2443 = vpack.c.bf16 %v2442, %v2441
    %v2444 = vld [vmem:[%s7] sm:$0xf]
    %v2445 = vld [vmem:[%s7 + $0x4] sm:$0xf]
    %v2446 = vld [vmem:[%s7 + $0x8] sm:$0xf]
    %v2447 = vld [vmem:[%s7 + $0xc] sm:$0xf]
    %v2448 = vld [vmem:[%s7 + $0x10] sm:$0xf]
    %v2449 = vld [vmem:[%s7 + $0x14] sm:$0xf]
    %v2450 = vld [vmem:[%s7 + $0x18] sm:$0xf]
    %v2451 = vld [vmem:[%s7 + $0x1c] sm:$0xf]
    %v2452 = vld [vmem:[%s8] sm:$0x1]
    %v2454 = vlaneseq
    %v2455 = vshrl.u32 %v2454, 7
    %v2456 = vsub.s32 0, %v2455
    %v2457 = vrot.slane %v2452, %v2456
    %v2467 = vunpack.c.l.b16 %v2444
    %v2468 = vunpack.c.l.b16 %v2445
    %v2469 = vunpack.c.l.b16 %v2446
    %v2470 = vunpack.c.l.b16 %v2447
    %v2471 = vunpack.c.l.b16 %v2448
    %v2472 = vunpack.c.l.b16 %v2449
    %v2473 = vunpack.c.l.b16 %v2450
    %v2474 = vunpack.c.l.b16 %v2451
    %v2475 = vpack.c.b16 %v2468, %v2467
    %v2476 = vpack.c.b16 %v2470, %v2469
    %v2477 = vpack.c.b16 %v2472, %v2471
    %v2478 = vpack.c.b16 %v2474, %v2473
    %v2484 = vsel %vm371, %v2443, 0
    %2486 = vmatprep.subr.bf16.mxu0 0
    %2487 = vmatpush1.bf16.msra.mxu0 %v2475
    %2488 = vmatprep.subr.bf16.mxu0 0
    %2489 = vmatpush1.bf16.msra.mxu0 %v2476
    %2490 = vmatprep.subr.bf16.mxu0 0
    %2491 = vmatpush1.bf16.msra.mxu0 %v2477
    %2492 = vmatprep.subr.bf16.mxu0 0
    %2493 = vmatpush1.bf16.msra.mxu0 %v2478
    %2494 = vmatprep.subr.bf16.mxu0 0
    %2495 = vmatpush1.bf16.msra.mxu0 0
    %2496 = vmatprep.subr.bf16.mxu0 0
    %2497 = vmatpush1.bf16.msra.mxu0 0
    %2498 = vmatprep.subr.bf16.mxu0 0
    %2499 = vmatpush1.bf16.msra.mxu0 0
    %2500 = vmatprep.subr.bf16.mxu0 0
    %2501 = vmatpush1.bf16.msra.mxu0 0
    %2502 = vmatprep.subr.bf16.mxu0 0
    %2503 = vmatpush1.bf16.msra.mxu0 0
    %2504 = vmatprep.subr.bf16.mxu0 0
    %2505 = vmatpush1.bf16.msra.mxu0 0
    %2506 = vmatprep.subr.bf16.mxu0 0
    %2507 = vmatpush1.bf16.msra.mxu0 0
    %2508 = vmatprep.subr.bf16.mxu0 0
    %2509 = vmatpush1.bf16.msra.mxu0 0
    %2510 = vmatprep.subr.bf16.mxu0 0
    %2511 = vmatpush1.bf16.msra.mxu0 0
    %2512 = vmatprep.subr.bf16.mxu0 0
    %2513 = vmatpush1.bf16.msra.mxu0 0
    %2514 = vmatprep.subr.bf16.mxu0 0
    %2515 = vmatpush1.bf16.msra.mxu0 0
    %2516 = vmatprep.subr.bf16.mxu0 0
    %2517 = vmatpush1.bf16.msra.mxu0 0
    %2518 = vmatprep.mubr.bf16.mxu0 0
    %2519 = vmatmul.mubr.bf16.gmra.mrb[0].mxu0 %v2484
    %v2520 = vpop.f32.mrb[0].mxu0
    %v2521 = vadd.f32 %v2457, %v2520
    %v2522 = vpop.f32.mrb[0].mxu0
    %v2523 = vpop.f32.mrb[0].mxu0
    %v2524 = vadd.f32 %v2457, %v2523
    %v2525 = vpop.f32.mrb[0].mxu0
    %2526 = vdwg.mxu0
    %2527 = vst [vmem:[#allocation8] sm:$0xff] %v2521
    %2528 = vst [vmem:[#allocation8 + $0x8] sm:$0xff] %v2524
    // Predicated region
    $region50: #{tpu_custom_call.1} parent=1 // pred_check
      _
    $region51: #{tpu_custom_call.1} parent=1 // pred_check_branch
      %2530 = sbr.rel (0) target = $region53
    $region52: #{tpu_custom_call.1} parent=1 // pred_region
      %s2532 = ssub.s32 256, 256
      %2533 = vsyncadd [#allocation4], %s2532
      %s2534 = sshll.u32 [#allocation8], 4
      %s2535 = int_to_ptr.vmem [resolvable:$true] %s2534
      %2540 = dma.vmem_to_hbm [thread:$0]  %s2535, 256, %s9, [#allocation4], 128, 128, 8
    $region53: #{tpu_custom_call.1} parent=1 // pred_fallthru
      _
    // Predicated region
    $region54: #{tpu_custom_call.1} parent=1 // pred_check
      _
    $region55: #{tpu_custom_call.1} parent=1 // pred_check_branch
      %2542 = sbr.rel (0) target = $region57
    $region56: #{tpu_custom_call.1} parent=1 // pred_region
      %2543 = dma.done [#allocation4], 256
    $region57: #{tpu_custom_call.1} parent=1 // pred_fallthru
      _
    %2544 = vsyncpa [#allocation3], 1
    %2545 = vsyncpa [#allocation6], 1
    %2546 = vsyncpa [#allocation4], 1

</llo_original>
